<compile_context>
chip_gen: v7x
topology: tpu7x:2x2x1
jax: 0.10.0
libtpu: 0.0.40
codegen_flags: <defaults>
</compile_context>

<pallas_src>
import functools

import jax
import jax.numpy as jnp
from jax import lax
from jax.experimental import pallas as pl
from jax.experimental.pallas import tpu as pltpu


def _round_up(x, m):
    return (x + m - 1) // m * m


def _decoder_rnn_kernel(x_ref, h0_ref, c0_ref,
                        wih_ref, whh_ref, b_ref,
                        wlin_ref, blin_ref,
                        out_ref, hn_ref, cn_ref,
                        gates_ref, seq_ref,
                        *, unroll):
    """One batch block, fully resident in VMEM.

    x_ref     : (T, Bb, Hp)    f32        encoded input (time-major, padded)
    h0_ref    : (L, Bb, Hp)    f32        initial hidden state
    c0_ref    : (L, Bb, Hp)    f32        initial cell state
    wih_ref   : (L, Hp, 4Hp)   f32/bf16   input->gates weights (pre-transposed, gate-padded)
    whh_ref   : (L, Hp, 4Hp)   f32/bf16   hidden->gates weights (pre-transposed, gate-padded)
    b_ref     : (L, 1, 4Hp)    f32        bias_ih + bias_hh (gate-padded)
    wlin_ref  : (Hp, Op)       f32/bf16   final linear weight (transposed, padded)
    blin_ref  : (1, Op)        f32        final linear bias (padded)
    out_ref   : (T, Bb, Op)    f32        decoded output (lane-dense, Op % 128 == 0)
    hn_ref    : (L, Bb, Hp)    f32        final hidden state
    cn_ref    : (L, Bb, Hp)    f32        final cell state
    gates_ref : (T, Bb, 4Hp)   f32  scratch: hoisted input projection + bias (per layer)
    seq_ref   : (T, Bb, Hp)    wdt  scratch: running layer output (next layer's input)
    """
    T, Bb, Hp = seq_ref.shape
    L = h0_ref.shape[0]
    TB = T * Bb
    H4 = 4 * Hp
    wdt = wih_ref.dtype  # matmul operand dtype; accumulation / gate math stay f32

    for l in range(L):  # static, unrolled layer loop
        # ---- hoisted whole-sequence input projection (one big MXU call) ----
        if l == 0:
            xin2d = x_ref[...].reshape(TB, Hp).astype(wdt)
        else:
            xin2d = seq_ref[...].reshape(TB, Hp)          # already stored as wdt
        gates_pre = (jnp.dot(xin2d, wih_ref[l],
                             preferred_element_type=jnp.float32)
                     + b_ref[l])                           # (TB, 4Hp) f32
        gates_ref[...] = gates_pre.reshape(T, Bb, H4)

        whh_l = whh_ref[l]                                 # (Hp, 4Hp)

        def step(t, carry, whh_l=whh_l):
            h, c = carry                                   # (Bb, Hp) f32
            # Only the recurrent matmul sits on the serial critical path.
            gates = (gates_ref[t]
                     + jnp.dot(h.astype(wdt), whh_l,
                               preferred_element_type=jnp.float32))   # (Bb, 4Hp)
            i_g = jax.nn.sigmoid(gates[:, 0 * Hp:1 * Hp])  # lane-dense 128-wide slices
            f_g = jax.nn.sigmoid(gates[:, 1 * Hp:2 * Hp])
            g_g = jnp.tanh(gates[:, 2 * Hp:3 * Hp])
            o_g = jax.nn.sigmoid(gates[:, 3 * Hp:4 * Hp])
            c_new = f_g * c + i_g * g_g
            h_new = o_g * jnp.tanh(c_new)
            seq_ref[t] = h_new.astype(seq_ref.dtype)       # unmasked, full-lane vst
            return (h_new, c_new)

        h_fin, c_fin = lax.fori_loop(0, T, step, (h0_ref[l], c0_ref[l]),
                                     unroll=unroll)
        hn_ref[l] = h_fin
        cn_ref[l] = c_fin

    # TODO(synk): nn.Dropout(p=0.5) training-mode masking not implemented;
    #             eval-mode (identity) semantics are used here.
    seq2d = seq_ref[...].reshape(TB, Hp)
    out2d = (jnp.dot(seq2d, wlin_ref[...], preferred_element_type=jnp.float32)
             + blin_ref[...])                              # (TB, Op) f32
    out_ref[...] = out2d.reshape(T, Bb, out_ref.shape[-1])


def decoder_rnn_forward(encoded_input, hidden, params, *, matmul_dtype=jnp.float32):
    """Matches DecoderRNN.forward(encoded_input, hidden) (eval mode).

    encoded_input : (B, T, hidden_size) f32   (batch_first, like PyTorch)
    hidden        : tuple (h0, c0), each (num_layers, B, hidden_dim) f32
    matmul_dtype  : jnp.float32 (bit-faithful) or jnp.bfloat16 (faster MXU,
                    f32 accumulation, f32 gate math; looser numerics).
    returns       : (decoded_output (B, T, output_size), (h_n, c_n))
    """
    h0, c0 = hidden
    B, T, D_in = encoded_input.shape
    L, _, H = h0.shape
    O = params['w_linear'].shape[0]
    # Stacked per-layer input weights share one scratch -> requires D_in == H.
    assert D_in == H, "stacked-weight layout assumes hidden_size == hidden_dim"

    wdt = matmul_dtype
    sub = 16 if wdt == jnp.bfloat16 else 8     # bf16 packs 16 sublanes per vreg
    Bblk = sub                                 # batch rows per grid step
    Bp = _round_up(max(B, Bblk), Bblk)
    Hp = _round_up(H, 128)                     # lane-dense hidden dim
    Op = _round_up(O, 128)                     # lane-dense output stores
    nb = Bp // Bblk

    f32 = jnp.float32

    # ---- time-major + zero padding: batch -> Bp, features/hidden -> Hp ----
    x_tm = jnp.transpose(encoded_input, (1, 0, 2)).astype(f32)        # (T, B, H)
    x_tm = jnp.pad(x_tm, ((0, 0), (0, Bp - B), (0, Hp - H)))
    h0p = jnp.pad(h0.astype(f32), ((0, 0), (0, Bp - B), (0, Hp - H)))
    c0p = jnp.pad(c0.astype(f32), ((0, 0), (0, Bp - B), (0, Hp - H)))

    # Gate-block-aware padding of the 4H axis: each PyTorch gate [i|f|g|o]
    # keeps its own Hp-wide lane-aligned slot with zero-padded tail lanes, so
    # padded lanes of c/h remain exactly 0 through the recurrence.
    def pad_gate_weight(w):                     # (L, 4H, K) -> (L, Hp, 4*Hp)
        K = w.shape[2]
        wt = jnp.transpose(w, (0, 2, 1)).reshape(L, K, 4, H)
        wt = jnp.pad(wt, ((0, 0), (0, Hp - K), (0, 0), (0, Hp - H)))
        return wt.reshape(L, Hp, 4 * Hp).astype(wdt)

    wih_t = pad_gate_weight(params['w_ih'])                            # (L, Hp, 4Hp)
    whh_t = pad_gate_weight(params['w_hh'])                            # (L, Hp, 4Hp)
    b = (params['b_ih'] + params['b_hh']).reshape(L, 4, H)
    b = jnp.pad(b, ((0, 0), (0, 0), (0, Hp - H)))
    b = b.reshape(L, 1, 4 * Hp).astype(f32)                            # (L, 1, 4Hp)
    wlin_t = jnp.pad(params['w_linear'].T,
                     ((0, Hp - H), (0, Op - O))).astype(wdt)           # (Hp, Op)
    blin = jnp.pad(params['b_linear'], (0, Op - O))[None, :].astype(f32)

    # ---- VMEM budget (double-buffered blocks + scratch) and cost estimate ----
    wsz = jnp.dtype(wdt).itemsize
    blk_bytes = (T * Bblk * Hp * 4                      # x block
                 + 2 * L * Bblk * Hp * 4                # h0, c0 blocks
                 + 2 * L * Hp * 4 * Hp * wsz            # wih, whh
                 + L * 4 * Hp * 4                       # bias
                 + Hp * Op * wsz + Op * 4               # wlin, blin
                 + T * Bblk * Op * 4                    # out block
                 + 2 * L * Bblk * Hp * 4)               # hn, cn blocks
    scratch_bytes = T * Bblk * 4 * Hp * 4 + T * Bblk * Hp * wsz
    vmem_limit = int(min(max(2 * blk_bytes + scratch_bytes + (4 << 20), 16 << 20),
                         100 << 20))

    flops = int(L * 16 * T * Bp * Hp * Hp + 2 * T * Bp * Hp * Op)
    transcendentals = int(5 * L * T * Bp * Hp)
    bytes_accessed = int(x_tm.size * 4 + h0p.size * 4 + c0p.size * 4
                         + wih_t.size * wsz + whh_t.size * wsz + b.size * 4
                         + wlin_t.size * wsz + blin.size * 4
                         + T * Bp * Op * 4 + 2 * L * Bp * Hp * 4)

    unroll = T if T <= 8 else 8
    kernel = functools.partial(_decoder_rnn_kernel, unroll=unroll)

    out3d, hn, cn = pl.pallas_call(
        kernel,
        out_shape=(jax.ShapeDtypeStruct((T, Bp, Op), f32),
                   jax.ShapeDtypeStruct((L, Bp, Hp), f32),
                   jax.ShapeDtypeStruct((L, Bp, Hp), f32)),
        grid=(nb,),
        in_specs=[
            pl.BlockSpec((T, Bblk, Hp), lambda bb: (0, bb, 0)),        # x
            pl.BlockSpec((L, Bblk, Hp), lambda bb: (0, bb, 0)),        # h0
            pl.BlockSpec((L, Bblk, Hp), lambda bb: (0, bb, 0)),        # c0
            pl.BlockSpec((L, Hp, 4 * Hp), lambda bb: (0, 0, 0)),       # w_ih
            pl.BlockSpec((L, Hp, 4 * Hp), lambda bb: (0, 0, 0)),       # w_hh
            pl.BlockSpec((L, 1, 4 * Hp), lambda bb: (0, 0, 0)),        # bias
            pl.BlockSpec((Hp, Op), lambda bb: (0, 0)),                 # w_linear
            pl.BlockSpec((1, Op), lambda bb: (0, 0)),                  # b_linear
        ],
        out_specs=(
            pl.BlockSpec((T, Bblk, Op), lambda bb: (0, bb, 0)),        # decoded
            pl.BlockSpec((L, Bblk, Hp), lambda bb: (0, bb, 0)),        # h_n
            pl.BlockSpec((L, Bblk, Hp), lambda bb: (0, bb, 0)),        # c_n
        ),
        scratch_shapes=[pltpu.VMEM((T, Bblk, 4 * Hp), f32),
                        pltpu.VMEM((T, Bblk, Hp), wdt)],
        compiler_params=pltpu.CompilerParams(
            dimension_semantics=("parallel",),       # batch blocks independent (v7x 2-TC)
            vmem_limit_bytes=vmem_limit),
        cost_estimate=pl.CostEstimate(flops=flops,
                                      transcendentals=transcendentals,
                                      bytes_accessed=bytes_accessed),
    )(x_tm, h0p, c0p, wih_t, whh_t, b, wlin_t, blin)

    decoded = jnp.transpose(out3d[:, :B, :O], (1, 0, 2))               # (B, T, O)
    return decoded, (hn[:, :B, :H], cn[:, :B, :H])


def _decoder_rnn_reference(encoded_input, hidden, params):
    """Pure-JAX reference (PyTorch LSTM + Linear semantics) for validation."""
    h0, c0 = hidden
    L, _, H = h0.shape
    layer_in = jnp.transpose(encoded_input, (1, 0, 2))            # (T, B, D)
    hs, cs = [], []
    for l in range(L):
        wih, whh = params['w_ih'][l], params['w_hh'][l]
        bih, bhh = params['b_ih'][l], params['b_hh'][l]

        def step(carry, x_t, wih=wih, whh=whh, bih=bih, bhh=bhh):
            h, c = carry
            g = x_t @ wih.T + bih + h @ whh.T + bhh
            i = jax.nn.sigmoid(g[:, 0 * H:1 * H])
            f = jax.nn.sigmoid(g[:, 1 * H:2 * H])
            gg = jnp.tanh(g[:, 2 * H:3 * H])
            o = jax.nn.sigmoid(g[:, 3 * H:4 * H])
            c = f * c + i * gg
            h = o * jnp.tanh(c)
            return (h, c), h

        (h_f, c_f), outs = lax.scan(step, (h0[l], c0[l]), layer_in)
        layer_in = outs
        hs.append(h_f)
        cs.append(c_f)
    out = jnp.einsum('tbh,oh->tbo', layer_in, params['w_linear']) + params['b_linear']
    return jnp.transpose(out, (1, 0, 2)), (jnp.stack(hs), jnp.stack(cs))


def init_params(key, hidden_size, hidden_dim, num_layers, output_size):
    """Deterministic init mirroring PyTorch LSTM/Linear shapes (uniform +/- 1/sqrt(H))."""
    assert hidden_size == hidden_dim, "stacked-weight layout assumes hidden_size == hidden_dim"
    H = hidden_dim
    bound = 1.0 / (H ** 0.5)
    ks = jax.random.split(key, 6)

    def u(k_, shape):
        return jax.random.uniform(k_, shape, jnp.float32, -bound, bound)

    return dict(
        w_ih=u(ks[0], (num_layers, 4 * H, hidden_size)),   # weight_ih_l{k}
        w_hh=u(ks[1], (num_layers, 4 * H, H)),             # weight_hh_l{k}
        b_ih=u(ks[2], (num_layers, 4 * H)),                # bias_ih_l{k}
        b_hh=u(ks[3], (num_layers, 4 * H)),                # bias_hh_l{k}
        w_linear=u(ks[4], (output_size, H)),               # nn.Linear.weight
        b_linear=u(ks[5], (output_size,)),                 # nn.Linear.bias
    )


if __name__ == "__main__":
    # Small config consistent with DecoderRNN(hidden_size, output_size, hidden_dim, num_layers)
    B, T = 2, 8
    hidden_size = 32
    hidden_dim = 32
    num_layers = 2
    output_size = 16

    key = jax.random.PRNGKey(0)
    k_p, k_x, k_h, k_c = jax.random.split(key, 4)

    params = init_params(k_p, hidden_size, hidden_dim, num_layers, output_size)
    encoded_input = jax.random.normal(k_x, (B, T, hidden_size), jnp.float32)
    h0 = jax.random.normal(k_h, (num_layers, B, hidden_dim), jnp.float32)
    c0 = jax.random.normal(k_c, (num_layers, B, hidden_dim), jnp.float32)

    decoded_output, (h_n, c_n) = decoder_rnn_forward(encoded_input, (h0, c0), params)
    jax.block_until_ready((decoded_output, h_n, c_n))

    assert decoded_output.shape == (B, T, output_size)
    assert h_n.shape == (num_layers, B, hidden_dim)
    assert c_n.shape == (num_layers, B, hidden_dim)

    # Correctness vs. pure-JAX reference of the PyTorch module (f32 path).
    ref_out, (ref_h, ref_c) = _decoder_rnn_reference(encoded_input, (h0, c0), params)
    assert jnp.allclose(decoded_output, ref_out, atol=1e-4, rtol=1e-4)
    assert jnp.allclose(h_n, ref_h, atol=1e-4, rtol=1e-4)
    assert jnp.allclose(c_n, ref_c, atol=1e-4, rtol=1e-4)

    print("KERNEL_OK")
</pallas_src>

<mosaic_0001>
module attributes {stable_mosaic.version = 11 : i64} {
  func.func @_decoder_rnn_kernel(%arg0: i32, %arg1: memref<8x8x128xf32, #tpu.memory_space<vmem>>, %arg2: memref<2x8x128xf32, #tpu.memory_space<vmem>>, %arg3: memref<2x8x128xf32, #tpu.memory_space<vmem>>, %arg4: memref<2x128x512xf32, #tpu.memory_space<vmem>>, %arg5: memref<2x128x512xf32, #tpu.memory_space<vmem>>, %arg6: memref<2x1x512xf32, #tpu.memory_space<vmem>>, %arg7: memref<128x128xf32, #tpu.memory_space<vmem>>, %arg8: memref<1x128xf32, #tpu.memory_space<vmem>>, %arg9: memref<8x8x128xf32, #tpu.memory_space<vmem>>, %arg10: memref<2x8x128xf32, #tpu.memory_space<vmem>>, %arg11: memref<2x8x128xf32, #tpu.memory_space<vmem>>, %arg12: memref<8x8x512xf32, #tpu.memory_space<vmem>>, %arg13: memref<8x8x128xf32, #tpu.memory_space<vmem>>) attributes {dimension_semantics = [#tpu.dimension_semantics<parallel>], iteration_bounds = array<i64: 1>, scalar_prefetch = 0 : i64, scratch_operands = 2 : i64, tpu.core_type = #tpu.core_type<tc>, window_params = [{transform_indices = @transform_0, window_bounds = array<i64: 8, 8, 128>}, {transform_indices = @transform_1, window_bounds = array<i64: 2, 8, 128>}, {transform_indices = @transform_2, window_bounds = array<i64: 2, 8, 128>}, {pipeline_mode = #tpu.pipeline_mode<synchronous>, transform_indices = @transform_3, window_bounds = array<i64: 2, 128, 512>}, {pipeline_mode = #tpu.pipeline_mode<synchronous>, transform_indices = @transform_4, window_bounds = array<i64: 2, 128, 512>}, {pipeline_mode = #tpu.pipeline_mode<synchronous>, transform_indices = @transform_5, window_bounds = array<i64: 2, 1, 512>}, {pipeline_mode = #tpu.pipeline_mode<synchronous>, transform_indices = @transform_6, window_bounds = array<i64: 128, 128>}, {pipeline_mode = #tpu.pipeline_mode<synchronous>, transform_indices = @transform_7, window_bounds = array<i64: 1, 128>}, {transform_indices = @transform_8, window_bounds = array<i64: 8, 8, 128>}, {transform_indices = @transform_9, window_bounds = array<i64: 2, 8, 128>}, {transform_indices = @transform_10, window_bounds = array<i64: 2, 8, 128>}]} {
    %c0 = arith.constant 0 : index
    %c0_0 = arith.constant 0 : index
    %c0_1 = arith.constant 0 : index
    %0 = vector.load %arg1[%c0, %c0_0, %c0_1] : memref<8x8x128xf32, #tpu.memory_space<vmem>>, vector<8x8x128xf32>
    %1 = vector.shape_cast %0 : vector<8x8x128xf32> to vector<64x128xf32>
    %c0_2 = arith.constant 0 : index
    %c0_3 = arith.constant 0 : index
    %c0_4 = arith.constant 0 : index
    %2 = vector.load %arg4[%c0_2, %c0_3, %c0_4] : memref<2x128x512xf32, #tpu.memory_space<vmem>>, vector<1x128x512xf32>
    %3 = vector.shape_cast %2 : vector<1x128x512xf32> to vector<128x512xf32>
    %cst = arith.constant dense<0.000000e+00> : vector<64x512xf32>
    %4 = tpu.matmul %1, %3, %cst {dimension_numbers = #tpu.dot_dimension_numbers<[1], [0], [0], [1], [0, 0, 1, 1], [], []>} : vector<64x128xf32>, vector<128x512xf32>, vector<64x512xf32> -> vector<64x512xf32>
    %c0_5 = arith.constant 0 : index
    %c0_6 = arith.constant 0 : index
    %c0_7 = arith.constant 0 : index
    %5 = vector.load %arg6[%c0_5, %c0_6, %c0_7] : memref<2x1x512xf32, #tpu.memory_space<vmem>>, vector<1x1x512xf32>
    %6 = vector.shape_cast %5 : vector<1x1x512xf32> to vector<1x512xf32>
    %7 = vector.broadcast %6 : vector<1x512xf32> to vector<64x512xf32>
    %8 = arith.addf %4, %7 : vector<64x512xf32>
    %9 = vector.shape_cast %8 : vector<64x512xf32> to vector<8x8x512xf32>
    %c0_8 = arith.constant 0 : index
    %c0_9 = arith.constant 0 : index
    %c0_10 = arith.constant 0 : index
    %10 = vector.load %arg12[%c0_8, %c0_9, %c0_10] : memref<8x8x512xf32, #tpu.memory_space<vmem>>, vector<8x8x512xf32>
    tpu.vector_store %arg12[%c0_8, %c0_9, %c0_10], %9 {strides = array<i32>} : memref<8x8x512xf32, #tpu.memory_space<vmem>>, vector<8x8x512xf32>,
    %c0_11 = arith.constant 0 : index
    %c0_12 = arith.constant 0 : index
    %c0_13 = arith.constant 0 : index
    %11 = vector.load %arg5[%c0_11, %c0_12, %c0_13] : memref<2x128x512xf32, #tpu.memory_space<vmem>>, vector<1x128x512xf32>
    %12 = vector.shape_cast %11 : vector<1x128x512xf32> to vector<128x512xf32>
    %c0_14 = arith.constant 0 : index
    %c0_15 = arith.constant 0 : index
    %c0_16 = arith.constant 0 : index
    %13 = vector.load %arg2[%c0_14, %c0_15, %c0_16] : memref<2x8x128xf32, #tpu.memory_space<vmem>>, vector<1x8x128xf32>
    %14 = vector.shape_cast %13 : vector<1x8x128xf32> to vector<8x128xf32>
    %c0_17 = arith.constant 0 : index
    %c0_18 = arith.constant 0 : index
    %c0_19 = arith.constant 0 : index
    %15 = vector.load %arg3[%c0_17, %c0_18, %c0_19] : memref<2x8x128xf32, #tpu.memory_space<vmem>>, vector<1x8x128xf32>
    %16 = vector.shape_cast %15 : vector<1x8x128xf32> to vector<8x128xf32>
    %c0_i32 = arith.constant 0 : i32
    %17 = arith.index_cast %c0_i32 : i32 to index
    %c0_20 = arith.constant 0 : index
    %c0_21 = arith.constant 0 : index
    %18 = vector.load %arg12[%17, %c0_20, %c0_21] : memref<8x8x512xf32, #tpu.memory_space<vmem>>, vector<1x8x512xf32>
    %19 = vector.shape_cast %18 : vector<1x8x512xf32> to vector<8x512xf32>
    %cst_22 = arith.constant dense<0.000000e+00> : vector<8x512xf32>
    %20 = tpu.matmul %14, %12, %cst_22 {dimension_numbers = #tpu.dot_dimension_numbers<[1], [0], [0], [1], [0, 0, 1, 1], [], []>} : vector<8x128xf32>, vector<128x512xf32>, vector<8x512xf32> -> vector<8x512xf32>
    %21 = arith.addf %19, %20 : vector<8x512xf32>
    %22 = vector.extract_strided_slice %21 {offsets = [0, 0], sizes = [8, 128], strides = [1, 1]} : vector<8x512xf32> to vector<8x128xf32>
    %23 = arith.negf %22 : vector<8x128xf32>
    %24 = math.exp %23 : vector<8x128xf32>
    %cst_23 = arith.constant 1.000000e+00 : f32
    %25 = vector.broadcast %cst_23 : f32 to vector<8x128xf32>
    %26 = arith.addf %25, %24 : vector<8x128xf32>
    %27 = arith.divf %25, %26 : vector<8x128xf32>
    %28 = vector.extract_strided_slice %21 {offsets = [0, 128], sizes = [8, 128], strides = [1, 1]} : vector<8x512xf32> to vector<8x128xf32>
    %29 = arith.negf %28 : vector<8x128xf32>
    %30 = math.exp %29 : vector<8x128xf32>
    %cst_24 = arith.constant 1.000000e+00 : f32
    %31 = vector.broadcast %cst_24 : f32 to vector<8x128xf32>
    %32 = arith.addf %31, %30 : vector<8x128xf32>
    %33 = arith.divf %31, %32 : vector<8x128xf32>
    %34 = vector.extract_strided_slice %21 {offsets = [0, 256], sizes = [8, 128], strides = [1, 1]} : vector<8x512xf32> to vector<8x128xf32>
    %35 = math.tanh %34 : vector<8x128xf32>
    %36 = vector.extract_strided_slice %21 {offsets = [0, 384], sizes = [8, 128], strides = [1, 1]} : vector<8x512xf32> to vector<8x128xf32>
    %37 = arith.negf %36 : vector<8x128xf32>
    %38 = math.exp %37 : vector<8x128xf32>
    %cst_25 = arith.constant 1.000000e+00 : f32
    %39 = vector.broadcast %cst_25 : f32 to vector<8x128xf32>
    %40 = arith.addf %39, %38 : vector<8x128xf32>
    %41 = arith.divf %39, %40 : vector<8x128xf32>
    %42 = arith.mulf %33, %16 : vector<8x128xf32>
    %43 = arith.mulf %27, %35 : vector<8x128xf32>
    %44 = arith.addf %42, %43 : vector<8x128xf32>
    %45 = math.tanh %44 : vector<8x128xf32>
    %46 = arith.mulf %41, %45 : vector<8x128xf32>
    %47 = arith.index_cast %c0_i32 : i32 to index
    %c0_26 = arith.constant 0 : index
    %c0_27 = arith.constant 0 : index
    %48 = vector.load %arg13[%47, %c0_26, %c0_27] : memref<8x8x128xf32, #tpu.memory_space<vmem>>, vector<1x8x128xf32>
    %49 = vector.shape_cast %48 : vector<1x8x128xf32> to vector<8x128xf32>
    %50 = vector.shape_cast %46 : vector<8x128xf32> to vector<1x8x128xf32>
    tpu.vector_store %arg13[%47, %c0_26, %c0_27], %50 {strides = array<i32>} : memref<8x8x128xf32, #tpu.memory_space<vmem>>, vector<1x8x128xf32>,
    %c1_i32 = arith.constant 1 : i32
    %51 = arith.index_cast %c1_i32 : i32 to index
    %c0_28 = arith.constant 0 : index
    %c0_29 = arith.constant 0 : index
    %52 = vector.load %arg12[%51, %c0_28, %c0_29] : memref<8x8x512xf32, #tpu.memory_space<vmem>>, vector<1x8x512xf32>
    %53 = vector.shape_cast %52 : vector<1x8x512xf32> to vector<8x512xf32>
    %cst_30 = arith.constant dense<0.000000e+00> : vector<8x512xf32>
    %54 = tpu.matmul %46, %12, %cst_30 {dimension_numbers = #tpu.dot_dimension_numbers<[1], [0], [0], [1], [0, 0, 1, 1], [], []>} : vector<8x128xf32>, vector<128x512xf32>, vector<8x512xf32> -> vector<8x512xf32>
    %55 = arith.addf %53, %54 : vector<8x512xf32>
    %56 = vector.extract_strided_slice %55 {offsets = [0, 0], sizes = [8, 128], strides = [1, 1]} : vector<8x512xf32> to vector<8x128xf32>
    %57 = arith.negf %56 : vector<8x128xf32>
    %58 = math.exp %57 : vector<8x128xf32>
    %cst_31 = arith.constant 1.000000e+00 : f32
    %59 = vector.broadcast %cst_31 : f32 to vector<8x128xf32>
    %60 = arith.addf %59, %58 : vector<8x128xf32>
    %61 = arith.divf %59, %60 : vector<8x128xf32>
    %62 = vector.extract_strided_slice %55 {offsets = [0, 128], sizes = [8, 128], strides = [1, 1]} : vector<8x512xf32> to vector<8x128xf32>
    %63 = arith.negf %62 : vector<8x128xf32>
    %64 = math.exp %63 : vector<8x128xf32>
    %cst_32 = arith.constant 1.000000e+00 : f32
    %65 = vector.broadcast %cst_32 : f32 to vector<8x128xf32>
    %66 = arith.addf %65, %64 : vector<8x128xf32>
    %67 = arith.divf %65, %66 : vector<8x128xf32>
    %68 = vector.extract_strided_slice %55 {offsets = [0, 256], sizes = [8, 128], strides = [1, 1]} : vector<8x512xf32> to vector<8x128xf32>
    %69 = math.tanh %68 : vector<8x128xf32>
    %70 = vector.extract_strided_slice %55 {offsets = [0, 384], sizes = [8, 128], strides = [1, 1]} : vector<8x512xf32> to vector<8x128xf32>
    %71 = arith.negf %70 : vector<8x128xf32>
    %72 = math.exp %71 : vector<8x128xf32>
    %cst_33 = arith.constant 1.000000e+00 : f32
    %73 = vector.broadcast %cst_33 : f32 to vector<8x128xf32>
    %74 = arith.addf %73, %72 : vector<8x128xf32>
    %75 = arith.divf %73, %74 : vector<8x128xf32>
    %76 = arith.mulf %67, %44 : vector<8x128xf32>
    %77 = arith.mulf %61, %69 : vector<8x128xf32>
    %78 = arith.addf %76, %77 : vector<8x128xf32>
    %79 = math.tanh %78 : vector<8x128xf32>
    %80 = arith.mulf %75, %79 : vector<8x128xf32>
    %81 = arith.index_cast %c1_i32 : i32 to index
    %c0_34 = arith.constant 0 : index
    %c0_35 = arith.constant 0 : index
    %82 = vector.load %arg13[%81, %c0_34, %c0_35] : memref<8x8x128xf32, #tpu.memory_space<vmem>>, vector<1x8x128xf32>
    %83 = vector.shape_cast %82 : vector<1x8x128xf32> to vector<8x128xf32>
    %84 = vector.shape_cast %80 : vector<8x128xf32> to vector<1x8x128xf32>
    tpu.vector_store %arg13[%81, %c0_34, %c0_35], %84 {strides = array<i32>} : memref<8x8x128xf32, #tpu.memory_space<vmem>>, vector<1x8x128xf32>,
    %c2_i32 = arith.constant 2 : i32
    %85 = arith.index_cast %c2_i32 : i32 to index
    %c0_36 = arith.constant 0 : index
    %c0_37 = arith.constant 0 : index
    %86 = vector.load %arg12[%85, %c0_36, %c0_37] : memref<8x8x512xf32, #tpu.memory_space<vmem>>, vector<1x8x512xf32>
    %87 = vector.shape_cast %86 : vector<1x8x512xf32> to vector<8x512xf32>
    %cst_38 = arith.constant dense<0.000000e+00> : vector<8x512xf32>
    %88 = tpu.matmul %80, %12, %cst_38 {dimension_numbers = #tpu.dot_dimension_numbers<[1], [0], [0], [1], [0, 0, 1, 1], [], []>} : vector<8x128xf32>, vector<128x512xf32>, vector<8x512xf32> -> vector<8x512xf32>
    %89 = arith.addf %87, %88 : vector<8x512xf32>
    %90 = vector.extract_strided_slice %89 {offsets = [0, 0], sizes = [8, 128], strides = [1, 1]} : vector<8x512xf32> to vector<8x128xf32>
    %91 = arith.negf %90 : vector<8x128xf32>
    %92 = math.exp %91 : vector<8x128xf32>
    %cst_39 = arith.constant 1.000000e+00 : f32
    %93 = vector.broadcast %cst_39 : f32 to vector<8x128xf32>
    %94 = arith.addf %93, %92 : vector<8x128xf32>
    %95 = arith.divf %93, %94 : vector<8x128xf32>
    %96 = vector.extract_strided_slice %89 {offsets = [0, 128], sizes = [8, 128], strides = [1, 1]} : vector<8x512xf32> to vector<8x128xf32>
    %97 = arith.negf %96 : vector<8x128xf32>
    %98 = math.exp %97 : vector<8x128xf32>
    %cst_40 = arith.constant 1.000000e+00 : f32
    %99 = vector.broadcast %cst_40 : f32 to vector<8x128xf32>
    %100 = arith.addf %99, %98 : vector<8x128xf32>
    %101 = arith.divf %99, %100 : vector<8x128xf32>
    %102 = vector.extract_strided_slice %89 {offsets = [0, 256], sizes = [8, 128], strides = [1, 1]} : vector<8x512xf32> to vector<8x128xf32>
    %103 = math.tanh %102 : vector<8x128xf32>
    %104 = vector.extract_strided_slice %89 {offsets = [0, 384], sizes = [8, 128], strides = [1, 1]} : vector<8x512xf32> to vector<8x128xf32>
    %105 = arith.negf %104 : vector<8x128xf32>
    %106 = math.exp %105 : vector<8x128xf32>
    %cst_41 = arith.constant 1.000000e+00 : f32
    %107 = vector.broadcast %cst_41 : f32 to vector<8x128xf32>
    %108 = arith.addf %107, %106 : vector<8x128xf32>
    %109 = arith.divf %107, %108 : vector<8x128xf32>
    %110 = arith.mulf %101, %78 : vector<8x128xf32>
    %111 = arith.mulf %95, %103 : vector<8x128xf32>
    %112 = arith.addf %110, %111 : vector<8x128xf32>
    %113 = math.tanh %112 : vector<8x128xf32>
    %114 = arith.mulf %109, %113 : vector<8x128xf32>
    %115 = arith.index_cast %c2_i32 : i32 to index
    %c0_42 = arith.constant 0 : index
    %c0_43 = arith.constant 0 : index
    %116 = vector.load %arg13[%115, %c0_42, %c0_43] : memref<8x8x128xf32, #tpu.memory_space<vmem>>, vector<1x8x128xf32>
    %117 = vector.shape_cast %116 : vector<1x8x128xf32> to vector<8x128xf32>
    %118 = vector.shape_cast %114 : vector<8x128xf32> to vector<1x8x128xf32>
    tpu.vector_store %arg13[%115, %c0_42, %c0_43], %118 {strides = array<i32>} : memref<8x8x128xf32, #tpu.memory_space<vmem>>, vector<1x8x128xf32>,
    %c3_i32 = arith.constant 3 : i32
    %119 = arith.index_cast %c3_i32 : i32 to index
    %c0_44 = arith.constant 0 : index
    %c0_45 = arith.constant 0 : index
    %120 = vector.load %arg12[%119, %c0_44, %c0_45] : memref<8x8x512xf32, #tpu.memory_space<vmem>>, vector<1x8x512xf32>
    %121 = vector.shape_cast %120 : vector<1x8x512xf32> to vector<8x512xf32>
    %cst_46 = arith.constant dense<0.000000e+00> : vector<8x512xf32>
    %122 = tpu.matmul %114, %12, %cst_46 {dimension_numbers = #tpu.dot_dimension_numbers<[1], [0], [0], [1], [0, 0, 1, 1], [], []>} : vector<8x128xf32>, vector<128x512xf32>, vector<8x512xf32> -> vector<8x512xf32>
    %123 = arith.addf %121, %122 : vector<8x512xf32>
    %124 = vector.extract_strided_slice %123 {offsets = [0, 0], sizes = [8, 128], strides = [1, 1]} : vector<8x512xf32> to vector<8x128xf32>
    %125 = arith.negf %124 : vector<8x128xf32>
    %126 = math.exp %125 : vector<8x128xf32>
    %cst_47 = arith.constant 1.000000e+00 : f32
    %127 = vector.broadcast %cst_47 : f32 to vector<8x128xf32>
    %128 = arith.addf %127, %126 : vector<8x128xf32>
    %129 = arith.divf %127, %128 : vector<8x128xf32>
    %130 = vector.extract_strided_slice %123 {offsets = [0, 128], sizes = [8, 128], strides = [1, 1]} : vector<8x512xf32> to vector<8x128xf32>
    %131 = arith.negf %130 : vector<8x128xf32>
    %132 = math.exp %131 : vector<8x128xf32>
    %cst_48 = arith.constant 1.000000e+00 : f32
    %133 = vector.broadcast %cst_48 : f32 to vector<8x128xf32>
    %134 = arith.addf %133, %132 : vector<8x128xf32>
    %135 = arith.divf %133, %134 : vector<8x128xf32>
    %136 = vector.extract_strided_slice %123 {offsets = [0, 256], sizes = [8, 128], strides = [1, 1]} : vector<8x512xf32> to vector<8x128xf32>
    %137 = math.tanh %136 : vector<8x128xf32>
    %138 = vector.extract_strided_slice %123 {offsets = [0, 384], sizes = [8, 128], strides = [1, 1]} : vector<8x512xf32> to vector<8x128xf32>
    %139 = arith.negf %138 : vector<8x128xf32>
    %140 = math.exp %139 : vector<8x128xf32>
    %cst_49 = arith.constant 1.000000e+00 : f32
    %141 = vector.broadcast %cst_49 : f32 to vector<8x128xf32>
    %142 = arith.addf %141, %140 : vector<8x128xf32>
    %143 = arith.divf %141, %142 : vector<8x128xf32>
    %144 = arith.mulf %135, %112 : vector<8x128xf32>
    %145 = arith.mulf %129, %137 : vector<8x128xf32>
    %146 = arith.addf %144, %145 : vector<8x128xf32>
    %147 = math.tanh %146 : vector<8x128xf32>
    %148 = arith.mulf %143, %147 : vector<8x128xf32>
    %149 = arith.index_cast %c3_i32 : i32 to index
    %c0_50 = arith.constant 0 : index
    %c0_51 = arith.constant 0 : index
    %150 = vector.load %arg13[%149, %c0_50, %c0_51] : memref<8x8x128xf32, #tpu.memory_space<vmem>>, vector<1x8x128xf32>
    %151 = vector.shape_cast %150 : vector<1x8x128xf32> to vector<8x128xf32>
    %152 = vector.shape_cast %148 : vector<8x128xf32> to vector<1x8x128xf32>
    tpu.vector_store %arg13[%149, %c0_50, %c0_51], %152 {strides = array<i32>} : memref<8x8x128xf32, #tpu.memory_space<vmem>>, vector<1x8x128xf32>,
    %c4_i32 = arith.constant 4 : i32
    %153 = arith.index_cast %c4_i32 : i32 to index
    %c0_52 = arith.constant 0 : index
    %c0_53 = arith.constant 0 : index
    %154 = vector.load %arg12[%153, %c0_52, %c0_53] : memref<8x8x512xf32, #tpu.memory_space<vmem>>, vector<1x8x512xf32>
    %155 = vector.shape_cast %154 : vector<1x8x512xf32> to vector<8x512xf32>
    %cst_54 = arith.constant dense<0.000000e+00> : vector<8x512xf32>
    %156 = tpu.matmul %148, %12, %cst_54 {dimension_numbers = #tpu.dot_dimension_numbers<[1], [0], [0], [1], [0, 0, 1, 1], [], []>} : vector<8x128xf32>, vector<128x512xf32>, vector<8x512xf32> -> vector<8x512xf32>
    %157 = arith.addf %155, %156 : vector<8x512xf32>
    %158 = vector.extract_strided_slice %157 {offsets = [0, 0], sizes = [8, 128], strides = [1, 1]} : vector<8x512xf32> to vector<8x128xf32>
    %159 = arith.negf %158 : vector<8x128xf32>
    %160 = math.exp %159 : vector<8x128xf32>
    %cst_55 = arith.constant 1.000000e+00 : f32
    %161 = vector.broadcast %cst_55 : f32 to vector<8x128xf32>
    %162 = arith.addf %161, %160 : vector<8x128xf32>
    %163 = arith.divf %161, %162 : vector<8x128xf32>
    %164 = vector.extract_strided_slice %157 {offsets = [0, 128], sizes = [8, 128], strides = [1, 1]} : vector<8x512xf32> to vector<8x128xf32>
    %165 = arith.negf %164 : vector<8x128xf32>
    %166 = math.exp %165 : vector<8x128xf32>
    %cst_56 = arith.constant 1.000000e+00 : f32
    %167 = vector.broadcast %cst_56 : f32 to vector<8x128xf32>
    %168 = arith.addf %167, %166 : vector<8x128xf32>
    %169 = arith.divf %167, %168 : vector<8x128xf32>
    %170 = vector.extract_strided_slice %157 {offsets = [0, 256], sizes = [8, 128], strides = [1, 1]} : vector<8x512xf32> to vector<8x128xf32>
    %171 = math.tanh %170 : vector<8x128xf32>
    %172 = vector.extract_strided_slice %157 {offsets = [0, 384], sizes = [8, 128], strides = [1, 1]} : vector<8x512xf32> to vector<8x128xf32>
    %173 = arith.negf %172 : vector<8x128xf32>
    %174 = math.exp %173 : vector<8x128xf32>
    %cst_57 = arith.constant 1.000000e+00 : f32
    %175 = vector.broadcast %cst_57 : f32 to vector<8x128xf32>
    %176 = arith.addf %175, %174 : vector<8x128xf32>
    %177 = arith.divf %175, %176 : vector<8x128xf32>
    %178 = arith.mulf %169, %146 : vector<8x128xf32>
    %179 = arith.mulf %163, %171 : vector<8x128xf32>
    %180 = arith.addf %178, %179 : vector<8x128xf32>
    %181 = math.tanh %180 : vector<8x128xf32>
    %182 = arith.mulf %177, %181 : vector<8x128xf32>
    %183 = arith.index_cast %c4_i32 : i32 to index
    %c0_58 = arith.constant 0 : index
    %c0_59 = arith.constant 0 : index
    %184 = vector.load %arg13[%183, %c0_58, %c0_59] : memref<8x8x128xf32, #tpu.memory_space<vmem>>, vector<1x8x128xf32>
    %185 = vector.shape_cast %184 : vector<1x8x128xf32> to vector<8x128xf32>
    %186 = vector.shape_cast %182 : vector<8x128xf32> to vector<1x8x128xf32>
    tpu.vector_store %arg13[%183, %c0_58, %c0_59], %186 {strides = array<i32>} : memref<8x8x128xf32, #tpu.memory_space<vmem>>, vector<1x8x128xf32>,
    %c5_i32 = arith.constant 5 : i32
    %187 = arith.index_cast %c5_i32 : i32 to index
    %c0_60 = arith.constant 0 : index
    %c0_61 = arith.constant 0 : index
    %188 = vector.load %arg12[%187, %c0_60, %c0_61] : memref<8x8x512xf32, #tpu.memory_space<vmem>>, vector<1x8x512xf32>
    %189 = vector.shape_cast %188 : vector<1x8x512xf32> to vector<8x512xf32>
    %cst_62 = arith.constant dense<0.000000e+00> : vector<8x512xf32>
    %190 = tpu.matmul %182, %12, %cst_62 {dimension_numbers = #tpu.dot_dimension_numbers<[1], [0], [0], [1], [0, 0, 1, 1], [], []>} : vector<8x128xf32>, vector<128x512xf32>, vector<8x512xf32> -> vector<8x512xf32>
    %191 = arith.addf %189, %190 : vector<8x512xf32>
    %192 = vector.extract_strided_slice %191 {offsets = [0, 0], sizes = [8, 128], strides = [1, 1]} : vector<8x512xf32> to vector<8x128xf32>
    %193 = arith.negf %192 : vector<8x128xf32>
    %194 = math.exp %193 : vector<8x128xf32>
    %cst_63 = arith.constant 1.000000e+00 : f32
    %195 = vector.broadcast %cst_63 : f32 to vector<8x128xf32>
    %196 = arith.addf %195, %194 : vector<8x128xf32>
    %197 = arith.divf %195, %196 : vector<8x128xf32>
    %198 = vector.extract_strided_slice %191 {offsets = [0, 128], sizes = [8, 128], strides = [1, 1]} : vector<8x512xf32> to vector<8x128xf32>
    %199 = arith.negf %198 : vector<8x128xf32>
    %200 = math.exp %199 : vector<8x128xf32>
    %cst_64 = arith.constant 1.000000e+00 : f32
    %201 = vector.broadcast %cst_64 : f32 to vector<8x128xf32>
    %202 = arith.addf %201, %200 : vector<8x128xf32>
    %203 = arith.divf %201, %202 : vector<8x128xf32>
    %204 = vector.extract_strided_slice %191 {offsets = [0, 256], sizes = [8, 128], strides = [1, 1]} : vector<8x512xf32> to vector<8x128xf32>
    %205 = math.tanh %204 : vector<8x128xf32>
    %206 = vector.extract_strided_slice %191 {offsets = [0, 384], sizes = [8, 128], strides = [1, 1]} : vector<8x512xf32> to vector<8x128xf32>
    %207 = arith.negf %206 : vector<8x128xf32>
    %208 = math.exp %207 : vector<8x128xf32>
    %cst_65 = arith.constant 1.000000e+00 : f32
    %209 = vector.broadcast %cst_65 : f32 to vector<8x128xf32>
    %210 = arith.addf %209, %208 : vector<8x128xf32>
    %211 = arith.divf %209, %210 : vector<8x128xf32>
    %212 = arith.mulf %203, %180 : vector<8x128xf32>
    %213 = arith.mulf %197, %205 : vector<8x128xf32>
    %214 = arith.addf %212, %213 : vector<8x128xf32>
    %215 = math.tanh %214 : vector<8x128xf32>
    %216 = arith.mulf %211, %215 : vector<8x128xf32>
    %217 = arith.index_cast %c5_i32 : i32 to index
    %c0_66 = arith.constant 0 : index
    %c0_67 = arith.constant 0 : index
    %218 = vector.load %arg13[%217, %c0_66, %c0_67] : memref<8x8x128xf32, #tpu.memory_space<vmem>>, vector<1x8x128xf32>
    %219 = vector.shape_cast %218 : vector<1x8x128xf32> to vector<8x128xf32>
    %220 = vector.shape_cast %216 : vector<8x128xf32> to vector<1x8x128xf32>
    tpu.vector_store %arg13[%217, %c0_66, %c0_67], %220 {strides = array<i32>} : memref<8x8x128xf32, #tpu.memory_space<vmem>>, vector<1x8x128xf32>,
    %c6_i32 = arith.constant 6 : i32
    %221 = arith.index_cast %c6_i32 : i32 to index
    %c0_68 = arith.constant 0 : index
    %c0_69 = arith.constant 0 : index
    %222 = vector.load %arg12[%221, %c0_68, %c0_69] : memref<8x8x512xf32, #tpu.memory_space<vmem>>, vector<1x8x512xf32>
    %223 = vector.shape_cast %222 : vector<1x8x512xf32> to vector<8x512xf32>
    %cst_70 = arith.constant dense<0.000000e+00> : vector<8x512xf32>
    %224 = tpu.matmul %216, %12, %cst_70 {dimension_numbers = #tpu.dot_dimension_numbers<[1], [0], [0], [1], [0, 0, 1, 1], [], []>} : vector<8x128xf32>, vector<128x512xf32>, vector<8x512xf32> -> vector<8x512xf32>
    %225 = arith.addf %223, %224 : vector<8x512xf32>
    %226 = vector.extract_strided_slice %225 {offsets = [0, 0], sizes = [8, 128], strides = [1, 1]} : vector<8x512xf32> to vector<8x128xf32>
    %227 = arith.negf %226 : vector<8x128xf32>
    %228 = math.exp %227 : vector<8x128xf32>
    %cst_71 = arith.constant 1.000000e+00 : f32
    %229 = vector.broadcast %cst_71 : f32 to vector<8x128xf32>
    %230 = arith.addf %229, %228 : vector<8x128xf32>
    %231 = arith.divf %229, %230 : vector<8x128xf32>
    %232 = vector.extract_strided_slice %225 {offsets = [0, 128], sizes = [8, 128], strides = [1, 1]} : vector<8x512xf32> to vector<8x128xf32>
    %233 = arith.negf %232 : vector<8x128xf32>
    %234 = math.exp %233 : vector<8x128xf32>
    %cst_72 = arith.constant 1.000000e+00 : f32
    %235 = vector.broadcast %cst_72 : f32 to vector<8x128xf32>
    %236 = arith.addf %235, %234 : vector<8x128xf32>
    %237 = arith.divf %235, %236 : vector<8x128xf32>
    %238 = vector.extract_strided_slice %225 {offsets = [0, 256], sizes = [8, 128], strides = [1, 1]} : vector<8x512xf32> to vector<8x128xf32>
    %239 = math.tanh %238 : vector<8x128xf32>
    %240 = vector.extract_strided_slice %225 {offsets = [0, 384], sizes = [8, 128], strides = [1, 1]} : vector<8x512xf32> to vector<8x128xf32>
    %241 = arith.negf %240 : vector<8x128xf32>
    %242 = math.exp %241 : vector<8x128xf32>
    %cst_73 = arith.constant 1.000000e+00 : f32
    %243 = vector.broadcast %cst_73 : f32 to vector<8x128xf32>
    %244 = arith.addf %243, %242 : vector<8x128xf32>
    %245 = arith.divf %243, %244 : vector<8x128xf32>
    %246 = arith.mulf %237, %214 : vector<8x128xf32>
    %247 = arith.mulf %231, %239 : vector<8x128xf32>
    %248 = arith.addf %246, %247 : vector<8x128xf32>
    %249 = math.tanh %248 : vector<8x128xf32>
    %250 = arith.mulf %245, %249 : vector<8x128xf32>
    %251 = arith.index_cast %c6_i32 : i32 to index
    %c0_74 = arith.constant 0 : index
    %c0_75 = arith.constant 0 : index
    %252 = vector.load %arg13[%251, %c0_74, %c0_75] : memref<8x8x128xf32, #tpu.memory_space<vmem>>, vector<1x8x128xf32>
    %253 = vector.shape_cast %252 : vector<1x8x128xf32> to vector<8x128xf32>
    %254 = vector.shape_cast %250 : vector<8x128xf32> to vector<1x8x128xf32>
    tpu.vector_store %arg13[%251, %c0_74, %c0_75], %254 {strides = array<i32>} : memref<8x8x128xf32, #tpu.memory_space<vmem>>, vector<1x8x128xf32>,
    %c7_i32 = arith.constant 7 : i32
    %255 = arith.index_cast %c7_i32 : i32 to index
    %c0_76 = arith.constant 0 : index
    %c0_77 = arith.constant 0 : index
    %256 = vector.load %arg12[%255, %c0_76, %c0_77] : memref<8x8x512xf32, #tpu.memory_space<vmem>>, vector<1x8x512xf32>
    %257 = vector.shape_cast %256 : vector<1x8x512xf32> to vector<8x512xf32>
    %cst_78 = arith.constant dense<0.000000e+00> : vector<8x512xf32>
    %258 = tpu.matmul %250, %12, %cst_78 {dimension_numbers = #tpu.dot_dimension_numbers<[1], [0], [0], [1], [0, 0, 1, 1], [], []>} : vector<8x128xf32>, vector<128x512xf32>, vector<8x512xf32> -> vector<8x512xf32>
    %259 = arith.addf %257, %258 : vector<8x512xf32>
    %260 = vector.extract_strided_slice %259 {offsets = [0, 0], sizes = [8, 128], strides = [1, 1]} : vector<8x512xf32> to vector<8x128xf32>
    %261 = arith.negf %260 : vector<8x128xf32>
    %262 = math.exp %261 : vector<8x128xf32>
    %cst_79 = arith.constant 1.000000e+00 : f32
    %263 = vector.broadcast %cst_79 : f32 to vector<8x128xf32>
    %264 = arith.addf %263, %262 : vector<8x128xf32>
    %265 = arith.divf %263, %264 : vector<8x128xf32>
    %266 = vector.extract_strided_slice %259 {offsets = [0, 128], sizes = [8, 128], strides = [1, 1]} : vector<8x512xf32> to vector<8x128xf32>
    %267 = arith.negf %266 : vector<8x128xf32>
    %268 = math.exp %267 : vector<8x128xf32>
    %cst_80 = arith.constant 1.000000e+00 : f32
    %269 = vector.broadcast %cst_80 : f32 to vector<8x128xf32>
    %270 = arith.addf %269, %268 : vector<8x128xf32>
    %271 = arith.divf %269, %270 : vector<8x128xf32>
    %272 = vector.extract_strided_slice %259 {offsets = [0, 256], sizes = [8, 128], strides = [1, 1]} : vector<8x512xf32> to vector<8x128xf32>
    %273 = math.tanh %272 : vector<8x128xf32>
    %274 = vector.extract_strided_slice %259 {offsets = [0, 384], sizes = [8, 128], strides = [1, 1]} : vector<8x512xf32> to vector<8x128xf32>
    %275 = arith.negf %274 : vector<8x128xf32>
    %276 = math.exp %275 : vector<8x128xf32>
    %cst_81 = arith.constant 1.000000e+00 : f32
    %277 = vector.broadcast %cst_81 : f32 to vector<8x128xf32>
    %278 = arith.addf %277, %276 : vector<8x128xf32>
    %279 = arith.divf %277, %278 : vector<8x128xf32>
    %280 = arith.mulf %271, %248 : vector<8x128xf32>
    %281 = arith.mulf %265, %273 : vector<8x128xf32>
    %282 = arith.addf %280, %281 : vector<8x128xf32>
    %283 = math.tanh %282 : vector<8x128xf32>
    %284 = arith.mulf %279, %283 : vector<8x128xf32>
    %285 = arith.index_cast %c7_i32 : i32 to index
    %c0_82 = arith.constant 0 : index
    %c0_83 = arith.constant 0 : index
    %286 = vector.load %arg13[%285, %c0_82, %c0_83] : memref<8x8x128xf32, #tpu.memory_space<vmem>>, vector<1x8x128xf32>
    %287 = vector.shape_cast %286 : vector<1x8x128xf32> to vector<8x128xf32>
    %288 = vector.shape_cast %284 : vector<8x128xf32> to vector<1x8x128xf32>
    tpu.vector_store %arg13[%285, %c0_82, %c0_83], %288 {strides = array<i32>} : memref<8x8x128xf32, #tpu.memory_space<vmem>>, vector<1x8x128xf32>,
    %c8_i32 = arith.constant 8 : i32
    %c0_84 = arith.constant 0 : index
    %c0_85 = arith.constant 0 : index
    %c0_86 = arith.constant 0 : index
    %289 = vector.load %arg10[%c0_84, %c0_85, %c0_86] : memref<2x8x128xf32, #tpu.memory_space<vmem>>, vector<1x8x128xf32>
    %290 = vector.shape_cast %289 : vector<1x8x128xf32> to vector<8x128xf32>
    %291 = vector.shape_cast %284 : vector<8x128xf32> to vector<1x8x128xf32>
    tpu.vector_store %arg10[%c0_84, %c0_85, %c0_86], %291 {strides = array<i32>} : memref<2x8x128xf32, #tpu.memory_space<vmem>>, vector<1x8x128xf32>,
    %c0_87 = arith.constant 0 : index
    %c0_88 = arith.constant 0 : index
    %c0_89 = arith.constant 0 : index
    %292 = vector.load %arg11[%c0_87, %c0_88, %c0_89] : memref<2x8x128xf32, #tpu.memory_space<vmem>>, vector<1x8x128xf32>
    %293 = vector.shape_cast %292 : vector<1x8x128xf32> to vector<8x128xf32>
    %294 = vector.shape_cast %282 : vector<8x128xf32> to vector<1x8x128xf32>
    tpu.vector_store %arg11[%c0_87, %c0_88, %c0_89], %294 {strides = array<i32>} : memref<2x8x128xf32, #tpu.memory_space<vmem>>, vector<1x8x128xf32>,
    %c0_90 = arith.constant 0 : index
    %c0_91 = arith.constant 0 : index
    %c0_92 = arith.constant 0 : index
    %295 = vector.load %arg13[%c0_90, %c0_91, %c0_92] : memref<8x8x128xf32, #tpu.memory_space<vmem>>, vector<8x8x128xf32>
    %296 = vector.shape_cast %295 : vector<8x8x128xf32> to vector<64x128xf32>
    %c1 = arith.constant 1 : index
    %c0_93 = arith.constant 0 : index
    %c0_94 = arith.constant 0 : index
    %297 = vector.load %arg4[%c1, %c0_93, %c0_94] : memref<2x128x512xf32, #tpu.memory_space<vmem>>, vector<1x128x512xf32>
    %298 = vector.shape_cast %297 : vector<1x128x512xf32> to vector<128x512xf32>
    %cst_95 = arith.constant dense<0.000000e+00> : vector<64x512xf32>
    %299 = tpu.matmul %296, %298, %cst_95 {dimension_numbers = #tpu.dot_dimension_numbers<[1], [0], [0], [1], [0, 0, 1, 1], [], []>} : vector<64x128xf32>, vector<128x512xf32>, vector<64x512xf32> -> vector<64x512xf32>
    %c1_96 = arith.constant 1 : index
    %c0_97 = arith.constant 0 : index
    %c0_98 = arith.constant 0 : index
    %300 = vector.load %arg6[%c1_96, %c0_97, %c0_98] : memref<2x1x512xf32, #tpu.memory_space<vmem>>, vector<1x1x512xf32>
    %301 = vector.shape_cast %300 : vector<1x1x512xf32> to vector<1x512xf32>
    %302 = vector.broadcast %301 : vector<1x512xf32> to vector<64x512xf32>
    %303 = arith.addf %299, %302 : vector<64x512xf32>
    %304 = vector.shape_cast %303 : vector<64x512xf32> to vector<8x8x512xf32>
    %c0_99 = arith.constant 0 : index
    %c0_100 = arith.constant 0 : index
    %c0_101 = arith.constant 0 : index
    %305 = vector.load %arg12[%c0_99, %c0_100, %c0_101] : memref<8x8x512xf32, #tpu.memory_space<vmem>>, vector<8x8x512xf32>
    tpu.vector_store %arg12[%c0_99, %c0_100, %c0_101], %304 {strides = array<i32>} : memref<8x8x512xf32, #tpu.memory_space<vmem>>, vector<8x8x512xf32>,
    %c1_102 = arith.constant 1 : index
    %c0_103 = arith.constant 0 : index
    %c0_104 = arith.constant 0 : index
    %306 = vector.load %arg5[%c1_102, %c0_103, %c0_104] : memref<2x128x512xf32, #tpu.memory_space<vmem>>, vector<1x128x512xf32>
    %307 = vector.shape_cast %306 : vector<1x128x512xf32> to vector<128x512xf32>
    %c1_105 = arith.constant 1 : index
    %c0_106 = arith.constant 0 : index
    %c0_107 = arith.constant 0 : index
    %308 = vector.load %arg2[%c1_105, %c0_106, %c0_107] : memref<2x8x128xf32, #tpu.memory_space<vmem>>, vector<1x8x128xf32>
    %309 = vector.shape_cast %308 : vector<1x8x128xf32> to vector<8x128xf32>
    %c1_108 = arith.constant 1 : index
    %c0_109 = arith.constant 0 : index
    %c0_110 = arith.constant 0 : index
    %310 = vector.load %arg3[%c1_108, %c0_109, %c0_110] : memref<2x8x128xf32, #tpu.memory_space<vmem>>, vector<1x8x128xf32>
    %311 = vector.shape_cast %310 : vector<1x8x128xf32> to vector<8x128xf32>
    %c0_i32_111 = arith.constant 0 : i32
    %312 = arith.index_cast %c0_i32_111 : i32 to index
    %c0_112 = arith.constant 0 : index
    %c0_113 = arith.constant 0 : index
    %313 = vector.load %arg12[%312, %c0_112, %c0_113] : memref<8x8x512xf32, #tpu.memory_space<vmem>>, vector<1x8x512xf32>
    %314 = vector.shape_cast %313 : vector<1x8x512xf32> to vector<8x512xf32>
    %cst_114 = arith.constant dense<0.000000e+00> : vector<8x512xf32>
    %315 = tpu.matmul %309, %307, %cst_114 {dimension_numbers = #tpu.dot_dimension_numbers<[1], [0], [0], [1], [0, 0, 1, 1], [], []>} : vector<8x128xf32>, vector<128x512xf32>, vector<8x512xf32> -> vector<8x512xf32>
    %316 = arith.addf %314, %315 : vector<8x512xf32>
    %317 = vector.extract_strided_slice %316 {offsets = [0, 0], sizes = [8, 128], strides = [1, 1]} : vector<8x512xf32> to vector<8x128xf32>
    %318 = arith.negf %317 : vector<8x128xf32>
    %319 = math.exp %318 : vector<8x128xf32>
    %cst_115 = arith.constant 1.000000e+00 : f32
    %320 = vector.broadcast %cst_115 : f32 to vector<8x128xf32>
    %321 = arith.addf %320, %319 : vector<8x128xf32>
    %322 = arith.divf %320, %321 : vector<8x128xf32>
    %323 = vector.extract_strided_slice %316 {offsets = [0, 128], sizes = [8, 128], strides = [1, 1]} : vector<8x512xf32> to vector<8x128xf32>
    %324 = arith.negf %323 : vector<8x128xf32>
    %325 = math.exp %324 : vector<8x128xf32>
    %cst_116 = arith.constant 1.000000e+00 : f32
    %326 = vector.broadcast %cst_116 : f32 to vector<8x128xf32>
    %327 = arith.addf %326, %325 : vector<8x128xf32>
    %328 = arith.divf %326, %327 : vector<8x128xf32>
    %329 = vector.extract_strided_slice %316 {offsets = [0, 256], sizes = [8, 128], strides = [1, 1]} : vector<8x512xf32> to vector<8x128xf32>
    %330 = math.tanh %329 : vector<8x128xf32>
    %331 = vector.extract_strided_slice %316 {offsets = [0, 384], sizes = [8, 128], strides = [1, 1]} : vector<8x512xf32> to vector<8x128xf32>
    %332 = arith.negf %331 : vector<8x128xf32>
    %333 = math.exp %332 : vector<8x128xf32>
    %cst_117 = arith.constant 1.000000e+00 : f32
    %334 = vector.broadcast %cst_117 : f32 to vector<8x128xf32>
    %335 = arith.addf %334, %333 : vector<8x128xf32>
    %336 = arith.divf %334, %335 : vector<8x128xf32>
    %337 = arith.mulf %328, %311 : vector<8x128xf32>
    %338 = arith.mulf %322, %330 : vector<8x128xf32>
    %339 = arith.addf %337, %338 : vector<8x128xf32>
    %340 = math.tanh %339 : vector<8x128xf32>
    %341 = arith.mulf %336, %340 : vector<8x128xf32>
    %342 = arith.index_cast %c0_i32_111 : i32 to index
    %c0_118 = arith.constant 0 : index
    %c0_119 = arith.constant 0 : index
    %343 = vector.load %arg13[%342, %c0_118, %c0_119] : memref<8x8x128xf32, #tpu.memory_space<vmem>>, vector<1x8x128xf32>
    %344 = vector.shape_cast %343 : vector<1x8x128xf32> to vector<8x128xf32>
    %345 = vector.shape_cast %341 : vector<8x128xf32> to vector<1x8x128xf32>
    tpu.vector_store %arg13[%342, %c0_118, %c0_119], %345 {strides = array<i32>} : memref<8x8x128xf32, #tpu.memory_space<vmem>>, vector<1x8x128xf32>,
    %c1_i32_120 = arith.constant 1 : i32
    %346 = arith.index_cast %c1_i32_120 : i32 to index
    %c0_121 = arith.constant 0 : index
    %c0_122 = arith.constant 0 : index
    %347 = vector.load %arg12[%346, %c0_121, %c0_122] : memref<8x8x512xf32, #tpu.memory_space<vmem>>, vector<1x8x512xf32>
    %348 = vector.shape_cast %347 : vector<1x8x512xf32> to vector<8x512xf32>
    %cst_123 = arith.constant dense<0.000000e+00> : vector<8x512xf32>
    %349 = tpu.matmul %341, %307, %cst_123 {dimension_numbers = #tpu.dot_dimension_numbers<[1], [0], [0], [1], [0, 0, 1, 1], [], []>} : vector<8x128xf32>, vector<128x512xf32>, vector<8x512xf32> -> vector<8x512xf32>
    %350 = arith.addf %348, %349 : vector<8x512xf32>
    %351 = vector.extract_strided_slice %350 {offsets = [0, 0], sizes = [8, 128], strides = [1, 1]} : vector<8x512xf32> to vector<8x128xf32>
    %352 = arith.negf %351 : vector<8x128xf32>
    %353 = math.exp %352 : vector<8x128xf32>
    %cst_124 = arith.constant 1.000000e+00 : f32
    %354 = vector.broadcast %cst_124 : f32 to vector<8x128xf32>
    %355 = arith.addf %354, %353 : vector<8x128xf32>
    %356 = arith.divf %354, %355 : vector<8x128xf32>
    %357 = vector.extract_strided_slice %350 {offsets = [0, 128], sizes = [8, 128], strides = [1, 1]} : vector<8x512xf32> to vector<8x128xf32>
    %358 = arith.negf %357 : vector<8x128xf32>
    %359 = math.exp %358 : vector<8x128xf32>
    %cst_125 = arith.constant 1.000000e+00 : f32
    %360 = vector.broadcast %cst_125 : f32 to vector<8x128xf32>
    %361 = arith.addf %360, %359 : vector<8x128xf32>
    %362 = arith.divf %360, %361 : vector<8x128xf32>
    %363 = vector.extract_strided_slice %350 {offsets = [0, 256], sizes = [8, 128], strides = [1, 1]} : vector<8x512xf32> to vector<8x128xf32>
    %364 = math.tanh %363 : vector<8x128xf32>
    %365 = vector.extract_strided_slice %350 {offsets = [0, 384], sizes = [8, 128], strides = [1, 1]} : vector<8x512xf32> to vector<8x128xf32>
    %366 = arith.negf %365 : vector<8x128xf32>
    %367 = math.exp %366 : vector<8x128xf32>
    %cst_126 = arith.constant 1.000000e+00 : f32
    %368 = vector.broadcast %cst_126 : f32 to vector<8x128xf32>
    %369 = arith.addf %368, %367 : vector<8x128xf32>
    %370 = arith.divf %368, %369 : vector<8x128xf32>
    %371 = arith.mulf %362, %339 : vector<8x128xf32>
    %372 = arith.mulf %356, %364 : vector<8x128xf32>
    %373 = arith.addf %371, %372 : vector<8x128xf32>
    %374 = math.tanh %373 : vector<8x128xf32>
    %375 = arith.mulf %370, %374 : vector<8x128xf32>
    %376 = arith.index_cast %c1_i32_120 : i32 to index
    %c0_127 = arith.constant 0 : index
    %c0_128 = arith.constant 0 : index
    %377 = vector.load %arg13[%376, %c0_127, %c0_128] : memref<8x8x128xf32, #tpu.memory_space<vmem>>, vector<1x8x128xf32>
    %378 = vector.shape_cast %377 : vector<1x8x128xf32> to vector<8x128xf32>
    %379 = vector.shape_cast %375 : vector<8x128xf32> to vector<1x8x128xf32>
    tpu.vector_store %arg13[%376, %c0_127, %c0_128], %379 {strides = array<i32>} : memref<8x8x128xf32, #tpu.memory_space<vmem>>, vector<1x8x128xf32>,
    %c2_i32_129 = arith.constant 2 : i32
    %380 = arith.index_cast %c2_i32_129 : i32 to index
    %c0_130 = arith.constant 0 : index
    %c0_131 = arith.constant 0 : index
    %381 = vector.load %arg12[%380, %c0_130, %c0_131] : memref<8x8x512xf32, #tpu.memory_space<vmem>>, vector<1x8x512xf32>
    %382 = vector.shape_cast %381 : vector<1x8x512xf32> to vector<8x512xf32>
    %cst_132 = arith.constant dense<0.000000e+00> : vector<8x512xf32>
    %383 = tpu.matmul %375, %307, %cst_132 {dimension_numbers = #tpu.dot_dimension_numbers<[1], [0], [0], [1], [0, 0, 1, 1], [], []>} : vector<8x128xf32>, vector<128x512xf32>, vector<8x512xf32> -> vector<8x512xf32>
    %384 = arith.addf %382, %383 : vector<8x512xf32>
    %385 = vector.extract_strided_slice %384 {offsets = [0, 0], sizes = [8, 128], strides = [1, 1]} : vector<8x512xf32> to vector<8x128xf32>
    %386 = arith.negf %385 : vector<8x128xf32>
    %387 = math.exp %386 : vector<8x128xf32>
    %cst_133 = arith.constant 1.000000e+00 : f32
    %388 = vector.broadcast %cst_133 : f32 to vector<8x128xf32>
    %389 = arith.addf %388, %387 : vector<8x128xf32>
    %390 = arith.divf %388, %389 : vector<8x128xf32>
    %391 = vector.extract_strided_slice %384 {offsets = [0, 128], sizes = [8, 128], strides = [1, 1]} : vector<8x512xf32> to vector<8x128xf32>
    %392 = arith.negf %391 : vector<8x128xf32>
    %393 = math.exp %392 : vector<8x128xf32>
    %cst_134 = arith.constant 1.000000e+00 : f32
    %394 = vector.broadcast %cst_134 : f32 to vector<8x128xf32>
    %395 = arith.addf %394, %393 : vector<8x128xf32>
    %396 = arith.divf %394, %395 : vector<8x128xf32>
    %397 = vector.extract_strided_slice %384 {offsets = [0, 256], sizes = [8, 128], strides = [1, 1]} : vector<8x512xf32> to vector<8x128xf32>
    %398 = math.tanh %397 : vector<8x128xf32>
    %399 = vector.extract_strided_slice %384 {offsets = [0, 384], sizes = [8, 128], strides = [1, 1]} : vector<8x512xf32> to vector<8x128xf32>
    %400 = arith.negf %399 : vector<8x128xf32>
    %401 = math.exp %400 : vector<8x128xf32>
    %cst_135 = arith.constant 1.000000e+00 : f32
    %402 = vector.broadcast %cst_135 : f32 to vector<8x128xf32>
    %403 = arith.addf %402, %401 : vector<8x128xf32>
    %404 = arith.divf %402, %403 : vector<8x128xf32>
    %405 = arith.mulf %396, %373 : vector<8x128xf32>
    %406 = arith.mulf %390, %398 : vector<8x128xf32>
    %407 = arith.addf %405, %406 : vector<8x128xf32>
    %408 = math.tanh %407 : vector<8x128xf32>
    %409 = arith.mulf %404, %408 : vector<8x128xf32>
    %410 = arith.index_cast %c2_i32_129 : i32 to index
    %c0_136 = arith.constant 0 : index
    %c0_137 = arith.constant 0 : index
    %411 = vector.load %arg13[%410, %c0_136, %c0_137] : memref<8x8x128xf32, #tpu.memory_space<vmem>>, vector<1x8x128xf32>
    %412 = vector.shape_cast %411 : vector<1x8x128xf32> to vector<8x128xf32>
    %413 = vector.shape_cast %409 : vector<8x128xf32> to vector<1x8x128xf32>
    tpu.vector_store %arg13[%410, %c0_136, %c0_137], %413 {strides = array<i32>} : memref<8x8x128xf32, #tpu.memory_space<vmem>>, vector<1x8x128xf32>,
    %c3_i32_138 = arith.constant 3 : i32
    %414 = arith.index_cast %c3_i32_138 : i32 to index
    %c0_139 = arith.constant 0 : index
    %c0_140 = arith.constant 0 : index
    %415 = vector.load %arg12[%414, %c0_139, %c0_140] : memref<8x8x512xf32, #tpu.memory_space<vmem>>, vector<1x8x512xf32>
    %416 = vector.shape_cast %415 : vector<1x8x512xf32> to vector<8x512xf32>
    %cst_141 = arith.constant dense<0.000000e+00> : vector<8x512xf32>
    %417 = tpu.matmul %409, %307, %cst_141 {dimension_numbers = #tpu.dot_dimension_numbers<[1], [0], [0], [1], [0, 0, 1, 1], [], []>} : vector<8x128xf32>, vector<128x512xf32>, vector<8x512xf32> -> vector<8x512xf32>
    %418 = arith.addf %416, %417 : vector<8x512xf32>
    %419 = vector.extract_strided_slice %418 {offsets = [0, 0], sizes = [8, 128], strides = [1, 1]} : vector<8x512xf32> to vector<8x128xf32>
    %420 = arith.negf %419 : vector<8x128xf32>
    %421 = math.exp %420 : vector<8x128xf32>
    %cst_142 = arith.constant 1.000000e+00 : f32
    %422 = vector.broadcast %cst_142 : f32 to vector<8x128xf32>
    %423 = arith.addf %422, %421 : vector<8x128xf32>
    %424 = arith.divf %422, %423 : vector<8x128xf32>
    %425 = vector.extract_strided_slice %418 {offsets = [0, 128], sizes = [8, 128], strides = [1, 1]} : vector<8x512xf32> to vector<8x128xf32>
    %426 = arith.negf %425 : vector<8x128xf32>
    %427 = math.exp %426 : vector<8x128xf32>
    %cst_143 = arith.constant 1.000000e+00 : f32
    %428 = vector.broadcast %cst_143 : f32 to vector<8x128xf32>
    %429 = arith.addf %428, %427 : vector<8x128xf32>
    %430 = arith.divf %428, %429 : vector<8x128xf32>
    %431 = vector.extract_strided_slice %418 {offsets = [0, 256], sizes = [8, 128], strides = [1, 1]} : vector<8x512xf32> to vector<8x128xf32>
    %432 = math.tanh %431 : vector<8x128xf32>
    %433 = vector.extract_strided_slice %418 {offsets = [0, 384], sizes = [8, 128], strides = [1, 1]} : vector<8x512xf32> to vector<8x128xf32>
    %434 = arith.negf %433 : vector<8x128xf32>
    %435 = math.exp %434 : vector<8x128xf32>
    %cst_144 = arith.constant 1.000000e+00 : f32
    %436 = vector.broadcast %cst_144 : f32 to vector<8x128xf32>
    %437 = arith.addf %436, %435 : vector<8x128xf32>
    %438 = arith.divf %436, %437 : vector<8x128xf32>
    %439 = arith.mulf %430, %407 : vector<8x128xf32>
    %440 = arith.mulf %424, %432 : vector<8x128xf32>
    %441 = arith.addf %439, %440 : vector<8x128xf32>
    %442 = math.tanh %441 : vector<8x128xf32>
    %443 = arith.mulf %438, %442 : vector<8x128xf32>
    %444 = arith.index_cast %c3_i32_138 : i32 to index
    %c0_145 = arith.constant 0 : index
    %c0_146 = arith.constant 0 : index
    %445 = vector.load %arg13[%444, %c0_145, %c0_146] : memref<8x8x128xf32, #tpu.memory_space<vmem>>, vector<1x8x128xf32>
    %446 = vector.shape_cast %445 : vector<1x8x128xf32> to vector<8x128xf32>
    %447 = vector.shape_cast %443 : vector<8x128xf32> to vector<1x8x128xf32>
    tpu.vector_store %arg13[%444, %c0_145, %c0_146], %447 {strides = array<i32>} : memref<8x8x128xf32, #tpu.memory_space<vmem>>, vector<1x8x128xf32>,
    %c4_i32_147 = arith.constant 4 : i32
    %448 = arith.index_cast %c4_i32_147 : i32 to index
    %c0_148 = arith.constant 0 : index
    %c0_149 = arith.constant 0 : index
    %449 = vector.load %arg12[%448, %c0_148, %c0_149] : memref<8x8x512xf32, #tpu.memory_space<vmem>>, vector<1x8x512xf32>
    %450 = vector.shape_cast %449 : vector<1x8x512xf32> to vector<8x512xf32>
    %cst_150 = arith.constant dense<0.000000e+00> : vector<8x512xf32>
    %451 = tpu.matmul %443, %307, %cst_150 {dimension_numbers = #tpu.dot_dimension_numbers<[1], [0], [0], [1], [0, 0, 1, 1], [], []>} : vector<8x128xf32>, vector<128x512xf32>, vector<8x512xf32> -> vector<8x512xf32>
    %452 = arith.addf %450, %451 : vector<8x512xf32>
    %453 = vector.extract_strided_slice %452 {offsets = [0, 0], sizes = [8, 128], strides = [1, 1]} : vector<8x512xf32> to vector<8x128xf32>
    %454 = arith.negf %453 : vector<8x128xf32>
    %455 = math.exp %454 : vector<8x128xf32>
    %cst_151 = arith.constant 1.000000e+00 : f32
    %456 = vector.broadcast %cst_151 : f32 to vector<8x128xf32>
    %457 = arith.addf %456, %455 : vector<8x128xf32>
    %458 = arith.divf %456, %457 : vector<8x128xf32>
    %459 = vector.extract_strided_slice %452 {offsets = [0, 128], sizes = [8, 128], strides = [1, 1]} : vector<8x512xf32> to vector<8x128xf32>
    %460 = arith.negf %459 : vector<8x128xf32>
    %461 = math.exp %460 : vector<8x128xf32>
    %cst_152 = arith.constant 1.000000e+00 : f32
    %462 = vector.broadcast %cst_152 : f32 to vector<8x128xf32>
    %463 = arith.addf %462, %461 : vector<8x128xf32>
    %464 = arith.divf %462, %463 : vector<8x128xf32>
    %465 = vector.extract_strided_slice %452 {offsets = [0, 256], sizes = [8, 128], strides = [1, 1]} : vector<8x512xf32> to vector<8x128xf32>
    %466 = math.tanh %465 : vector<8x128xf32>
    %467 = vector.extract_strided_slice %452 {offsets = [0, 384], sizes = [8, 128], strides = [1, 1]} : vector<8x512xf32> to vector<8x128xf32>
    %468 = arith.negf %467 : vector<8x128xf32>
    %469 = math.exp %468 : vector<8x128xf32>
    %cst_153 = arith.constant 1.000000e+00 : f32
    %470 = vector.broadcast %cst_153 : f32 to vector<8x128xf32>
    %471 = arith.addf %470, %469 : vector<8x128xf32>
    %472 = arith.divf %470, %471 : vector<8x128xf32>
    %473 = arith.mulf %464, %441 : vector<8x128xf32>
    %474 = arith.mulf %458, %466 : vector<8x128xf32>
    %475 = arith.addf %473, %474 : vector<8x128xf32>
    %476 = math.tanh %475 : vector<8x128xf32>
    %477 = arith.mulf %472, %476 : vector<8x128xf32>
    %478 = arith.index_cast %c4_i32_147 : i32 to index
    %c0_154 = arith.constant 0 : index
    %c0_155 = arith.constant 0 : index
    %479 = vector.load %arg13[%478, %c0_154, %c0_155] : memref<8x8x128xf32, #tpu.memory_space<vmem>>, vector<1x8x128xf32>
    %480 = vector.shape_cast %479 : vector<1x8x128xf32> to vector<8x128xf32>
    %481 = vector.shape_cast %477 : vector<8x128xf32> to vector<1x8x128xf32>
    tpu.vector_store %arg13[%478, %c0_154, %c0_155], %481 {strides = array<i32>} : memref<8x8x128xf32, #tpu.memory_space<vmem>>, vector<1x8x128xf32>,
    %c5_i32_156 = arith.constant 5 : i32
    %482 = arith.index_cast %c5_i32_156 : i32 to index
    %c0_157 = arith.constant 0 : index
    %c0_158 = arith.constant 0 : index
    %483 = vector.load %arg12[%482, %c0_157, %c0_158] : memref<8x8x512xf32, #tpu.memory_space<vmem>>, vector<1x8x512xf32>
    %484 = vector.shape_cast %483 : vector<1x8x512xf32> to vector<8x512xf32>
    %cst_159 = arith.constant dense<0.000000e+00> : vector<8x512xf32>
    %485 = tpu.matmul %477, %307, %cst_159 {dimension_numbers = #tpu.dot_dimension_numbers<[1], [0], [0], [1], [0, 0, 1, 1], [], []>} : vector<8x128xf32>, vector<128x512xf32>, vector<8x512xf32> -> vector<8x512xf32>
    %486 = arith.addf %484, %485 : vector<8x512xf32>
    %487 = vector.extract_strided_slice %486 {offsets = [0, 0], sizes = [8, 128], strides = [1, 1]} : vector<8x512xf32> to vector<8x128xf32>
    %488 = arith.negf %487 : vector<8x128xf32>
    %489 = math.exp %488 : vector<8x128xf32>
    %cst_160 = arith.constant 1.000000e+00 : f32
    %490 = vector.broadcast %cst_160 : f32 to vector<8x128xf32>
    %491 = arith.addf %490, %489 : vector<8x128xf32>
    %492 = arith.divf %490, %491 : vector<8x128xf32>
    %493 = vector.extract_strided_slice %486 {offsets = [0, 128], sizes = [8, 128], strides = [1, 1]} : vector<8x512xf32> to vector<8x128xf32>
    %494 = arith.negf %493 : vector<8x128xf32>
    %495 = math.exp %494 : vector<8x128xf32>
    %cst_161 = arith.constant 1.000000e+00 : f32
    %496 = vector.broadcast %cst_161 : f32 to vector<8x128xf32>
    %497 = arith.addf %496, %495 : vector<8x128xf32>
    %498 = arith.divf %496, %497 : vector<8x128xf32>
    %499 = vector.extract_strided_slice %486 {offsets = [0, 256], sizes = [8, 128], strides = [1, 1]} : vector<8x512xf32> to vector<8x128xf32>
    %500 = math.tanh %499 : vector<8x128xf32>
    %501 = vector.extract_strided_slice %486 {offsets = [0, 384], sizes = [8, 128], strides = [1, 1]} : vector<8x512xf32> to vector<8x128xf32>
    %502 = arith.negf %501 : vector<8x128xf32>
    %503 = math.exp %502 : vector<8x128xf32>
    %cst_162 = arith.constant 1.000000e+00 : f32
    %504 = vector.broadcast %cst_162 : f32 to vector<8x128xf32>
    %505 = arith.addf %504, %503 : vector<8x128xf32>
    %506 = arith.divf %504, %505 : vector<8x128xf32>
    %507 = arith.mulf %498, %475 : vector<8x128xf32>
    %508 = arith.mulf %492, %500 : vector<8x128xf32>
    %509 = arith.addf %507, %508 : vector<8x128xf32>
    %510 = math.tanh %509 : vector<8x128xf32>
    %511 = arith.mulf %506, %510 : vector<8x128xf32>
    %512 = arith.index_cast %c5_i32_156 : i32 to index
    %c0_163 = arith.constant 0 : index
    %c0_164 = arith.constant 0 : index
    %513 = vector.load %arg13[%512, %c0_163, %c0_164] : memref<8x8x128xf32, #tpu.memory_space<vmem>>, vector<1x8x128xf32>
    %514 = vector.shape_cast %513 : vector<1x8x128xf32> to vector<8x128xf32>
    %515 = vector.shape_cast %511 : vector<8x128xf32> to vector<1x8x128xf32>
    tpu.vector_store %arg13[%512, %c0_163, %c0_164], %515 {strides = array<i32>} : memref<8x8x128xf32, #tpu.memory_space<vmem>>, vector<1x8x128xf32>,
    %c6_i32_165 = arith.constant 6 : i32
    %516 = arith.index_cast %c6_i32_165 : i32 to index
    %c0_166 = arith.constant 0 : index
    %c0_167 = arith.constant 0 : index
    %517 = vector.load %arg12[%516, %c0_166, %c0_167] : memref<8x8x512xf32, #tpu.memory_space<vmem>>, vector<1x8x512xf32>
    %518 = vector.shape_cast %517 : vector<1x8x512xf32> to vector<8x512xf32>
    %cst_168 = arith.constant dense<0.000000e+00> : vector<8x512xf32>
    %519 = tpu.matmul %511, %307, %cst_168 {dimension_numbers = #tpu.dot_dimension_numbers<[1], [0], [0], [1], [0, 0, 1, 1], [], []>} : vector<8x128xf32>, vector<128x512xf32>, vector<8x512xf32> -> vector<8x512xf32>
    %520 = arith.addf %518, %519 : vector<8x512xf32>
    %521 = vector.extract_strided_slice %520 {offsets = [0, 0], sizes = [8, 128], strides = [1, 1]} : vector<8x512xf32> to vector<8x128xf32>
    %522 = arith.negf %521 : vector<8x128xf32>
    %523 = math.exp %522 : vector<8x128xf32>
    %cst_169 = arith.constant 1.000000e+00 : f32
    %524 = vector.broadcast %cst_169 : f32 to vector<8x128xf32>
    %525 = arith.addf %524, %523 : vector<8x128xf32>
    %526 = arith.divf %524, %525 : vector<8x128xf32>
    %527 = vector.extract_strided_slice %520 {offsets = [0, 128], sizes = [8, 128], strides = [1, 1]} : vector<8x512xf32> to vector<8x128xf32>
    %528 = arith.negf %527 : vector<8x128xf32>
    %529 = math.exp %528 : vector<8x128xf32>
    %cst_170 = arith.constant 1.000000e+00 : f32
    %530 = vector.broadcast %cst_170 : f32 to vector<8x128xf32>
    %531 = arith.addf %530, %529 : vector<8x128xf32>
    %532 = arith.divf %530, %531 : vector<8x128xf32>
    %533 = vector.extract_strided_slice %520 {offsets = [0, 256], sizes = [8, 128], strides = [1, 1]} : vector<8x512xf32> to vector<8x128xf32>
    %534 = math.tanh %533 : vector<8x128xf32>
    %535 = vector.extract_strided_slice %520 {offsets = [0, 384], sizes = [8, 128], strides = [1, 1]} : vector<8x512xf32> to vector<8x128xf32>
    %536 = arith.negf %535 : vector<8x128xf32>
    %537 = math.exp %536 : vector<8x128xf32>
    %cst_171 = arith.constant 1.000000e+00 : f32
    %538 = vector.broadcast %cst_171 : f32 to vector<8x128xf32>
    %539 = arith.addf %538, %537 : vector<8x128xf32>
    %540 = arith.divf %538, %539 : vector<8x128xf32>
    %541 = arith.mulf %532, %509 : vector<8x128xf32>
    %542 = arith.mulf %526, %534 : vector<8x128xf32>
    %543 = arith.addf %541, %542 : vector<8x128xf32>
    %544 = math.tanh %543 : vector<8x128xf32>
    %545 = arith.mulf %540, %544 : vector<8x128xf32>
    %546 = arith.index_cast %c6_i32_165 : i32 to index
    %c0_172 = arith.constant 0 : index
    %c0_173 = arith.constant 0 : index
    %547 = vector.load %arg13[%546, %c0_172, %c0_173] : memref<8x8x128xf32, #tpu.memory_space<vmem>>, vector<1x8x128xf32>
    %548 = vector.shape_cast %547 : vector<1x8x128xf32> to vector<8x128xf32>
    %549 = vector.shape_cast %545 : vector<8x128xf32> to vector<1x8x128xf32>
    tpu.vector_store %arg13[%546, %c0_172, %c0_173], %549 {strides = array<i32>} : memref<8x8x128xf32, #tpu.memory_space<vmem>>, vector<1x8x128xf32>,
    %c7_i32_174 = arith.constant 7 : i32
    %550 = arith.index_cast %c7_i32_174 : i32 to index
    %c0_175 = arith.constant 0 : index
    %c0_176 = arith.constant 0 : index
    %551 = vector.load %arg12[%550, %c0_175, %c0_176] : memref<8x8x512xf32, #tpu.memory_space<vmem>>, vector<1x8x512xf32>
    %552 = vector.shape_cast %551 : vector<1x8x512xf32> to vector<8x512xf32>
    %cst_177 = arith.constant dense<0.000000e+00> : vector<8x512xf32>
    %553 = tpu.matmul %545, %307, %cst_177 {dimension_numbers = #tpu.dot_dimension_numbers<[1], [0], [0], [1], [0, 0, 1, 1], [], []>} : vector<8x128xf32>, vector<128x512xf32>, vector<8x512xf32> -> vector<8x512xf32>
    %554 = arith.addf %552, %553 : vector<8x512xf32>
    %555 = vector.extract_strided_slice %554 {offsets = [0, 0], sizes = [8, 128], strides = [1, 1]} : vector<8x512xf32> to vector<8x128xf32>
    %556 = arith.negf %555 : vector<8x128xf32>
    %557 = math.exp %556 : vector<8x128xf32>
    %cst_178 = arith.constant 1.000000e+00 : f32
    %558 = vector.broadcast %cst_178 : f32 to vector<8x128xf32>
    %559 = arith.addf %558, %557 : vector<8x128xf32>
    %560 = arith.divf %558, %559 : vector<8x128xf32>
    %561 = vector.extract_strided_slice %554 {offsets = [0, 128], sizes = [8, 128], strides = [1, 1]} : vector<8x512xf32> to vector<8x128xf32>
    %562 = arith.negf %561 : vector<8x128xf32>
    %563 = math.exp %562 : vector<8x128xf32>
    %cst_179 = arith.constant 1.000000e+00 : f32
    %564 = vector.broadcast %cst_179 : f32 to vector<8x128xf32>
    %565 = arith.addf %564, %563 : vector<8x128xf32>
    %566 = arith.divf %564, %565 : vector<8x128xf32>
    %567 = vector.extract_strided_slice %554 {offsets = [0, 256], sizes = [8, 128], strides = [1, 1]} : vector<8x512xf32> to vector<8x128xf32>
    %568 = math.tanh %567 : vector<8x128xf32>
    %569 = vector.extract_strided_slice %554 {offsets = [0, 384], sizes = [8, 128], strides = [1, 1]} : vector<8x512xf32> to vector<8x128xf32>
    %570 = arith.negf %569 : vector<8x128xf32>
    %571 = math.exp %570 : vector<8x128xf32>
    %cst_180 = arith.constant 1.000000e+00 : f32
    %572 = vector.broadcast %cst_180 : f32 to vector<8x128xf32>
    %573 = arith.addf %572, %571 : vector<8x128xf32>
    %574 = arith.divf %572, %573 : vector<8x128xf32>
    %575 = arith.mulf %566, %543 : vector<8x128xf32>
    %576 = arith.mulf %560, %568 : vector<8x128xf32>
    %577 = arith.addf %575, %576 : vector<8x128xf32>
    %578 = math.tanh %577 : vector<8x128xf32>
    %579 = arith.mulf %574, %578 : vector<8x128xf32>
    %580 = arith.index_cast %c7_i32_174 : i32 to index
    %c0_181 = arith.constant 0 : index
    %c0_182 = arith.constant 0 : index
    %581 = vector.load %arg13[%580, %c0_181, %c0_182] : memref<8x8x128xf32, #tpu.memory_space<vmem>>, vector<1x8x128xf32>
    %582 = vector.shape_cast %581 : vector<1x8x128xf32> to vector<8x128xf32>
    %583 = vector.shape_cast %579 : vector<8x128xf32> to vector<1x8x128xf32>
    tpu.vector_store %arg13[%580, %c0_181, %c0_182], %583 {strides = array<i32>} : memref<8x8x128xf32, #tpu.memory_space<vmem>>, vector<1x8x128xf32>,
    %c8_i32_183 = arith.constant 8 : i32
    %c1_184 = arith.constant 1 : index
    %c0_185 = arith.constant 0 : index
    %c0_186 = arith.constant 0 : index
    %584 = vector.load %arg10[%c1_184, %c0_185, %c0_186] : memref<2x8x128xf32, #tpu.memory_space<vmem>>, vector<1x8x128xf32>
    %585 = vector.shape_cast %584 : vector<1x8x128xf32> to vector<8x128xf32>
    %586 = vector.shape_cast %579 : vector<8x128xf32> to vector<1x8x128xf32>
    tpu.vector_store %arg10[%c1_184, %c0_185, %c0_186], %586 {strides = array<i32>} : memref<2x8x128xf32, #tpu.memory_space<vmem>>, vector<1x8x128xf32>,
    %c1_187 = arith.constant 1 : index
    %c0_188 = arith.constant 0 : index
    %c0_189 = arith.constant 0 : index
    %587 = vector.load %arg11[%c1_187, %c0_188, %c0_189] : memref<2x8x128xf32, #tpu.memory_space<vmem>>, vector<1x8x128xf32>
    %588 = vector.shape_cast %587 : vector<1x8x128xf32> to vector<8x128xf32>
    %589 = vector.shape_cast %577 : vector<8x128xf32> to vector<1x8x128xf32>
    tpu.vector_store %arg11[%c1_187, %c0_188, %c0_189], %589 {strides = array<i32>} : memref<2x8x128xf32, #tpu.memory_space<vmem>>, vector<1x8x128xf32>,
    %c0_190 = arith.constant 0 : index
    %c0_191 = arith.constant 0 : index
    %c0_192 = arith.constant 0 : index
    %590 = vector.load %arg13[%c0_190, %c0_191, %c0_192] : memref<8x8x128xf32, #tpu.memory_space<vmem>>, vector<8x8x128xf32>
    %591 = vector.shape_cast %590 : vector<8x8x128xf32> to vector<64x128xf32>
    %c0_193 = arith.constant 0 : index
    %c0_194 = arith.constant 0 : index
    %592 = vector.load %arg7[%c0_193, %c0_194] : memref<128x128xf32, #tpu.memory_space<vmem>>, vector<128x128xf32>
    %cst_195 = arith.constant dense<0.000000e+00> : vector<64x128xf32>
    %593 = tpu.matmul %591, %592, %cst_195 {dimension_numbers = #tpu.dot_dimension_numbers<[1], [0], [0], [1], [0, 0, 1, 1], [], []>} : vector<64x128xf32>, vector<128x128xf32>, vector<64x128xf32> -> vector<64x128xf32>
    %c0_196 = arith.constant 0 : index
    %c0_197 = arith.constant 0 : index
    %594 = vector.load %arg8[%c0_196, %c0_197] : memref<1x128xf32, #tpu.memory_space<vmem>>, vector<1x128xf32>
    %595 = vector.broadcast %594 : vector<1x128xf32> to vector<64x128xf32>
    %596 = arith.addf %593, %595 : vector<64x128xf32>
    %597 = vector.shape_cast %596 : vector<64x128xf32> to vector<8x8x128xf32>
    %c0_198 = arith.constant 0 : index
    %c0_199 = arith.constant 0 : index
    %c0_200 = arith.constant 0 : index
    %598 = vector.load %arg9[%c0_198, %c0_199, %c0_200] : memref<8x8x128xf32, #tpu.memory_space<vmem>>, vector<8x8x128xf32>
    tpu.vector_store %arg9[%c0_198, %c0_199, %c0_200], %597 {strides = array<i32>} : memref<8x8x128xf32, #tpu.memory_space<vmem>>, vector<8x8x128xf32>,
    return
  }
  func.func @transform_0(%arg0: i32) -> (i32, i32, i32) {
    %c0_i32 = arith.constant 0 : i32
    %c0_i32_0 = arith.constant 0 : i32
    %c0_i32_1 = arith.constant 0 : i32
    return %c0_i32, %arg0, %c0_i32_0 : i32, i32, i32
  }
  func.func @transform_1(%arg0: i32) -> (i32, i32, i32) {
    %c0_i32 = arith.constant 0 : i32
    %c0_i32_0 = arith.constant 0 : i32
    %c0_i32_1 = arith.constant 0 : i32
    return %c0_i32, %arg0, %c0_i32_0 : i32, i32, i32
  }
  func.func @transform_2(%arg0: i32) -> (i32, i32, i32) {
    %c0_i32 = arith.constant 0 : i32
    %c0_i32_0 = arith.constant 0 : i32
    %c0_i32_1 = arith.constant 0 : i32
    return %c0_i32, %arg0, %c0_i32_0 : i32, i32, i32
  }
  func.func @transform_3(%arg0: i32) -> (i32, i32, i32) {
    %c0_i32 = arith.constant 0 : i32
    %c0_i32_0 = arith.constant 0 : i32
    %c0_i32_1 = arith.constant 0 : i32
    %c0_i32_2 = arith.constant 0 : i32
    return %c0_i32, %c0_i32_0, %c0_i32_1 : i32, i32, i32
  }
  func.func @transform_4(%arg0: i32) -> (i32, i32, i32) {
    %c0_i32 = arith.constant 0 : i32
    %c0_i32_0 = arith.constant 0 : i32
    %c0_i32_1 = arith.constant 0 : i32
    %c0_i32_2 = arith.constant 0 : i32
    return %c0_i32, %c0_i32_0, %c0_i32_1 : i32, i32, i32
  }
  func.func @transform_5(%arg0: i32) -> (i32, i32, i32) {
    %c0_i32 = arith.constant 0 : i32
    %c0_i32_0 = arith.constant 0 : i32
    %c0_i32_1 = arith.constant 0 : i32
    %c0_i32_2 = arith.constant 0 : i32
    return %c0_i32, %c0_i32_0, %c0_i32_1 : i32, i32, i32
  }
  func.func @transform_6(%arg0: i32) -> (i32, i32) {
    %c0_i32 = arith.constant 0 : i32
    %c0_i32_0 = arith.constant 0 : i32
    %c0_i32_1 = arith.constant 0 : i32
    return %c0_i32, %c0_i32_0 : i32, i32
  }
  func.func @transform_7(%arg0: i32) -> (i32, i32) {
    %c0_i32 = arith.constant 0 : i32
    %c0_i32_0 = arith.constant 0 : i32
    %c0_i32_1 = arith.constant 0 : i32
    return %c0_i32, %c0_i32_0 : i32, i32
  }
  func.func @transform_8(%arg0: i32) -> (i32, i32, i32) {
    %c0_i32 = arith.constant 0 : i32
    %c0_i32_0 = arith.constant 0 : i32
    %c0_i32_1 = arith.constant 0 : i32
    return %c0_i32, %arg0, %c0_i32_0 : i32, i32, i32
  }
  func.func @transform_9(%arg0: i32) -> (i32, i32, i32) {
    %c0_i32 = arith.constant 0 : i32
    %c0_i32_0 = arith.constant 0 : i32
    %c0_i32_1 = arith.constant 0 : i32
    return %c0_i32, %arg0, %c0_i32_0 : i32, i32, i32
  }
  func.func @transform_10(%arg0: i32) -> (i32, i32, i32) {
    %c0_i32 = arith.constant 0 : i32
    %c0_i32_0 = arith.constant 0 : i32
    %c0_i32_1 = arith.constant 0 : i32
    return %c0_i32, %arg0, %c0_i32_0 : i32, i32, i32
  }
}

</mosaic_0001>

<llo_original>
// kernel: tpu_custom_call.1
$region0: #{tpu_custom_call.1}
  #allocation0 [shape = 'u32[]', space=smem, size = 0x4, offset = 0x4, fixed_abs, tag = 'smem constant byte address 0x4 - core index']
  #allocation1 [shape = 'u32[144,128]{1,0:T(1,128)}', space=vmem, size = 0x12000, scoped, tag = 'internal scratch']
  #allocation2 [shape = 'f32[8,8,512]{2,1,0:T(8,128)}', space=vmem, size = 0x20000, scoped, tag = 'scratch operand']
  #allocation3 [shape = 'f32[8,8,128]{2,1,0:T(8,128)}', space=vmem, size = 0x8000, scoped, tag = 'scratch operand']
  %s0 = inlined_call_operand.hbm [shape: f32[8,8,128], index: 0, kind: input, shape index: {}]
  %s1 = inlined_call_operand.hbm [shape: f32[2,8,128], index: 1, kind: input, shape index: {}]
  %s2 = inlined_call_operand.hbm [shape: f32[2,8,128], index: 2, kind: input, shape index: {}]
  %s3 = inlined_call_operand.hbm [shape: f32[2,128,512], index: 3, kind: input, shape index: {}]
  %s4 = inlined_call_operand.hbm [shape: f32[2,128,512], index: 4, kind: input, shape index: {}]
  %s5 = inlined_call_operand.vmem [shape: f32[2,1,512], index: 5, kind: input, shape index: {}]
  %s6 = inlined_call_operand.hbm [shape: f32[128,128], index: 6, kind: input, shape index: {}]
  %s7 = inlined_call_operand.vmem [shape: f32[1,128], index: 7, kind: input, shape index: {}]
  %s8 = inlined_call_operand.hbm [shape: f32[8,8,128], index: 8, kind: output, shape index: {0}]
  %s9 = inlined_call_operand.hbm [shape: f32[2,8,128], index: 9, kind: output, shape index: {1}]
  %s10 = inlined_call_operand.hbm [shape: f32[2,8,128], index: 10, kind: output, shape index: {2}]
  %11 = xla_tuple %s8, %s9, %s10
  %s12 = sld [smem:[#allocation0]]
  $region82: #{tpu_custom_call.1} parent=0
    _
  %s14 = ssub.s32 1, %s12
  %s15 = scalar_select 0, %s14, %s12
  $region1: #{tpu_custom_call.1} parent=0
    #allocation4 [shape = 'u8[32768]{0}', space=vmem, size = 0x8000, scoped, tag = 'input window, operand 0, single buffered']
    #allocation5 [shape = 's32[1]{0}', space=sflag, size = 0x4, scoped, tag = 'scoped memory for tpu_custom_call.1']
    #allocation6 [shape = 's32[1]{0}', space=sflag, size = 0x4, scoped, tag = 'scoped memory for tpu_custom_call.1']
    #allocation7 [shape = 'u8[8192]{0}', space=vmem, size = 0x2000, scoped, tag = 'input window, operand 1, single buffered']
    #allocation8 [shape = 's32[1]{0}', space=sflag, size = 0x4, scoped, tag = 'scoped memory for tpu_custom_call.1']
    #allocation9 [shape = 'u8[8192]{0}', space=vmem, size = 0x2000, scoped, tag = 'input window, operand 2, single buffered']
    #allocation10 [shape = 'u8[524288]{0}', space=vmem, size = 0x80000, scoped, tag = 'input window, operand 3, single buffered']
    #allocation11 [shape = 's32[1]{0}', space=sflag, size = 0x4, scoped, tag = 'scoped memory for tpu_custom_call.1']
    #allocation12 [shape = 'u8[524288]{0}', space=vmem, size = 0x80000, scoped, tag = 'input window, operand 4, single buffered']
    #allocation13 [shape = 'u8[65536]{0}', space=vmem, size = 0x10000, scoped, tag = 'input window, operand 6, single buffered']
    #allocation14 [shape = 's32[1]{0}', space=sflag, size = 0x4, scoped, tag = 'scoped memory for tpu_custom_call.1']
    #allocation15 [shape = 'u8[32768]{0}', space=vmem, size = 0x8000, scoped, tag = 'output window, operand 0, single buffered']
    #allocation16 [shape = 'u8[8192]{0}', space=vmem, size = 0x2000, scoped, tag = 'output window, operand 1, single buffered']
    #allocation17 [shape = 's32[1]{0}', space=sflag, size = 0x4, scoped, tag = 'scoped memory for tpu_custom_call.1']
    #allocation18 [shape = 'u8[8192]{0}', space=vmem, size = 0x2000, scoped, tag = 'output window, operand 2, single buffered']
    %16 = vsyncpa [#allocation5], 0
    %17 = vsyncpa [#allocation8], 0
    %18 = vsyncpa [#allocation11], 0
    %19 = vsyncpa [#allocation14], 0
    %20 = vsyncpa [#allocation6], 0
    %21 = vsyncpa [#allocation17], 0
    // Predicated region
    $region2: #{tpu_custom_call.1} parent=1 // pred_check
      _
    $region3: #{tpu_custom_call.1} parent=1 // pred_check_branch
      %23 = sbr.rel (0) target = $region5
    $region4: #{tpu_custom_call.1} parent=1 // pred_region
      %s25 = ssub.s32 1024, 1024
      %26 = vsyncadd [#allocation5], %s25
      %s27 = sshll.u32 [#allocation4], 4
      %s28 = int_to_ptr.vmem [resolvable:$true] %s27
      %33 = dma.hbm_to_vmem [thread:$0]  %s0, 1024, %s28, [#allocation5], 128, 128, 8
    $region5: #{tpu_custom_call.1} parent=1 // pred_fallthru
      _
    // Predicated region
    $region6: #{tpu_custom_call.1} parent=1 // pred_check
      _
    $region7: #{tpu_custom_call.1} parent=1 // pred_check_branch
      %35 = sbr.rel (0) target = $region9
    $region8: #{tpu_custom_call.1} parent=1 // pred_region
      %s37 = ssub.s32 256, 256
      %38 = vsyncadd [#allocation8], %s37
      %s39 = sshll.u32 [#allocation7], 4
      %s40 = int_to_ptr.vmem [resolvable:$true] %s39
      %45 = dma.hbm_to_vmem [thread:$0]  %s1, 256, %s40, [#allocation8], 128, 128, 8
    $region9: #{tpu_custom_call.1} parent=1 // pred_fallthru
      _
    // Predicated region
    $region10: #{tpu_custom_call.1} parent=1 // pred_check
      _
    $region11: #{tpu_custom_call.1} parent=1 // pred_check_branch
      %47 = sbr.rel (0) target = $region13
    $region12: #{tpu_custom_call.1} parent=1 // pred_region
      %s49 = ssub.s32 256, 256
      %50 = vsyncadd [#allocation8], %s49
      %s51 = sshll.u32 [#allocation9], 4
      %s52 = int_to_ptr.vmem [resolvable:$true] %s51
      %57 = dma.hbm_to_vmem [thread:$0]  %s2, 256, %s52, [#allocation8], 128, 128, 8
    $region13: #{tpu_custom_call.1} parent=1 // pred_fallthru
      _
    // Predicated region
    $region14: #{tpu_custom_call.1} parent=1 // pred_check
      _
    $region15: #{tpu_custom_call.1} parent=1 // pred_check_branch
      %59 = sbr.rel (0) target = $region17
    $region16: #{tpu_custom_call.1} parent=1 // pred_region
      %s61 = ssub.s32 16384, 16384
      %62 = vsyncadd [#allocation11], %s61
      %s63 = sshll.u32 [#allocation10], 4
      %s64 = int_to_ptr.vmem [resolvable:$true] %s63
      %69 = dma.hbm_to_vmem [thread:$0]  %s3, 16384, %s64, [#allocation11], 512, 512, 32
    $region17: #{tpu_custom_call.1} parent=1 // pred_fallthru
      _
    // Predicated region
    $region18: #{tpu_custom_call.1} parent=1 // pred_check
      _
    $region19: #{tpu_custom_call.1} parent=1 // pred_check_branch
      %71 = sbr.rel (0) target = $region21
    $region20: #{tpu_custom_call.1} parent=1 // pred_region
      %s73 = ssub.s32 16384, 16384
      %74 = vsyncadd [#allocation11], %s73
      %s75 = sshll.u32 [#allocation12], 4
      %s76 = int_to_ptr.vmem [resolvable:$true] %s75
      %81 = dma.hbm_to_vmem [thread:$0]  %s4, 16384, %s76, [#allocation11], 512, 512, 32
    $region21: #{tpu_custom_call.1} parent=1 // pred_fallthru
      _
    // Predicated region
    $region22: #{tpu_custom_call.1} parent=1 // pred_check
      _
    $region23: #{tpu_custom_call.1} parent=1 // pred_check_branch
      %83 = sbr.rel (0) target = $region25
    $region24: #{tpu_custom_call.1} parent=1 // pred_region
      _
    $region25: #{tpu_custom_call.1} parent=1 // pred_fallthru
      _
    // Predicated region
    $region26: #{tpu_custom_call.1} parent=1 // pred_check
      _
    $region27: #{tpu_custom_call.1} parent=1 // pred_check_branch
      %85 = sbr.rel (0) target = $region29
    $region28: #{tpu_custom_call.1} parent=1 // pred_region
      %s87 = ssub.s32 2048, 2048
      %88 = vsyncadd [#allocation14], %s87
      %s89 = sshll.u32 [#allocation13], 4
      %s90 = int_to_ptr.vmem [resolvable:$true] %s89
      %95 = dma.hbm_to_vmem [thread:$0]  %s6, 2048, %s90, [#allocation14], 128, 128, 8
    $region29: #{tpu_custom_call.1} parent=1 // pred_fallthru
      _
    // Predicated region
    $region30: #{tpu_custom_call.1} parent=1 // pred_check
      _
    $region31: #{tpu_custom_call.1} parent=1 // pred_check_branch
      %97 = sbr.rel (0) target = $region33
    $region32: #{tpu_custom_call.1} parent=1 // pred_region
      _
    $region33: #{tpu_custom_call.1} parent=1 // pred_fallthru
      _
    // Predicated region
    $region34: #{tpu_custom_call.1} parent=1 // pred_check
      _
    $region35: #{tpu_custom_call.1} parent=1 // pred_check_branch
      %99 = sbr.rel (0) target = $region37
    $region36: #{tpu_custom_call.1} parent=1 // pred_region
      %100 = dma.done [#allocation5], 1024
    $region37: #{tpu_custom_call.1} parent=1 // pred_fallthru
      _
    // Predicated region
    $region38: #{tpu_custom_call.1} parent=1 // pred_check
      _
    $region39: #{tpu_custom_call.1} parent=1 // pred_check_branch
      %102 = sbr.rel (0) target = $region41
    $region40: #{tpu_custom_call.1} parent=1 // pred_region
      %103 = dma.done [#allocation8], 256
    $region41: #{tpu_custom_call.1} parent=1 // pred_fallthru
      _
    // Predicated region
    $region42: #{tpu_custom_call.1} parent=1 // pred_check
      _
    $region43: #{tpu_custom_call.1} parent=1 // pred_check_branch
      %105 = sbr.rel (0) target = $region45
    $region44: #{tpu_custom_call.1} parent=1 // pred_region
      %106 = dma.done [#allocation8], 256
    $region45: #{tpu_custom_call.1} parent=1 // pred_fallthru
      _
    // Predicated region
    $region46: #{tpu_custom_call.1} parent=1 // pred_check
      _
    $region47: #{tpu_custom_call.1} parent=1 // pred_check_branch
      %108 = sbr.rel (0) target = $region49
    $region48: #{tpu_custom_call.1} parent=1 // pred_region
      %109 = dma.done [#allocation11], 16384
    $region49: #{tpu_custom_call.1} parent=1 // pred_fallthru
      _
    // Predicated region
    $region50: #{tpu_custom_call.1} parent=1 // pred_check
      _
    $region51: #{tpu_custom_call.1} parent=1 // pred_check_branch
      %111 = sbr.rel (0) target = $region53
    $region52: #{tpu_custom_call.1} parent=1 // pred_region
      %112 = dma.done [#allocation11], 16384
    $region53: #{tpu_custom_call.1} parent=1 // pred_fallthru
      _
    // Predicated region
    $region54: #{tpu_custom_call.1} parent=1 // pred_check
      _
    $region55: #{tpu_custom_call.1} parent=1 // pred_check_branch
      %114 = sbr.rel (0) target = $region57
    $region56: #{tpu_custom_call.1} parent=1 // pred_region
      %115 = dma.done [#allocation14], 2048
    $region57: #{tpu_custom_call.1} parent=1 // pred_fallthru
      _
    %v116 = vld [vmem:[#allocation4] sm:$0xff]
    %v117 = vld [vmem:[#allocation4 + $0x8] sm:$0xff]
    %v118 = vld [vmem:[#allocation4 + $0x10] sm:$0xff]
    %v119 = vld [vmem:[#allocation4 + $0x18] sm:$0xff]
    %v120 = vld [vmem:[#allocation4 + $0x20] sm:$0xff]
    %v121 = vld [vmem:[#allocation4 + $0x28] sm:$0xff]
    %v122 = vld [vmem:[#allocation4 + $0x30] sm:$0xff]
    %v123 = vld [vmem:[#allocation4 + $0x38] sm:$0xff]
    %v124 = vld [vmem:[#allocation10] sm:$0xff]
    %v125 = vld [vmem:[#allocation10 + $0x8] sm:$0xff]
    %v126 = vld [vmem:[#allocation10 + $0x10] sm:$0xff]
    %v127 = vld [vmem:[#allocation10 + $0x18] sm:$0xff]
    %v128 = vld [vmem:[#allocation10 + $0x20] sm:$0xff]
    %v129 = vld [vmem:[#allocation10 + $0x28] sm:$0xff]
    %v130 = vld [vmem:[#allocation10 + $0x30] sm:$0xff]
    %v131 = vld [vmem:[#allocation10 + $0x38] sm:$0xff]
    %v132 = vld [vmem:[#allocation10 + $0x40] sm:$0xff]
    %v133 = vld [vmem:[#allocation10 + $0x48] sm:$0xff]
    %v134 = vld [vmem:[#allocation10 + $0x50] sm:$0xff]
    %v135 = vld [vmem:[#allocation10 + $0x58] sm:$0xff]
    %v136 = vld [vmem:[#allocation10 + $0x60] sm:$0xff]
    %v137 = vld [vmem:[#allocation10 + $0x68] sm:$0xff]
    %v138 = vld [vmem:[#allocation10 + $0x70] sm:$0xff]
    %v139 = vld [vmem:[#allocation10 + $0x78] sm:$0xff]
    %v140 = vld [vmem:[#allocation10 + $0x80] sm:$0xff]
    %v141 = vld [vmem:[#allocation10 + $0x88] sm:$0xff]
    %v142 = vld [vmem:[#allocation10 + $0x90] sm:$0xff]
    %v143 = vld [vmem:[#allocation10 + $0x98] sm:$0xff]
    %v144 = vld [vmem:[#allocation10 + $0xa0] sm:$0xff]
    %v145 = vld [vmem:[#allocation10 + $0xa8] sm:$0xff]
    %v146 = vld [vmem:[#allocation10 + $0xb0] sm:$0xff]
    %v147 = vld [vmem:[#allocation10 + $0xb8] sm:$0xff]
    %v148 = vld [vmem:[#allocation10 + $0xc0] sm:$0xff]
    %v149 = vld [vmem:[#allocation10 + $0xc8] sm:$0xff]
    %v150 = vld [vmem:[#allocation10 + $0xd0] sm:$0xff]
    %v151 = vld [vmem:[#allocation10 + $0xd8] sm:$0xff]
    %v152 = vld [vmem:[#allocation10 + $0xe0] sm:$0xff]
    %v153 = vld [vmem:[#allocation10 + $0xe8] sm:$0xff]
    %v154 = vld [vmem:[#allocation10 + $0xf0] sm:$0xff]
    %v155 = vld [vmem:[#allocation10 + $0xf8] sm:$0xff]
    %v156 = vld [vmem:[#allocation10 + $0x100] sm:$0xff]
    %v157 = vld [vmem:[#allocation10 + $0x108] sm:$0xff]
    %v158 = vld [vmem:[#allocation10 + $0x110] sm:$0xff]
    %v159 = vld [vmem:[#allocation10 + $0x118] sm:$0xff]
    %v160 = vld [vmem:[#allocation10 + $0x120] sm:$0xff]
    %v161 = vld [vmem:[#allocation10 + $0x128] sm:$0xff]
    %v162 = vld [vmem:[#allocation10 + $0x130] sm:$0xff]
    %v163 = vld [vmem:[#allocation10 + $0x138] sm:$0xff]
    %v164 = vld [vmem:[#allocation10 + $0x140] sm:$0xff]
    %v165 = vld [vmem:[#allocation10 + $0x148] sm:$0xff]
    %v166 = vld [vmem:[#allocation10 + $0x150] sm:$0xff]
    %v167 = vld [vmem:[#allocation10 + $0x158] sm:$0xff]
    %v168 = vld [vmem:[#allocation10 + $0x160] sm:$0xff]
    %v169 = vld [vmem:[#allocation10 + $0x168] sm:$0xff]
    %v170 = vld [vmem:[#allocation10 + $0x170] sm:$0xff]
    %v171 = vld [vmem:[#allocation10 + $0x178] sm:$0xff]
    %v172 = vld [vmem:[#allocation10 + $0x180] sm:$0xff]
    %v173 = vld [vmem:[#allocation10 + $0x188] sm:$0xff]
    %v174 = vld [vmem:[#allocation10 + $0x190] sm:$0xff]
    %v175 = vld [vmem:[#allocation10 + $0x198] sm:$0xff]
    %v176 = vld [vmem:[#allocation10 + $0x1a0] sm:$0xff]
    %v177 = vld [vmem:[#allocation10 + $0x1a8] sm:$0xff]
    %v178 = vld [vmem:[#allocation10 + $0x1b0] sm:$0xff]
    %v179 = vld [vmem:[#allocation10 + $0x1b8] sm:$0xff]
    %v180 = vld [vmem:[#allocation10 + $0x1c0] sm:$0xff]
    %v181 = vld [vmem:[#allocation10 + $0x1c8] sm:$0xff]
    %v182 = vld [vmem:[#allocation10 + $0x1d0] sm:$0xff]
    %v183 = vld [vmem:[#allocation10 + $0x1d8] sm:$0xff]
    %v184 = vld [vmem:[#allocation10 + $0x1e0] sm:$0xff]
    %v185 = vld [vmem:[#allocation10 + $0x1e8] sm:$0xff]
    %v186 = vld [vmem:[#allocation10 + $0x1f0] sm:$0xff]
    %v187 = vld [vmem:[#allocation10 + $0x1f8] sm:$0xff]
    %v188 = vld [vmem:[%s5] sm:$0xf]
    %v190 = vlaneseq
    %v191 = vshrl.u32 %v190, 7
    %v192 = vsub.s32 0, %v191
    %v193 = vrot.slane %v188, %v192
    %v194 = vlaneseq
    %v195 = vshrl.u32 %v194, 7
    %v196 = vsub.s32 1, %v195
    %v197 = vrot.slane %v188, %v196
    %v198 = vlaneseq
    %v199 = vshrl.u32 %v198, 7
    %v200 = vsub.s32 2, %v199
    %v201 = vrot.slane %v188, %v200
    %v202 = vlaneseq
    %v203 = vshrl.u32 %v202, 7
    %v204 = vsub.s32 3, %v203
    %v205 = vrot.slane %v188, %v204
    %210 = vmatprep.subr.mxu0 %v125
    %211 = vmatpush1.msra.mxu0 %v124
    %212 = vmatprep.subr.mxu0 %v129
    %213 = vmatpush1.msra.mxu0 %v128
    %214 = vmatprep.subr.mxu0 %v133
    %215 = vmatpush1.msra.mxu0 %v132
    %216 = vmatprep.subr.mxu0 %v137
    %217 = vmatpush1.msra.mxu0 %v136
    %218 = vmatprep.subr.mxu0 %v141
    %219 = vmatpush1.msra.mxu0 %v140
    %220 = vmatprep.subr.mxu0 %v145
    %221 = vmatpush1.msra.mxu0 %v144
    %222 = vmatprep.subr.mxu0 %v149
    %223 = vmatpush1.msra.mxu0 %v148
    %224 = vmatprep.subr.mxu0 %v153
    %225 = vmatpush1.msra.mxu0 %v152
    %226 = vmatprep.subr.mxu0 %v157
    %227 = vmatpush1.msra.mxu0 %v156
    %228 = vmatprep.subr.mxu0 %v161
    %229 = vmatpush1.msra.mxu0 %v160
    %230 = vmatprep.subr.mxu0 %v165
    %231 = vmatpush1.msra.mxu0 %v164
    %232 = vmatprep.subr.mxu0 %v169
    %233 = vmatpush1.msra.mxu0 %v168
    %234 = vmatprep.subr.mxu0 %v173
    %235 = vmatpush1.msra.mxu0 %v172
    %236 = vmatprep.subr.mxu0 %v177
    %237 = vmatpush1.msra.mxu0 %v176
    %238 = vmatprep.subr.mxu0 %v181
    %239 = vmatpush1.msra.mxu0 %v180
    %240 = vmatprep.subr.mxu0 %v185
    %241 = vmatpush1.msra.mxu0 %v184
    %242 = vmatprep.subr.mxu0 0.0
    %243 = vmatpush1.msra.mxu0 0.0
    %244 = vmatprep.subr.mxu0 0.0
    %245 = vmatpush1.msra.mxu0 0.0
    %246 = vmatprep.subr.mxu0 0.0
    %247 = vmatpush1.msra.mxu0 0.0
    %248 = vmatprep.subr.mxu0 0.0
    %249 = vmatpush1.msra.mxu0 0.0
    %250 = vmatprep.subr.mxu0 0.0
    %251 = vmatpush1.msra.mxu0 0.0
    %252 = vmatprep.subr.mxu0 0.0
    %253 = vmatpush1.msra.mxu0 0.0
    %254 = vmatprep.subr.mxu0 0.0
    %255 = vmatpush1.msra.mxu0 0.0
    %256 = vmatprep.subr.mxu0 0.0
    %257 = vmatpush1.msra.mxu0 0.0
    %258 = vmatprep.subr.mxu0 0.0
    %259 = vmatpush1.msra.mxu0 0.0
    %260 = vmatprep.subr.mxu0 0.0
    %261 = vmatpush1.msra.mxu0 0.0
    %262 = vmatprep.subr.mxu0 0.0
    %263 = vmatpush1.msra.mxu0 0.0
    %264 = vmatprep.subr.mxu0 0.0
    %265 = vmatpush1.msra.mxu0 0.0
    %266 = vmatprep.subr.mxu0 0.0
    %267 = vmatpush1.msra.mxu0 0.0
    %268 = vmatprep.subr.mxu0 0.0
    %269 = vmatpush1.msra.mxu0 0.0
    %270 = vmatprep.subr.mxu0 0.0
    %271 = vmatpush1.msra.mxu0 0.0
    %272 = vmatprep.subr.mxu0 0.0
    %273 = vmatpush1.msra.mxu0 0.0
    %274 = vmatprep.mubr.f32.mxu0 0.0
    %275 = vmatmul.mubr.f32.gmra.mrb[0].mxu0 %v116
    %v276 = vpop.f32.mrb[0].mxu0
    %v277 = vadd.f32 %v193, %v276
    %v278 = vpop.f32.mrb[0].mxu0
    %v279 = vadd.f32 %v197, %v278
    %280 = vmatprep.mubr.f32.mxu0 0.0
    %281 = vmatmul.mubr.f32.gmra.mrb[0].mxu0 %v117
    %v282 = vpop.f32.mrb[0].mxu0
    %v283 = vadd.f32 %v193, %v282
    %v284 = vpop.f32.mrb[0].mxu0
    %v285 = vadd.f32 %v197, %v284
    %286 = vmatprep.mubr.f32.mxu0 0.0
    %287 = vmatmul.mubr.f32.gmra.mrb[0].mxu0 %v118
    %v288 = vpop.f32.mrb[0].mxu0
    %v289 = vadd.f32 %v193, %v288
    %v290 = vpop.f32.mrb[0].mxu0
    %v291 = vadd.f32 %v197, %v290
    %292 = vmatprep.mubr.f32.mxu0 0.0
    %293 = vmatmul.mubr.f32.gmra.mrb[0].mxu0 %v119
    %v294 = vpop.f32.mrb[0].mxu0
    %v295 = vadd.f32 %v193, %v294
    %v296 = vpop.f32.mrb[0].mxu0
    %v297 = vadd.f32 %v197, %v296
    %298 = vmatprep.mubr.f32.mxu0 0.0
    %299 = vmatmul.mubr.f32.gmra.mrb[0].mxu0 %v120
    %v300 = vpop.f32.mrb[0].mxu0
    %v301 = vadd.f32 %v193, %v300
    %v302 = vpop.f32.mrb[0].mxu0
    %v303 = vadd.f32 %v197, %v302
    %304 = vmatprep.mubr.f32.mxu0 0.0
    %305 = vmatmul.mubr.f32.gmra.mrb[0].mxu0 %v121
    %v306 = vpop.f32.mrb[0].mxu0
    %v307 = vadd.f32 %v193, %v306
    %v308 = vpop.f32.mrb[0].mxu0
    %v309 = vadd.f32 %v197, %v308
    %310 = vmatprep.mubr.f32.mxu0 0.0
    %311 = vmatmul.mubr.f32.gmra.mrb[0].mxu0 %v122
    %v312 = vpop.f32.mrb[0].mxu0
    %v313 = vadd.f32 %v193, %v312
    %v314 = vpop.f32.mrb[0].mxu0
    %v315 = vadd.f32 %v197, %v314
    %316 = vmatprep.mubr.f32.mxu0 0.0
    %317 = vmatmul.mubr.f32.gmra.mrb[0].mxu0 %v123
    %v318 = vpop.f32.mrb[0].mxu0
    %v319 = vadd.f32 %v193, %v318
    %v320 = vpop.f32.mrb[0].mxu0
    %v321 = vadd.f32 %v197, %v320
    %322 = vdwg.mxu0
    %323 = vmatprep.subr.mxu0 %v127
    %324 = vmatpush1.msra.mxu0 %v126
    %325 = vmatprep.subr.mxu0 %v131
    %326 = vmatpush1.msra.mxu0 %v130
    %327 = vmatprep.subr.mxu0 %v135
    %328 = vmatpush1.msra.mxu0 %v134
    %329 = vmatprep.subr.mxu0 %v139
    %330 = vmatpush1.msra.mxu0 %v138
    %331 = vmatprep.subr.mxu0 %v143
    %332 = vmatpush1.msra.mxu0 %v142
    %333 = vmatprep.subr.mxu0 %v147
    %334 = vmatpush1.msra.mxu0 %v146
    %335 = vmatprep.subr.mxu0 %v151
    %336 = vmatpush1.msra.mxu0 %v150
    %337 = vmatprep.subr.mxu0 %v155
    %338 = vmatpush1.msra.mxu0 %v154
    %339 = vmatprep.subr.mxu0 %v159
    %340 = vmatpush1.msra.mxu0 %v158
    %341 = vmatprep.subr.mxu0 %v163
    %342 = vmatpush1.msra.mxu0 %v162
    %343 = vmatprep.subr.mxu0 %v167
    %344 = vmatpush1.msra.mxu0 %v166
    %345 = vmatprep.subr.mxu0 %v171
    %346 = vmatpush1.msra.mxu0 %v170
    %347 = vmatprep.subr.mxu0 %v175
    %348 = vmatpush1.msra.mxu0 %v174
    %349 = vmatprep.subr.mxu0 %v179
    %350 = vmatpush1.msra.mxu0 %v178
    %351 = vmatprep.subr.mxu0 %v183
    %352 = vmatpush1.msra.mxu0 %v182
    %353 = vmatprep.subr.mxu0 %v187
    %354 = vmatpush1.msra.mxu0 %v186
    %355 = vmatprep.subr.mxu0 0.0
    %356 = vmatpush1.msra.mxu0 0.0
    %357 = vmatprep.subr.mxu0 0.0
    %358 = vmatpush1.msra.mxu0 0.0
    %359 = vmatprep.subr.mxu0 0.0
    %360 = vmatpush1.msra.mxu0 0.0
    %361 = vmatprep.subr.mxu0 0.0
    %362 = vmatpush1.msra.mxu0 0.0
    %363 = vmatprep.subr.mxu0 0.0
    %364 = vmatpush1.msra.mxu0 0.0
    %365 = vmatprep.subr.mxu0 0.0
    %366 = vmatpush1.msra.mxu0 0.0
    %367 = vmatprep.subr.mxu0 0.0
    %368 = vmatpush1.msra.mxu0 0.0
    %369 = vmatprep.subr.mxu0 0.0
    %370 = vmatpush1.msra.mxu0 0.0
    %371 = vmatprep.subr.mxu0 0.0
    %372 = vmatpush1.msra.mxu0 0.0
    %373 = vmatprep.subr.mxu0 0.0
    %374 = vmatpush1.msra.mxu0 0.0
    %375 = vmatprep.subr.mxu0 0.0
    %376 = vmatpush1.msra.mxu0 0.0
    %377 = vmatprep.subr.mxu0 0.0
    %378 = vmatpush1.msra.mxu0 0.0
    %379 = vmatprep.subr.mxu0 0.0
    %380 = vmatpush1.msra.mxu0 0.0
    %381 = vmatprep.subr.mxu0 0.0
    %382 = vmatpush1.msra.mxu0 0.0
    %383 = vmatprep.subr.mxu0 0.0
    %384 = vmatpush1.msra.mxu0 0.0
    %385 = vmatprep.subr.mxu0 0.0
    %386 = vmatpush1.msra.mxu0 0.0
    %387 = vmatprep.mubr.f32.mxu0 0.0
    %388 = vmatmul.mubr.f32.gmra.mrb[0].mxu0 %v116
    %v389 = vpop.f32.mrb[0].mxu0
    %v390 = vadd.f32 %v201, %v389
    %v391 = vpop.f32.mrb[0].mxu0
    %v392 = vadd.f32 %v205, %v391
    %393 = vmatprep.mubr.f32.mxu0 0.0
    %394 = vmatmul.mubr.f32.gmra.mrb[0].mxu0 %v117
    %v395 = vpop.f32.mrb[0].mxu0
    %v396 = vadd.f32 %v201, %v395
    %v397 = vpop.f32.mrb[0].mxu0
    %v398 = vadd.f32 %v205, %v397
    %399 = vmatprep.mubr.f32.mxu0 0.0
    %400 = vmatmul.mubr.f32.gmra.mrb[0].mxu0 %v118
    %v401 = vpop.f32.mrb[0].mxu0
    %v402 = vadd.f32 %v201, %v401
    %v403 = vpop.f32.mrb[0].mxu0
    %v404 = vadd.f32 %v205, %v403
    %405 = vmatprep.mubr.f32.mxu0 0.0
    %406 = vmatmul.mubr.f32.gmra.mrb[0].mxu0 %v119
    %v407 = vpop.f32.mrb[0].mxu0
    %v408 = vadd.f32 %v201, %v407
    %v409 = vpop.f32.mrb[0].mxu0
    %v410 = vadd.f32 %v205, %v409
    %411 = vmatprep.mubr.f32.mxu0 0.0
    %412 = vmatmul.mubr.f32.gmra.mrb[0].mxu0 %v120
    %v413 = vpop.f32.mrb[0].mxu0
    %v414 = vadd.f32 %v201, %v413
    %v415 = vpop.f32.mrb[0].mxu0
    %v416 = vadd.f32 %v205, %v415
    %417 = vmatprep.mubr.f32.mxu0 0.0
    %418 = vmatmul.mubr.f32.gmra.mrb[0].mxu0 %v121
    %v419 = vpop.f32.mrb[0].mxu0
    %v420 = vadd.f32 %v201, %v419
    %v421 = vpop.f32.mrb[0].mxu0
    %v422 = vadd.f32 %v205, %v421
    %423 = vmatprep.mubr.f32.mxu0 0.0
    %424 = vmatmul.mubr.f32.gmra.mrb[0].mxu0 %v122
    %v425 = vpop.f32.mrb[0].mxu0
    %v426 = vadd.f32 %v201, %v425
    %v427 = vpop.f32.mrb[0].mxu0
    %v428 = vadd.f32 %v205, %v427
    %429 = vmatprep.mubr.f32.mxu0 0.0
    %430 = vmatmul.mubr.f32.gmra.mrb[0].mxu0 %v123
    %v431 = vpop.f32.mrb[0].mxu0
    %v432 = vadd.f32 %v201, %v431
    %v433 = vpop.f32.mrb[0].mxu0
    %v434 = vadd.f32 %v205, %v433
    %435 = vdwg.mxu0
    %436 = vst [vmem:[#allocation2] sm:$0xff] %v277
    %437 = vst [vmem:[#allocation2 + $0x8] sm:$0xff] %v279
    %438 = vst [vmem:[#allocation2 + $0x10] sm:$0xff] %v390
    %439 = vst [vmem:[#allocation2 + $0x18] sm:$0xff] %v392
    %440 = vst [vmem:[#allocation2 + $0x20] sm:$0xff] %v283
    %441 = vst [vmem:[#allocation2 + $0x28] sm:$0xff] %v285
    %442 = vst [vmem:[#allocation2 + $0x30] sm:$0xff] %v396
    %443 = vst [vmem:[#allocation2 + $0x38] sm:$0xff] %v398
    %444 = vst [vmem:[#allocation2 + $0x40] sm:$0xff] %v289
    %445 = vst [vmem:[#allocation2 + $0x48] sm:$0xff] %v291
    %446 = vst [vmem:[#allocation2 + $0x50] sm:$0xff] %v402
    %447 = vst [vmem:[#allocation2 + $0x58] sm:$0xff] %v404
    %448 = vst [vmem:[#allocation2 + $0x60] sm:$0xff] %v295
    %449 = vst [vmem:[#allocation2 + $0x68] sm:$0xff] %v297
    %450 = vst [vmem:[#allocation2 + $0x70] sm:$0xff] %v408
    %451 = vst [vmem:[#allocation2 + $0x78] sm:$0xff] %v410
    %452 = vst [vmem:[#allocation2 + $0x80] sm:$0xff] %v301
    %453 = vst [vmem:[#allocation2 + $0x88] sm:$0xff] %v303
    %454 = vst [vmem:[#allocation2 + $0x90] sm:$0xff] %v414
    %455 = vst [vmem:[#allocation2 + $0x98] sm:$0xff] %v416
    %456 = vst [vmem:[#allocation2 + $0xa0] sm:$0xff] %v307
    %457 = vst [vmem:[#allocation2 + $0xa8] sm:$0xff] %v309
    %458 = vst [vmem:[#allocation2 + $0xb0] sm:$0xff] %v420
    %459 = vst [vmem:[#allocation2 + $0xb8] sm:$0xff] %v422
    %460 = vst [vmem:[#allocation2 + $0xc0] sm:$0xff] %v313
    %461 = vst [vmem:[#allocation2 + $0xc8] sm:$0xff] %v315
    %462 = vst [vmem:[#allocation2 + $0xd0] sm:$0xff] %v426
    %463 = vst [vmem:[#allocation2 + $0xd8] sm:$0xff] %v428
    %464 = vst [vmem:[#allocation2 + $0xe0] sm:$0xff] %v319
    %465 = vst [vmem:[#allocation2 + $0xe8] sm:$0xff] %v321
    %466 = vst [vmem:[#allocation2 + $0xf0] sm:$0xff] %v432
    %467 = vst [vmem:[#allocation2 + $0xf8] sm:$0xff] %v434
    %v468 = vld [vmem:[#allocation12] sm:$0xff]
    %v469 = vld [vmem:[#allocation12 + $0x8] sm:$0xff]
    %v470 = vld [vmem:[#allocation12 + $0x10] sm:$0xff]
    %v471 = vld [vmem:[#allocation12 + $0x18] sm:$0xff]
    %v472 = vld [vmem:[#allocation12 + $0x20] sm:$0xff]
    %v473 = vld [vmem:[#allocation12 + $0x28] sm:$0xff]
    %v474 = vld [vmem:[#allocation12 + $0x30] sm:$0xff]
    %v475 = vld [vmem:[#allocation12 + $0x38] sm:$0xff]
    %v476 = vld [vmem:[#allocation12 + $0x40] sm:$0xff]
    %v477 = vld [vmem:[#allocation12 + $0x48] sm:$0xff]
    %v478 = vld [vmem:[#allocation12 + $0x50] sm:$0xff]
    %v479 = vld [vmem:[#allocation12 + $0x58] sm:$0xff]
    %v480 = vld [vmem:[#allocation12 + $0x60] sm:$0xff]
    %v481 = vld [vmem:[#allocation12 + $0x68] sm:$0xff]
    %v482 = vld [vmem:[#allocation12 + $0x70] sm:$0xff]
    %v483 = vld [vmem:[#allocation12 + $0x78] sm:$0xff]
    %v484 = vld [vmem:[#allocation12 + $0x80] sm:$0xff]
    %v485 = vld [vmem:[#allocation12 + $0x88] sm:$0xff]
    %v486 = vld [vmem:[#allocation12 + $0x90] sm:$0xff]
    %v487 = vld [vmem:[#allocation12 + $0x98] sm:$0xff]
    %v488 = vld [vmem:[#allocation12 + $0xa0] sm:$0xff]
    %v489 = vld [vmem:[#allocation12 + $0xa8] sm:$0xff]
    %v490 = vld [vmem:[#allocation12 + $0xb0] sm:$0xff]
    %v491 = vld [vmem:[#allocation12 + $0xb8] sm:$0xff]
    %v492 = vld [vmem:[#allocation12 + $0xc0] sm:$0xff]
    %v493 = vld [vmem:[#allocation12 + $0xc8] sm:$0xff]
    %v494 = vld [vmem:[#allocation12 + $0xd0] sm:$0xff]
    %v495 = vld [vmem:[#allocation12 + $0xd8] sm:$0xff]
    %v496 = vld [vmem:[#allocation12 + $0xe0] sm:$0xff]
    %v497 = vld [vmem:[#allocation12 + $0xe8] sm:$0xff]
    %v498 = vld [vmem:[#allocation12 + $0xf0] sm:$0xff]
    %v499 = vld [vmem:[#allocation12 + $0xf8] sm:$0xff]
    %v500 = vld [vmem:[#allocation12 + $0x100] sm:$0xff]
    %v501 = vld [vmem:[#allocation12 + $0x108] sm:$0xff]
    %v502 = vld [vmem:[#allocation12 + $0x110] sm:$0xff]
    %v503 = vld [vmem:[#allocation12 + $0x118] sm:$0xff]
    %v504 = vld [vmem:[#allocation12 + $0x120] sm:$0xff]
    %v505 = vld [vmem:[#allocation12 + $0x128] sm:$0xff]
    %v506 = vld [vmem:[#allocation12 + $0x130] sm:$0xff]
    %v507 = vld [vmem:[#allocation12 + $0x138] sm:$0xff]
    %v508 = vld [vmem:[#allocation12 + $0x140] sm:$0xff]
    %v509 = vld [vmem:[#allocation12 + $0x148] sm:$0xff]
    %v510 = vld [vmem:[#allocation12 + $0x150] sm:$0xff]
    %v511 = vld [vmem:[#allocation12 + $0x158] sm:$0xff]
    %v512 = vld [vmem:[#allocation12 + $0x160] sm:$0xff]
    %v513 = vld [vmem:[#allocation12 + $0x168] sm:$0xff]
    %v514 = vld [vmem:[#allocation12 + $0x170] sm:$0xff]
    %v515 = vld [vmem:[#allocation12 + $0x178] sm:$0xff]
    %v516 = vld [vmem:[#allocation12 + $0x180] sm:$0xff]
    %v517 = vld [vmem:[#allocation12 + $0x188] sm:$0xff]
    %v518 = vld [vmem:[#allocation12 + $0x190] sm:$0xff]
    %v519 = vld [vmem:[#allocation12 + $0x198] sm:$0xff]
    %v520 = vld [vmem:[#allocation12 + $0x1a0] sm:$0xff]
    %v521 = vld [vmem:[#allocation12 + $0x1a8] sm:$0xff]
    %v522 = vld [vmem:[#allocation12 + $0x1b0] sm:$0xff]
    %v523 = vld [vmem:[#allocation12 + $0x1b8] sm:$0xff]
    %v524 = vld [vmem:[#allocation12 + $0x1c0] sm:$0xff]
    %v525 = vld [vmem:[#allocation12 + $0x1c8] sm:$0xff]
    %v526 = vld [vmem:[#allocation12 + $0x1d0] sm:$0xff]
    %v527 = vld [vmem:[#allocation12 + $0x1d8] sm:$0xff]
    %v528 = vld [vmem:[#allocation12 + $0x1e0] sm:$0xff]
    %v529 = vld [vmem:[#allocation12 + $0x1e8] sm:$0xff]
    %v530 = vld [vmem:[#allocation12 + $0x1f0] sm:$0xff]
    %v531 = vld [vmem:[#allocation12 + $0x1f8] sm:$0xff]
    %v532 = vld [vmem:[#allocation7] sm:$0xff]
    %v533 = vld [vmem:[#allocation9] sm:$0xff]
    %v534 = vld [vmem:[#allocation2] sm:$0xff]
    %v535 = vld [vmem:[#allocation2 + $0x8] sm:$0xff]
    %v536 = vld [vmem:[#allocation2 + $0x10] sm:$0xff]
    %v537 = vld [vmem:[#allocation2 + $0x18] sm:$0xff]
    %538 = vmatprep.subr.mxu0 %v469
    %539 = vmatpush1.msra.mxu0 %v468
    %540 = vmatprep.subr.mxu0 %v473
    %541 = vmatpush1.msra.mxu0 %v472
    %542 = vmatprep.subr.mxu0 %v477
    %543 = vmatpush1.msra.mxu0 %v476
    %544 = vmatprep.subr.mxu0 %v481
    %545 = vmatpush1.msra.mxu0 %v480
    %546 = vmatprep.subr.mxu0 %v485
    %547 = vmatpush1.msra.mxu0 %v484
    %548 = vmatprep.subr.mxu0 %v489
    %549 = vmatpush1.msra.mxu0 %v488
    %550 = vmatprep.subr.mxu0 %v493
    %551 = vmatpush1.msra.mxu0 %v492
    %552 = vmatprep.subr.mxu0 %v497
    %553 = vmatpush1.msra.mxu0 %v496
    %554 = vmatprep.subr.mxu0 %v501
    %555 = vmatpush1.msra.mxu0 %v500
    %556 = vmatprep.subr.mxu0 %v505
    %557 = vmatpush1.msra.mxu0 %v504
    %558 = vmatprep.subr.mxu0 %v509
    %559 = vmatpush1.msra.mxu0 %v508
    %560 = vmatprep.subr.mxu0 %v513
    %561 = vmatpush1.msra.mxu0 %v512
    %562 = vmatprep.subr.mxu0 %v517
    %563 = vmatpush1.msra.mxu0 %v516
    %564 = vmatprep.subr.mxu0 %v521
    %565 = vmatpush1.msra.mxu0 %v520
    %566 = vmatprep.subr.mxu0 %v525
    %567 = vmatpush1.msra.mxu0 %v524
    %568 = vmatprep.subr.mxu0 %v529
    %569 = vmatpush1.msra.mxu0 %v528
    %570 = vmatprep.subr.mxu0 0.0
    %571 = vmatpush1.msra.mxu0 0.0
    %572 = vmatprep.subr.mxu0 0.0
    %573 = vmatpush1.msra.mxu0 0.0
    %574 = vmatprep.subr.mxu0 0.0
    %575 = vmatpush1.msra.mxu0 0.0
    %576 = vmatprep.subr.mxu0 0.0
    %577 = vmatpush1.msra.mxu0 0.0
    %578 = vmatprep.subr.mxu0 0.0
    %579 = vmatpush1.msra.mxu0 0.0
    %580 = vmatprep.subr.mxu0 0.0
    %581 = vmatpush1.msra.mxu0 0.0
    %582 = vmatprep.subr.mxu0 0.0
    %583 = vmatpush1.msra.mxu0 0.0
    %584 = vmatprep.subr.mxu0 0.0
    %585 = vmatpush1.msra.mxu0 0.0
    %586 = vmatprep.subr.mxu0 0.0
    %587 = vmatpush1.msra.mxu0 0.0
    %588 = vmatprep.subr.mxu0 0.0
    %589 = vmatpush1.msra.mxu0 0.0
    %590 = vmatprep.subr.mxu0 0.0
    %591 = vmatpush1.msra.mxu0 0.0
    %592 = vmatprep.subr.mxu0 0.0
    %593 = vmatpush1.msra.mxu0 0.0
    %594 = vmatprep.subr.mxu0 0.0
    %595 = vmatpush1.msra.mxu0 0.0
    %596 = vmatprep.subr.mxu0 0.0
    %597 = vmatpush1.msra.mxu0 0.0
    %598 = vmatprep.subr.mxu0 0.0
    %599 = vmatpush1.msra.mxu0 0.0
    %600 = vmatprep.subr.mxu0 0.0
    %601 = vmatpush1.msra.mxu0 0.0
    %602 = vmatprep.mubr.f32.mxu0 0.0
    %603 = vmatmul.mubr.f32.gmra.mrb[0].mxu0 %v532
    %v604 = vpop.f32.mrb[0].mxu0
    %v605 = vadd.f32 0.0, %v604
    %v606 = vpop.f32.mrb[0].mxu0
    %v607 = vadd.f32 0.0, %v606
    %608 = vdwg.mxu0
    %609 = vmatprep.subr.mxu0 %v471
    %610 = vmatpush1.msra.mxu0 %v470
    %611 = vmatprep.subr.mxu0 %v475
    %612 = vmatpush1.msra.mxu0 %v474
    %613 = vmatprep.subr.mxu0 %v479
    %614 = vmatpush1.msra.mxu0 %v478
    %615 = vmatprep.subr.mxu0 %v483
    %616 = vmatpush1.msra.mxu0 %v482
    %617 = vmatprep.subr.mxu0 %v487
    %618 = vmatpush1.msra.mxu0 %v486
    %619 = vmatprep.subr.mxu0 %v491
    %620 = vmatpush1.msra.mxu0 %v490
    %621 = vmatprep.subr.mxu0 %v495
    %622 = vmatpush1.msra.mxu0 %v494
    %623 = vmatprep.subr.mxu0 %v499
    %624 = vmatpush1.msra.mxu0 %v498
    %625 = vmatprep.subr.mxu0 %v503
    %626 = vmatpush1.msra.mxu0 %v502
    %627 = vmatprep.subr.mxu0 %v507
    %628 = vmatpush1.msra.mxu0 %v506
    %629 = vmatprep.subr.mxu0 %v511
    %630 = vmatpush1.msra.mxu0 %v510
    %631 = vmatprep.subr.mxu0 %v515
    %632 = vmatpush1.msra.mxu0 %v514
    %633 = vmatprep.subr.mxu0 %v519
    %634 = vmatpush1.msra.mxu0 %v518
    %635 = vmatprep.subr.mxu0 %v523
    %636 = vmatpush1.msra.mxu0 %v522
    %637 = vmatprep.subr.mxu0 %v527
    %638 = vmatpush1.msra.mxu0 %v526
    %639 = vmatprep.subr.mxu0 %v531
    %640 = vmatpush1.msra.mxu0 %v530
    %641 = vmatprep.subr.mxu0 0.0
    %642 = vmatpush1.msra.mxu0 0.0
    %643 = vmatprep.subr.mxu0 0.0
    %644 = vmatpush1.msra.mxu0 0.0
    %645 = vmatprep.subr.mxu0 0.0
    %646 = vmatpush1.msra.mxu0 0.0
    %647 = vmatprep.subr.mxu0 0.0
    %648 = vmatpush1.msra.mxu0 0.0
    %649 = vmatprep.subr.mxu0 0.0
    %650 = vmatpush1.msra.mxu0 0.0
    %651 = vmatprep.subr.mxu0 0.0
    %652 = vmatpush1.msra.mxu0 0.0
    %653 = vmatprep.subr.mxu0 0.0
    %654 = vmatpush1.msra.mxu0 0.0
    %655 = vmatprep.subr.mxu0 0.0
    %656 = vmatpush1.msra.mxu0 0.0
    %657 = vmatprep.subr.mxu0 0.0
    %658 = vmatpush1.msra.mxu0 0.0
    %659 = vmatprep.subr.mxu0 0.0
    %660 = vmatpush1.msra.mxu0 0.0
    %661 = vmatprep.subr.mxu0 0.0
    %662 = vmatpush1.msra.mxu0 0.0
    %663 = vmatprep.subr.mxu0 0.0
    %664 = vmatpush1.msra.mxu0 0.0
    %665 = vmatprep.subr.mxu0 0.0
    %666 = vmatpush1.msra.mxu0 0.0
    %667 = vmatprep.subr.mxu0 0.0
    %668 = vmatpush1.msra.mxu0 0.0
    %669 = vmatprep.subr.mxu0 0.0
    %670 = vmatpush1.msra.mxu0 0.0
    %671 = vmatprep.subr.mxu0 0.0
    %672 = vmatpush1.msra.mxu0 0.0
    %673 = vmatprep.mubr.f32.mxu0 0.0
    %674 = vmatmul.mubr.f32.gmra.mrb[0].mxu0 %v532
    %v675 = vpop.f32.mrb[0].mxu0
    %v676 = vadd.f32 0.0, %v675
    %v677 = vpop.f32.mrb[0].mxu0
    %v678 = vadd.f32 0.0, %v677
    %679 = vdwg.mxu0
    %v680 = vadd.f32 %v534, %v605
    %v681 = vadd.f32 %v535, %v607
    %v682 = vadd.f32 %v536, %v676
    %v683 = vadd.f32 %v537, %v678
    %v684 = vxor.u32 %v680, 2147483648
    %v685 = vmul.f32 %v684, 1.442695
    %v686 = vpow.pop %v685
    %v687 = vadd.f32 %v686, 1.0
    %v688 = vrcp.pop %v687
    %v689 = vmul.f32 1.0, %v688
    %v690 = vxor.u32 %v681, 2147483648
    %v691 = vmul.f32 %v690, 1.442695
    %v692 = vpow.pop %v691
    %v693 = vadd.f32 %v692, 1.0
    %v694 = vrcp.pop %v693
    %v695 = vmul.f32 1.0, %v694
    %v696 = vtanh.pop %v682
    %v697 = vxor.u32 %v683, 2147483648
    %v698 = vmul.f32 %v697, 1.442695
    %v699 = vpow.pop %v698
    %v700 = vadd.f32 %v699, 1.0
    %v701 = vrcp.pop %v700
    %v702 = vmul.f32 1.0, %v701
    %v703 = vmul.f32 %v695, %v533
    %v704 = vmul.f32 %v689, %v696
    %v705 = vadd.f32 %v703, %v704
    %v706 = vtanh.pop %v705
    %v707 = vmul.f32 %v702, %v706
    %708 = vst [vmem:[#allocation3] sm:$0xff] %v707
    %s709 = scalar_lea.vmem [#allocation2], 32
    %v710 = vld [vmem:[%s709] sm:$0xff]
    %v711 = vld [vmem:[%s709 + $0x8] sm:$0xff]
    %v712 = vld [vmem:[%s709 + $0x10] sm:$0xff]
    %v713 = vld [vmem:[%s709 + $0x18] sm:$0xff]
    %714 = vmatprep.subr.mxu0 %v469
    %715 = vmatpush1.msra.mxu0 %v468
    %716 = vmatprep.subr.mxu0 %v473
    %717 = vmatpush1.msra.mxu0 %v472
    %718 = vmatprep.subr.mxu0 %v477
    %719 = vmatpush1.msra.mxu0 %v476
    %720 = vmatprep.subr.mxu0 %v481
    %721 = vmatpush1.msra.mxu0 %v480
    %722 = vmatprep.subr.mxu0 %v485
    %723 = vmatpush1.msra.mxu0 %v484
    %724 = vmatprep.subr.mxu0 %v489
    %725 = vmatpush1.msra.mxu0 %v488
    %726 = vmatprep.subr.mxu0 %v493
    %727 = vmatpush1.msra.mxu0 %v492
    %728 = vmatprep.subr.mxu0 %v497
    %729 = vmatpush1.msra.mxu0 %v496
    %730 = vmatprep.subr.mxu0 %v501
    %731 = vmatpush1.msra.mxu0 %v500
    %732 = vmatprep.subr.mxu0 %v505
    %733 = vmatpush1.msra.mxu0 %v504
    %734 = vmatprep.subr.mxu0 %v509
    %735 = vmatpush1.msra.mxu0 %v508
    %736 = vmatprep.subr.mxu0 %v513
    %737 = vmatpush1.msra.mxu0 %v512
    %738 = vmatprep.subr.mxu0 %v517
    %739 = vmatpush1.msra.mxu0 %v516
    %740 = vmatprep.subr.mxu0 %v521
    %741 = vmatpush1.msra.mxu0 %v520
    %742 = vmatprep.subr.mxu0 %v525
    %743 = vmatpush1.msra.mxu0 %v524
    %744 = vmatprep.subr.mxu0 %v529
    %745 = vmatpush1.msra.mxu0 %v528
    %746 = vmatprep.subr.mxu0 0.0
    %747 = vmatpush1.msra.mxu0 0.0
    %748 = vmatprep.subr.mxu0 0.0
    %749 = vmatpush1.msra.mxu0 0.0
    %750 = vmatprep.subr.mxu0 0.0
    %751 = vmatpush1.msra.mxu0 0.0
    %752 = vmatprep.subr.mxu0 0.0
    %753 = vmatpush1.msra.mxu0 0.0
    %754 = vmatprep.subr.mxu0 0.0
    %755 = vmatpush1.msra.mxu0 0.0
    %756 = vmatprep.subr.mxu0 0.0
    %757 = vmatpush1.msra.mxu0 0.0
    %758 = vmatprep.subr.mxu0 0.0
    %759 = vmatpush1.msra.mxu0 0.0
    %760 = vmatprep.subr.mxu0 0.0
    %761 = vmatpush1.msra.mxu0 0.0
    %762 = vmatprep.subr.mxu0 0.0
    %763 = vmatpush1.msra.mxu0 0.0
    %764 = vmatprep.subr.mxu0 0.0
    %765 = vmatpush1.msra.mxu0 0.0
    %766 = vmatprep.subr.mxu0 0.0
    %767 = vmatpush1.msra.mxu0 0.0
    %768 = vmatprep.subr.mxu0 0.0
    %769 = vmatpush1.msra.mxu0 0.0
    %770 = vmatprep.subr.mxu0 0.0
    %771 = vmatpush1.msra.mxu0 0.0
    %772 = vmatprep.subr.mxu0 0.0
    %773 = vmatpush1.msra.mxu0 0.0
    %774 = vmatprep.subr.mxu0 0.0
    %775 = vmatpush1.msra.mxu0 0.0
    %776 = vmatprep.subr.mxu0 0.0
    %777 = vmatpush1.msra.mxu0 0.0
    %778 = vmatprep.mubr.f32.mxu0 0.0
    %779 = vmatmul.mubr.f32.gmra.mrb[0].mxu0 %v707
    %v780 = vpop.f32.mrb[0].mxu0
    %v781 = vadd.f32 0.0, %v780
    %v782 = vpop.f32.mrb[0].mxu0
    %v783 = vadd.f32 0.0, %v782
    %784 = vdwg.mxu0
    %785 = vmatprep.subr.mxu0 %v471
    %786 = vmatpush1.msra.mxu0 %v470
    %787 = vmatprep.subr.mxu0 %v475
    %788 = vmatpush1.msra.mxu0 %v474
    %789 = vmatprep.subr.mxu0 %v479
    %790 = vmatpush1.msra.mxu0 %v478
    %791 = vmatprep.subr.mxu0 %v483
    %792 = vmatpush1.msra.mxu0 %v482
    %793 = vmatprep.subr.mxu0 %v487
    %794 = vmatpush1.msra.mxu0 %v486
    %795 = vmatprep.subr.mxu0 %v491
    %796 = vmatpush1.msra.mxu0 %v490
    %797 = vmatprep.subr.mxu0 %v495
    %798 = vmatpush1.msra.mxu0 %v494
    %799 = vmatprep.subr.mxu0 %v499
    %800 = vmatpush1.msra.mxu0 %v498
    %801 = vmatprep.subr.mxu0 %v503
    %802 = vmatpush1.msra.mxu0 %v502
    %803 = vmatprep.subr.mxu0 %v507
    %804 = vmatpush1.msra.mxu0 %v506
    %805 = vmatprep.subr.mxu0 %v511
    %806 = vmatpush1.msra.mxu0 %v510
    %807 = vmatprep.subr.mxu0 %v515
    %808 = vmatpush1.msra.mxu0 %v514
    %809 = vmatprep.subr.mxu0 %v519
    %810 = vmatpush1.msra.mxu0 %v518
    %811 = vmatprep.subr.mxu0 %v523
    %812 = vmatpush1.msra.mxu0 %v522
    %813 = vmatprep.subr.mxu0 %v527
    %814 = vmatpush1.msra.mxu0 %v526
    %815 = vmatprep.subr.mxu0 %v531
    %816 = vmatpush1.msra.mxu0 %v530
    %817 = vmatprep.subr.mxu0 0.0
    %818 = vmatpush1.msra.mxu0 0.0
    %819 = vmatprep.subr.mxu0 0.0
    %820 = vmatpush1.msra.mxu0 0.0
    %821 = vmatprep.subr.mxu0 0.0
    %822 = vmatpush1.msra.mxu0 0.0
    %823 = vmatprep.subr.mxu0 0.0
    %824 = vmatpush1.msra.mxu0 0.0
    %825 = vmatprep.subr.mxu0 0.0
    %826 = vmatpush1.msra.mxu0 0.0
    %827 = vmatprep.subr.mxu0 0.0
    %828 = vmatpush1.msra.mxu0 0.0
    %829 = vmatprep.subr.mxu0 0.0
    %830 = vmatpush1.msra.mxu0 0.0
    %831 = vmatprep.subr.mxu0 0.0
    %832 = vmatpush1.msra.mxu0 0.0
    %833 = vmatprep.subr.mxu0 0.0
    %834 = vmatpush1.msra.mxu0 0.0
    %835 = vmatprep.subr.mxu0 0.0
    %836 = vmatpush1.msra.mxu0 0.0
    %837 = vmatprep.subr.mxu0 0.0
    %838 = vmatpush1.msra.mxu0 0.0
    %839 = vmatprep.subr.mxu0 0.0
    %840 = vmatpush1.msra.mxu0 0.0
    %841 = vmatprep.subr.mxu0 0.0
    %842 = vmatpush1.msra.mxu0 0.0
    %843 = vmatprep.subr.mxu0 0.0
    %844 = vmatpush1.msra.mxu0 0.0
    %845 = vmatprep.subr.mxu0 0.0
    %846 = vmatpush1.msra.mxu0 0.0
    %847 = vmatprep.subr.mxu0 0.0
    %848 = vmatpush1.msra.mxu0 0.0
    %849 = vmatprep.mubr.f32.mxu0 0.0
    %850 = vmatmul.mubr.f32.gmra.mrb[0].mxu0 %v707
    %v851 = vpop.f32.mrb[0].mxu0
    %v852 = vadd.f32 0.0, %v851
    %v853 = vpop.f32.mrb[0].mxu0
    %v854 = vadd.f32 0.0, %v853
    %855 = vdwg.mxu0
    %v856 = vadd.f32 %v710, %v781
    %v857 = vadd.f32 %v711, %v783
    %v858 = vadd.f32 %v712, %v852
    %v859 = vadd.f32 %v713, %v854
    %v860 = vxor.u32 %v856, 2147483648
    %v861 = vmul.f32 %v860, 1.442695
    %v862 = vpow.pop %v861
    %v863 = vadd.f32 %v862, 1.0
    %v864 = vrcp.pop %v863
    %v865 = vmul.f32 1.0, %v864
    %v866 = vxor.u32 %v857, 2147483648
    %v867 = vmul.f32 %v866, 1.442695
    %v868 = vpow.pop %v867
    %v869 = vadd.f32 %v868, 1.0
    %v870 = vrcp.pop %v869
    %v871 = vmul.f32 1.0, %v870
    %v872 = vtanh.pop %v858
    %v873 = vxor.u32 %v859, 2147483648
    %v874 = vmul.f32 %v873, 1.442695
    %v875 = vpow.pop %v874
    %v876 = vadd.f32 %v875, 1.0
    %v877 = vrcp.pop %v876
    %v878 = vmul.f32 1.0, %v877
    %v879 = vmul.f32 %v871, %v705
    %v880 = vmul.f32 %v865, %v872
    %v881 = vadd.f32 %v879, %v880
    %v882 = vtanh.pop %v881
    %v883 = vmul.f32 %v878, %v882
    %s884 = scalar_lea.vmem [#allocation3], 8
    %885 = vst [vmem:[%s884] sm:$0xff] %v883
    %s886 = scalar_lea.vmem [#allocation2], 64
    %v887 = vld [vmem:[%s886] sm:$0xff]
    %v888 = vld [vmem:[%s886 + $0x8] sm:$0xff]
    %v889 = vld [vmem:[%s886 + $0x10] sm:$0xff]
    %v890 = vld [vmem:[%s886 + $0x18] sm:$0xff]
    %891 = vmatprep.subr.mxu0 %v469
    %892 = vmatpush1.msra.mxu0 %v468
    %893 = vmatprep.subr.mxu0 %v473
    %894 = vmatpush1.msra.mxu0 %v472
    %895 = vmatprep.subr.mxu0 %v477
    %896 = vmatpush1.msra.mxu0 %v476
    %897 = vmatprep.subr.mxu0 %v481
    %898 = vmatpush1.msra.mxu0 %v480
    %899 = vmatprep.subr.mxu0 %v485
    %900 = vmatpush1.msra.mxu0 %v484
    %901 = vmatprep.subr.mxu0 %v489
    %902 = vmatpush1.msra.mxu0 %v488
    %903 = vmatprep.subr.mxu0 %v493
    %904 = vmatpush1.msra.mxu0 %v492
    %905 = vmatprep.subr.mxu0 %v497
    %906 = vmatpush1.msra.mxu0 %v496
    %907 = vmatprep.subr.mxu0 %v501
    %908 = vmatpush1.msra.mxu0 %v500
    %909 = vmatprep.subr.mxu0 %v505
    %910 = vmatpush1.msra.mxu0 %v504
    %911 = vmatprep.subr.mxu0 %v509
    %912 = vmatpush1.msra.mxu0 %v508
    %913 = vmatprep.subr.mxu0 %v513
    %914 = vmatpush1.msra.mxu0 %v512
    %915 = vmatprep.subr.mxu0 %v517
    %916 = vmatpush1.msra.mxu0 %v516
    %917 = vmatprep.subr.mxu0 %v521
    %918 = vmatpush1.msra.mxu0 %v520
    %919 = vmatprep.subr.mxu0 %v525
    %920 = vmatpush1.msra.mxu0 %v524
    %921 = vmatprep.subr.mxu0 %v529
    %922 = vmatpush1.msra.mxu0 %v528
    %923 = vmatprep.subr.mxu0 0.0
    %924 = vmatpush1.msra.mxu0 0.0
    %925 = vmatprep.subr.mxu0 0.0
    %926 = vmatpush1.msra.mxu0 0.0
    %927 = vmatprep.subr.mxu0 0.0
    %928 = vmatpush1.msra.mxu0 0.0
    %929 = vmatprep.subr.mxu0 0.0
    %930 = vmatpush1.msra.mxu0 0.0
    %931 = vmatprep.subr.mxu0 0.0
    %932 = vmatpush1.msra.mxu0 0.0
    %933 = vmatprep.subr.mxu0 0.0
    %934 = vmatpush1.msra.mxu0 0.0
    %935 = vmatprep.subr.mxu0 0.0
    %936 = vmatpush1.msra.mxu0 0.0
    %937 = vmatprep.subr.mxu0 0.0
    %938 = vmatpush1.msra.mxu0 0.0
    %939 = vmatprep.subr.mxu0 0.0
    %940 = vmatpush1.msra.mxu0 0.0
    %941 = vmatprep.subr.mxu0 0.0
    %942 = vmatpush1.msra.mxu0 0.0
    %943 = vmatprep.subr.mxu0 0.0
    %944 = vmatpush1.msra.mxu0 0.0
    %945 = vmatprep.subr.mxu0 0.0
    %946 = vmatpush1.msra.mxu0 0.0
    %947 = vmatprep.subr.mxu0 0.0
    %948 = vmatpush1.msra.mxu0 0.0
    %949 = vmatprep.subr.mxu0 0.0
    %950 = vmatpush1.msra.mxu0 0.0
    %951 = vmatprep.subr.mxu0 0.0
    %952 = vmatpush1.msra.mxu0 0.0
    %953 = vmatprep.subr.mxu0 0.0
    %954 = vmatpush1.msra.mxu0 0.0
    %955 = vmatprep.mubr.f32.mxu0 0.0
    %956 = vmatmul.mubr.f32.gmra.mrb[0].mxu0 %v883
    %v957 = vpop.f32.mrb[0].mxu0
    %v958 = vadd.f32 0.0, %v957
    %v959 = vpop.f32.mrb[0].mxu0
    %v960 = vadd.f32 0.0, %v959
    %961 = vdwg.mxu0
    %962 = vmatprep.subr.mxu0 %v471
    %963 = vmatpush1.msra.mxu0 %v470
    %964 = vmatprep.subr.mxu0 %v475
    %965 = vmatpush1.msra.mxu0 %v474
    %966 = vmatprep.subr.mxu0 %v479
    %967 = vmatpush1.msra.mxu0 %v478
    %968 = vmatprep.subr.mxu0 %v483
    %969 = vmatpush1.msra.mxu0 %v482
    %970 = vmatprep.subr.mxu0 %v487
    %971 = vmatpush1.msra.mxu0 %v486
    %972 = vmatprep.subr.mxu0 %v491
    %973 = vmatpush1.msra.mxu0 %v490
    %974 = vmatprep.subr.mxu0 %v495
    %975 = vmatpush1.msra.mxu0 %v494
    %976 = vmatprep.subr.mxu0 %v499
    %977 = vmatpush1.msra.mxu0 %v498
    %978 = vmatprep.subr.mxu0 %v503
    %979 = vmatpush1.msra.mxu0 %v502
    %980 = vmatprep.subr.mxu0 %v507
    %981 = vmatpush1.msra.mxu0 %v506
    %982 = vmatprep.subr.mxu0 %v511
    %983 = vmatpush1.msra.mxu0 %v510
    %984 = vmatprep.subr.mxu0 %v515
    %985 = vmatpush1.msra.mxu0 %v514
    %986 = vmatprep.subr.mxu0 %v519
    %987 = vmatpush1.msra.mxu0 %v518
    %988 = vmatprep.subr.mxu0 %v523
    %989 = vmatpush1.msra.mxu0 %v522
    %990 = vmatprep.subr.mxu0 %v527
    %991 = vmatpush1.msra.mxu0 %v526
    %992 = vmatprep.subr.mxu0 %v531
    %993 = vmatpush1.msra.mxu0 %v530
    %994 = vmatprep.subr.mxu0 0.0
    %995 = vmatpush1.msra.mxu0 0.0
    %996 = vmatprep.subr.mxu0 0.0
    %997 = vmatpush1.msra.mxu0 0.0
    %998 = vmatprep.subr.mxu0 0.0
    %999 = vmatpush1.msra.mxu0 0.0
    %1000 = vmatprep.subr.mxu0 0.0
    %1001 = vmatpush1.msra.mxu0 0.0
    %1002 = vmatprep.subr.mxu0 0.0
    %1003 = vmatpush1.msra.mxu0 0.0
    %1004 = vmatprep.subr.mxu0 0.0
    %1005 = vmatpush1.msra.mxu0 0.0
    %1006 = vmatprep.subr.mxu0 0.0
    %1007 = vmatpush1.msra.mxu0 0.0
    %1008 = vmatprep.subr.mxu0 0.0
    %1009 = vmatpush1.msra.mxu0 0.0
    %1010 = vmatprep.subr.mxu0 0.0
    %1011 = vmatpush1.msra.mxu0 0.0
    %1012 = vmatprep.subr.mxu0 0.0
    %1013 = vmatpush1.msra.mxu0 0.0
    %1014 = vmatprep.subr.mxu0 0.0
    %1015 = vmatpush1.msra.mxu0 0.0
    %1016 = vmatprep.subr.mxu0 0.0
    %1017 = vmatpush1.msra.mxu0 0.0
    %1018 = vmatprep.subr.mxu0 0.0
    %1019 = vmatpush1.msra.mxu0 0.0
    %1020 = vmatprep.subr.mxu0 0.0
    %1021 = vmatpush1.msra.mxu0 0.0
    %1022 = vmatprep.subr.mxu0 0.0
    %1023 = vmatpush1.msra.mxu0 0.0
    %1024 = vmatprep.subr.mxu0 0.0
    %1025 = vmatpush1.msra.mxu0 0.0
    %1026 = vmatprep.mubr.f32.mxu0 0.0
    %1027 = vmatmul.mubr.f32.gmra.mrb[0].mxu0 %v883
    %v1028 = vpop.f32.mrb[0].mxu0
    %v1029 = vadd.f32 0.0, %v1028
    %v1030 = vpop.f32.mrb[0].mxu0
    %v1031 = vadd.f32 0.0, %v1030
    %1032 = vdwg.mxu0
    %v1033 = vadd.f32 %v887, %v958
    %v1034 = vadd.f32 %v888, %v960
    %v1035 = vadd.f32 %v889, %v1029
    %v1036 = vadd.f32 %v890, %v1031
    %v1037 = vxor.u32 %v1033, 2147483648
    %v1038 = vmul.f32 %v1037, 1.442695
    %v1039 = vpow.pop %v1038
    %v1040 = vadd.f32 %v1039, 1.0
    %v1041 = vrcp.pop %v1040
    %v1042 = vmul.f32 1.0, %v1041
    %v1043 = vxor.u32 %v1034, 2147483648
    %v1044 = vmul.f32 %v1043, 1.442695
    %v1045 = vpow.pop %v1044
    %v1046 = vadd.f32 %v1045, 1.0
    %v1047 = vrcp.pop %v1046
    %v1048 = vmul.f32 1.0, %v1047
    %v1049 = vtanh.pop %v1035
    %v1050 = vxor.u32 %v1036, 2147483648
    %v1051 = vmul.f32 %v1050, 1.442695
    %v1052 = vpow.pop %v1051
    %v1053 = vadd.f32 %v1052, 1.0
    %v1054 = vrcp.pop %v1053
    %v1055 = vmul.f32 1.0, %v1054
    %v1056 = vmul.f32 %v1048, %v881
    %v1057 = vmul.f32 %v1042, %v1049
    %v1058 = vadd.f32 %v1056, %v1057
    %v1059 = vtanh.pop %v1058
    %v1060 = vmul.f32 %v1055, %v1059
    %s1061 = scalar_lea.vmem [#allocation3], 16
    %1062 = vst [vmem:[%s1061] sm:$0xff] %v1060
    %s1063 = scalar_lea.vmem [#allocation2], 96
    %v1064 = vld [vmem:[%s1063] sm:$0xff]
    %v1065 = vld [vmem:[%s1063 + $0x8] sm:$0xff]
    %v1066 = vld [vmem:[%s1063 + $0x10] sm:$0xff]
    %v1067 = vld [vmem:[%s1063 + $0x18] sm:$0xff]
    %1068 = vmatprep.subr.mxu0 %v469
    %1069 = vmatpush1.msra.mxu0 %v468
    %1070 = vmatprep.subr.mxu0 %v473
    %1071 = vmatpush1.msra.mxu0 %v472
    %1072 = vmatprep.subr.mxu0 %v477
    %1073 = vmatpush1.msra.mxu0 %v476
    %1074 = vmatprep.subr.mxu0 %v481
    %1075 = vmatpush1.msra.mxu0 %v480
    %1076 = vmatprep.subr.mxu0 %v485
    %1077 = vmatpush1.msra.mxu0 %v484
    %1078 = vmatprep.subr.mxu0 %v489
    %1079 = vmatpush1.msra.mxu0 %v488
    %1080 = vmatprep.subr.mxu0 %v493
    %1081 = vmatpush1.msra.mxu0 %v492
    %1082 = vmatprep.subr.mxu0 %v497
    %1083 = vmatpush1.msra.mxu0 %v496
    %1084 = vmatprep.subr.mxu0 %v501
    %1085 = vmatpush1.msra.mxu0 %v500
    %1086 = vmatprep.subr.mxu0 %v505
    %1087 = vmatpush1.msra.mxu0 %v504
    %1088 = vmatprep.subr.mxu0 %v509
    %1089 = vmatpush1.msra.mxu0 %v508
    %1090 = vmatprep.subr.mxu0 %v513
    %1091 = vmatpush1.msra.mxu0 %v512
    %1092 = vmatprep.subr.mxu0 %v517
    %1093 = vmatpush1.msra.mxu0 %v516
    %1094 = vmatprep.subr.mxu0 %v521
    %1095 = vmatpush1.msra.mxu0 %v520
    %1096 = vmatprep.subr.mxu0 %v525
    %1097 = vmatpush1.msra.mxu0 %v524
    %1098 = vmatprep.subr.mxu0 %v529
    %1099 = vmatpush1.msra.mxu0 %v528
    %1100 = vmatprep.subr.mxu0 0.0
    %1101 = vmatpush1.msra.mxu0 0.0
    %1102 = vmatprep.subr.mxu0 0.0
    %1103 = vmatpush1.msra.mxu0 0.0
    %1104 = vmatprep.subr.mxu0 0.0
    %1105 = vmatpush1.msra.mxu0 0.0
    %1106 = vmatprep.subr.mxu0 0.0
    %1107 = vmatpush1.msra.mxu0 0.0
    %1108 = vmatprep.subr.mxu0 0.0
    %1109 = vmatpush1.msra.mxu0 0.0
    %1110 = vmatprep.subr.mxu0 0.0
    %1111 = vmatpush1.msra.mxu0 0.0
    %1112 = vmatprep.subr.mxu0 0.0
    %1113 = vmatpush1.msra.mxu0 0.0
    %1114 = vmatprep.subr.mxu0 0.0
    %1115 = vmatpush1.msra.mxu0 0.0
    %1116 = vmatprep.subr.mxu0 0.0
    %1117 = vmatpush1.msra.mxu0 0.0
    %1118 = vmatprep.subr.mxu0 0.0
    %1119 = vmatpush1.msra.mxu0 0.0
    %1120 = vmatprep.subr.mxu0 0.0
    %1121 = vmatpush1.msra.mxu0 0.0
    %1122 = vmatprep.subr.mxu0 0.0
    %1123 = vmatpush1.msra.mxu0 0.0
    %1124 = vmatprep.subr.mxu0 0.0
    %1125 = vmatpush1.msra.mxu0 0.0
    %1126 = vmatprep.subr.mxu0 0.0
    %1127 = vmatpush1.msra.mxu0 0.0
    %1128 = vmatprep.subr.mxu0 0.0
    %1129 = vmatpush1.msra.mxu0 0.0
    %1130 = vmatprep.subr.mxu0 0.0
    %1131 = vmatpush1.msra.mxu0 0.0
    %1132 = vmatprep.mubr.f32.mxu0 0.0
    %1133 = vmatmul.mubr.f32.gmra.mrb[0].mxu0 %v1060
    %v1134 = vpop.f32.mrb[0].mxu0
    %v1135 = vadd.f32 0.0, %v1134
    %v1136 = vpop.f32.mrb[0].mxu0
    %v1137 = vadd.f32 0.0, %v1136
    %1138 = vdwg.mxu0
    %1139 = vmatprep.subr.mxu0 %v471
    %1140 = vmatpush1.msra.mxu0 %v470
    %1141 = vmatprep.subr.mxu0 %v475
    %1142 = vmatpush1.msra.mxu0 %v474
    %1143 = vmatprep.subr.mxu0 %v479
    %1144 = vmatpush1.msra.mxu0 %v478
    %1145 = vmatprep.subr.mxu0 %v483
    %1146 = vmatpush1.msra.mxu0 %v482
    %1147 = vmatprep.subr.mxu0 %v487
    %1148 = vmatpush1.msra.mxu0 %v486
    %1149 = vmatprep.subr.mxu0 %v491
    %1150 = vmatpush1.msra.mxu0 %v490
    %1151 = vmatprep.subr.mxu0 %v495
    %1152 = vmatpush1.msra.mxu0 %v494
    %1153 = vmatprep.subr.mxu0 %v499
    %1154 = vmatpush1.msra.mxu0 %v498
    %1155 = vmatprep.subr.mxu0 %v503
    %1156 = vmatpush1.msra.mxu0 %v502
    %1157 = vmatprep.subr.mxu0 %v507
    %1158 = vmatpush1.msra.mxu0 %v506
    %1159 = vmatprep.subr.mxu0 %v511
    %1160 = vmatpush1.msra.mxu0 %v510
    %1161 = vmatprep.subr.mxu0 %v515
    %1162 = vmatpush1.msra.mxu0 %v514
    %1163 = vmatprep.subr.mxu0 %v519
    %1164 = vmatpush1.msra.mxu0 %v518
    %1165 = vmatprep.subr.mxu0 %v523
    %1166 = vmatpush1.msra.mxu0 %v522
    %1167 = vmatprep.subr.mxu0 %v527
    %1168 = vmatpush1.msra.mxu0 %v526
    %1169 = vmatprep.subr.mxu0 %v531
    %1170 = vmatpush1.msra.mxu0 %v530
    %1171 = vmatprep.subr.mxu0 0.0
    %1172 = vmatpush1.msra.mxu0 0.0
    %1173 = vmatprep.subr.mxu0 0.0
    %1174 = vmatpush1.msra.mxu0 0.0
    %1175 = vmatprep.subr.mxu0 0.0
    %1176 = vmatpush1.msra.mxu0 0.0
    %1177 = vmatprep.subr.mxu0 0.0
    %1178 = vmatpush1.msra.mxu0 0.0
    %1179 = vmatprep.subr.mxu0 0.0
    %1180 = vmatpush1.msra.mxu0 0.0
    %1181 = vmatprep.subr.mxu0 0.0
    %1182 = vmatpush1.msra.mxu0 0.0
    %1183 = vmatprep.subr.mxu0 0.0
    %1184 = vmatpush1.msra.mxu0 0.0
    %1185 = vmatprep.subr.mxu0 0.0
    %1186 = vmatpush1.msra.mxu0 0.0
    %1187 = vmatprep.subr.mxu0 0.0
    %1188 = vmatpush1.msra.mxu0 0.0
    %1189 = vmatprep.subr.mxu0 0.0
    %1190 = vmatpush1.msra.mxu0 0.0
    %1191 = vmatprep.subr.mxu0 0.0
    %1192 = vmatpush1.msra.mxu0 0.0
    %1193 = vmatprep.subr.mxu0 0.0
    %1194 = vmatpush1.msra.mxu0 0.0
    %1195 = vmatprep.subr.mxu0 0.0
    %1196 = vmatpush1.msra.mxu0 0.0
    %1197 = vmatprep.subr.mxu0 0.0
    %1198 = vmatpush1.msra.mxu0 0.0
    %1199 = vmatprep.subr.mxu0 0.0
    %1200 = vmatpush1.msra.mxu0 0.0
    %1201 = vmatprep.subr.mxu0 0.0
    %1202 = vmatpush1.msra.mxu0 0.0
    %1203 = vmatprep.mubr.f32.mxu0 0.0
    %1204 = vmatmul.mubr.f32.gmra.mrb[0].mxu0 %v1060
    %v1205 = vpop.f32.mrb[0].mxu0
    %v1206 = vadd.f32 0.0, %v1205
    %v1207 = vpop.f32.mrb[0].mxu0
    %v1208 = vadd.f32 0.0, %v1207
    %1209 = vdwg.mxu0
    %v1210 = vadd.f32 %v1064, %v1135
    %v1211 = vadd.f32 %v1065, %v1137
    %v1212 = vadd.f32 %v1066, %v1206
    %v1213 = vadd.f32 %v1067, %v1208
    %v1214 = vxor.u32 %v1210, 2147483648
    %v1215 = vmul.f32 %v1214, 1.442695
    %v1216 = vpow.pop %v1215
    %v1217 = vadd.f32 %v1216, 1.0
    %v1218 = vrcp.pop %v1217
    %v1219 = vmul.f32 1.0, %v1218
    %v1220 = vxor.u32 %v1211, 2147483648
    %v1221 = vmul.f32 %v1220, 1.442695
    %v1222 = vpow.pop %v1221
    %v1223 = vadd.f32 %v1222, 1.0
    %v1224 = vrcp.pop %v1223
    %v1225 = vmul.f32 1.0, %v1224
    %v1226 = vtanh.pop %v1212
    %v1227 = vxor.u32 %v1213, 2147483648
    %v1228 = vmul.f32 %v1227, 1.442695
    %v1229 = vpow.pop %v1228
    %v1230 = vadd.f32 %v1229, 1.0
    %v1231 = vrcp.pop %v1230
    %v1232 = vmul.f32 1.0, %v1231
    %v1233 = vmul.f32 %v1225, %v1058
    %v1234 = vmul.f32 %v1219, %v1226
    %v1235 = vadd.f32 %v1233, %v1234
    %v1236 = vtanh.pop %v1235
    %v1237 = vmul.f32 %v1232, %v1236
    %s1238 = scalar_lea.vmem [#allocation3], 24
    %1239 = vst [vmem:[%s1238] sm:$0xff] %v1237
    %s1240 = scalar_lea.vmem [#allocation2], 128
    %v1241 = vld [vmem:[%s1240] sm:$0xff]
    %v1242 = vld [vmem:[%s1240 + $0x8] sm:$0xff]
    %v1243 = vld [vmem:[%s1240 + $0x10] sm:$0xff]
    %v1244 = vld [vmem:[%s1240 + $0x18] sm:$0xff]
    %1245 = vmatprep.subr.mxu0 %v469
    %1246 = vmatpush1.msra.mxu0 %v468
    %1247 = vmatprep.subr.mxu0 %v473
    %1248 = vmatpush1.msra.mxu0 %v472
    %1249 = vmatprep.subr.mxu0 %v477
    %1250 = vmatpush1.msra.mxu0 %v476
    %1251 = vmatprep.subr.mxu0 %v481
    %1252 = vmatpush1.msra.mxu0 %v480
    %1253 = vmatprep.subr.mxu0 %v485
    %1254 = vmatpush1.msra.mxu0 %v484
    %1255 = vmatprep.subr.mxu0 %v489
    %1256 = vmatpush1.msra.mxu0 %v488
    %1257 = vmatprep.subr.mxu0 %v493
    %1258 = vmatpush1.msra.mxu0 %v492
    %1259 = vmatprep.subr.mxu0 %v497
    %1260 = vmatpush1.msra.mxu0 %v496
    %1261 = vmatprep.subr.mxu0 %v501
    %1262 = vmatpush1.msra.mxu0 %v500
    %1263 = vmatprep.subr.mxu0 %v505
    %1264 = vmatpush1.msra.mxu0 %v504
    %1265 = vmatprep.subr.mxu0 %v509
    %1266 = vmatpush1.msra.mxu0 %v508
    %1267 = vmatprep.subr.mxu0 %v513
    %1268 = vmatpush1.msra.mxu0 %v512
    %1269 = vmatprep.subr.mxu0 %v517
    %1270 = vmatpush1.msra.mxu0 %v516
    %1271 = vmatprep.subr.mxu0 %v521
    %1272 = vmatpush1.msra.mxu0 %v520
    %1273 = vmatprep.subr.mxu0 %v525
    %1274 = vmatpush1.msra.mxu0 %v524
    %1275 = vmatprep.subr.mxu0 %v529
    %1276 = vmatpush1.msra.mxu0 %v528
    %1277 = vmatprep.subr.mxu0 0.0
    %1278 = vmatpush1.msra.mxu0 0.0
    %1279 = vmatprep.subr.mxu0 0.0
    %1280 = vmatpush1.msra.mxu0 0.0
    %1281 = vmatprep.subr.mxu0 0.0
    %1282 = vmatpush1.msra.mxu0 0.0
    %1283 = vmatprep.subr.mxu0 0.0
    %1284 = vmatpush1.msra.mxu0 0.0
    %1285 = vmatprep.subr.mxu0 0.0
    %1286 = vmatpush1.msra.mxu0 0.0
    %1287 = vmatprep.subr.mxu0 0.0
    %1288 = vmatpush1.msra.mxu0 0.0
    %1289 = vmatprep.subr.mxu0 0.0
    %1290 = vmatpush1.msra.mxu0 0.0
    %1291 = vmatprep.subr.mxu0 0.0
    %1292 = vmatpush1.msra.mxu0 0.0
    %1293 = vmatprep.subr.mxu0 0.0
    %1294 = vmatpush1.msra.mxu0 0.0
    %1295 = vmatprep.subr.mxu0 0.0
    %1296 = vmatpush1.msra.mxu0 0.0
    %1297 = vmatprep.subr.mxu0 0.0
    %1298 = vmatpush1.msra.mxu0 0.0
    %1299 = vmatprep.subr.mxu0 0.0
    %1300 = vmatpush1.msra.mxu0 0.0
    %1301 = vmatprep.subr.mxu0 0.0
    %1302 = vmatpush1.msra.mxu0 0.0
    %1303 = vmatprep.subr.mxu0 0.0
    %1304 = vmatpush1.msra.mxu0 0.0
    %1305 = vmatprep.subr.mxu0 0.0
    %1306 = vmatpush1.msra.mxu0 0.0
    %1307 = vmatprep.subr.mxu0 0.0
    %1308 = vmatpush1.msra.mxu0 0.0
    %1309 = vmatprep.mubr.f32.mxu0 0.0
    %1310 = vmatmul.mubr.f32.gmra.mrb[0].mxu0 %v1237
    %v1311 = vpop.f32.mrb[0].mxu0
    %v1312 = vadd.f32 0.0, %v1311
    %v1313 = vpop.f32.mrb[0].mxu0
    %v1314 = vadd.f32 0.0, %v1313
    %1315 = vdwg.mxu0
    %1316 = vmatprep.subr.mxu0 %v471
    %1317 = vmatpush1.msra.mxu0 %v470
    %1318 = vmatprep.subr.mxu0 %v475
    %1319 = vmatpush1.msra.mxu0 %v474
    %1320 = vmatprep.subr.mxu0 %v479
    %1321 = vmatpush1.msra.mxu0 %v478
    %1322 = vmatprep.subr.mxu0 %v483
    %1323 = vmatpush1.msra.mxu0 %v482
    %1324 = vmatprep.subr.mxu0 %v487
    %1325 = vmatpush1.msra.mxu0 %v486
    %1326 = vmatprep.subr.mxu0 %v491
    %1327 = vmatpush1.msra.mxu0 %v490
    %1328 = vmatprep.subr.mxu0 %v495
    %1329 = vmatpush1.msra.mxu0 %v494
    %1330 = vmatprep.subr.mxu0 %v499
    %1331 = vmatpush1.msra.mxu0 %v498
    %1332 = vmatprep.subr.mxu0 %v503
    %1333 = vmatpush1.msra.mxu0 %v502
    %1334 = vmatprep.subr.mxu0 %v507
    %1335 = vmatpush1.msra.mxu0 %v506
    %1336 = vmatprep.subr.mxu0 %v511
    %1337 = vmatpush1.msra.mxu0 %v510
    %1338 = vmatprep.subr.mxu0 %v515
    %1339 = vmatpush1.msra.mxu0 %v514
    %1340 = vmatprep.subr.mxu0 %v519
    %1341 = vmatpush1.msra.mxu0 %v518
    %1342 = vmatprep.subr.mxu0 %v523
    %1343 = vmatpush1.msra.mxu0 %v522
    %1344 = vmatprep.subr.mxu0 %v527
    %1345 = vmatpush1.msra.mxu0 %v526
    %1346 = vmatprep.subr.mxu0 %v531
    %1347 = vmatpush1.msra.mxu0 %v530
    %1348 = vmatprep.subr.mxu0 0.0
    %1349 = vmatpush1.msra.mxu0 0.0
    %1350 = vmatprep.subr.mxu0 0.0
    %1351 = vmatpush1.msra.mxu0 0.0
    %1352 = vmatprep.subr.mxu0 0.0
    %1353 = vmatpush1.msra.mxu0 0.0
    %1354 = vmatprep.subr.mxu0 0.0
    %1355 = vmatpush1.msra.mxu0 0.0
    %1356 = vmatprep.subr.mxu0 0.0
    %1357 = vmatpush1.msra.mxu0 0.0
    %1358 = vmatprep.subr.mxu0 0.0
    %1359 = vmatpush1.msra.mxu0 0.0
    %1360 = vmatprep.subr.mxu0 0.0
    %1361 = vmatpush1.msra.mxu0 0.0
    %1362 = vmatprep.subr.mxu0 0.0
    %1363 = vmatpush1.msra.mxu0 0.0
    %1364 = vmatprep.subr.mxu0 0.0
    %1365 = vmatpush1.msra.mxu0 0.0
    %1366 = vmatprep.subr.mxu0 0.0
    %1367 = vmatpush1.msra.mxu0 0.0
    %1368 = vmatprep.subr.mxu0 0.0
    %1369 = vmatpush1.msra.mxu0 0.0
    %1370 = vmatprep.subr.mxu0 0.0
    %1371 = vmatpush1.msra.mxu0 0.0
    %1372 = vmatprep.subr.mxu0 0.0
    %1373 = vmatpush1.msra.mxu0 0.0
    %1374 = vmatprep.subr.mxu0 0.0
    %1375 = vmatpush1.msra.mxu0 0.0
    %1376 = vmatprep.subr.mxu0 0.0
    %1377 = vmatpush1.msra.mxu0 0.0
    %1378 = vmatprep.subr.mxu0 0.0
    %1379 = vmatpush1.msra.mxu0 0.0
    %1380 = vmatprep.mubr.f32.mxu0 0.0
    %1381 = vmatmul.mubr.f32.gmra.mrb[0].mxu0 %v1237
    %v1382 = vpop.f32.mrb[0].mxu0
    %v1383 = vadd.f32 0.0, %v1382
    %v1384 = vpop.f32.mrb[0].mxu0
    %v1385 = vadd.f32 0.0, %v1384
    %1386 = vdwg.mxu0
    %v1387 = vadd.f32 %v1241, %v1312
    %v1388 = vadd.f32 %v1242, %v1314
    %v1389 = vadd.f32 %v1243, %v1383
    %v1390 = vadd.f32 %v1244, %v1385
    %v1391 = vxor.u32 %v1387, 2147483648
    %v1392 = vmul.f32 %v1391, 1.442695
    %v1393 = vpow.pop %v1392
    %v1394 = vadd.f32 %v1393, 1.0
    %v1395 = vrcp.pop %v1394
    %v1396 = vmul.f32 1.0, %v1395
    %v1397 = vxor.u32 %v1388, 2147483648
    %v1398 = vmul.f32 %v1397, 1.442695
    %v1399 = vpow.pop %v1398
    %v1400 = vadd.f32 %v1399, 1.0
    %v1401 = vrcp.pop %v1400
    %v1402 = vmul.f32 1.0, %v1401
    %v1403 = vtanh.pop %v1389
    %v1404 = vxor.u32 %v1390, 2147483648
    %v1405 = vmul.f32 %v1404, 1.442695
    %v1406 = vpow.pop %v1405
    %v1407 = vadd.f32 %v1406, 1.0
    %v1408 = vrcp.pop %v1407
    %v1409 = vmul.f32 1.0, %v1408
    %v1410 = vmul.f32 %v1402, %v1235
    %v1411 = vmul.f32 %v1396, %v1403
    %v1412 = vadd.f32 %v1410, %v1411
    %v1413 = vtanh.pop %v1412
    %v1414 = vmul.f32 %v1409, %v1413
    %s1415 = scalar_lea.vmem [#allocation3], 32
    %1416 = vst [vmem:[%s1415] sm:$0xff] %v1414
    %s1417 = scalar_lea.vmem [#allocation2], 160
    %v1418 = vld [vmem:[%s1417] sm:$0xff]
    %v1419 = vld [vmem:[%s1417 + $0x8] sm:$0xff]
    %v1420 = vld [vmem:[%s1417 + $0x10] sm:$0xff]
    %v1421 = vld [vmem:[%s1417 + $0x18] sm:$0xff]
    %1422 = vmatprep.subr.mxu0 %v469
    %1423 = vmatpush1.msra.mxu0 %v468
    %1424 = vmatprep.subr.mxu0 %v473
    %1425 = vmatpush1.msra.mxu0 %v472
    %1426 = vmatprep.subr.mxu0 %v477
    %1427 = vmatpush1.msra.mxu0 %v476
    %1428 = vmatprep.subr.mxu0 %v481
    %1429 = vmatpush1.msra.mxu0 %v480
    %1430 = vmatprep.subr.mxu0 %v485
    %1431 = vmatpush1.msra.mxu0 %v484
    %1432 = vmatprep.subr.mxu0 %v489
    %1433 = vmatpush1.msra.mxu0 %v488
    %1434 = vmatprep.subr.mxu0 %v493
    %1435 = vmatpush1.msra.mxu0 %v492
    %1436 = vmatprep.subr.mxu0 %v497
    %1437 = vmatpush1.msra.mxu0 %v496
    %1438 = vmatprep.subr.mxu0 %v501
    %1439 = vmatpush1.msra.mxu0 %v500
    %1440 = vmatprep.subr.mxu0 %v505
    %1441 = vmatpush1.msra.mxu0 %v504
    %1442 = vmatprep.subr.mxu0 %v509
    %1443 = vmatpush1.msra.mxu0 %v508
    %1444 = vmatprep.subr.mxu0 %v513
    %1445 = vmatpush1.msra.mxu0 %v512
    %1446 = vmatprep.subr.mxu0 %v517
    %1447 = vmatpush1.msra.mxu0 %v516
    %1448 = vmatprep.subr.mxu0 %v521
    %1449 = vmatpush1.msra.mxu0 %v520
    %1450 = vmatprep.subr.mxu0 %v525
    %1451 = vmatpush1.msra.mxu0 %v524
    %1452 = vmatprep.subr.mxu0 %v529
    %1453 = vmatpush1.msra.mxu0 %v528
    %1454 = vmatprep.subr.mxu0 0.0
    %1455 = vmatpush1.msra.mxu0 0.0
    %1456 = vmatprep.subr.mxu0 0.0
    %1457 = vmatpush1.msra.mxu0 0.0
    %1458 = vmatprep.subr.mxu0 0.0
    %1459 = vmatpush1.msra.mxu0 0.0
    %1460 = vmatprep.subr.mxu0 0.0
    %1461 = vmatpush1.msra.mxu0 0.0
    %1462 = vmatprep.subr.mxu0 0.0
    %1463 = vmatpush1.msra.mxu0 0.0
    %1464 = vmatprep.subr.mxu0 0.0
    %1465 = vmatpush1.msra.mxu0 0.0
    %1466 = vmatprep.subr.mxu0 0.0
    %1467 = vmatpush1.msra.mxu0 0.0
    %1468 = vmatprep.subr.mxu0 0.0
    %1469 = vmatpush1.msra.mxu0 0.0
    %1470 = vmatprep.subr.mxu0 0.0
    %1471 = vmatpush1.msra.mxu0 0.0
    %1472 = vmatprep.subr.mxu0 0.0
    %1473 = vmatpush1.msra.mxu0 0.0
    %1474 = vmatprep.subr.mxu0 0.0
    %1475 = vmatpush1.msra.mxu0 0.0
    %1476 = vmatprep.subr.mxu0 0.0
    %1477 = vmatpush1.msra.mxu0 0.0
    %1478 = vmatprep.subr.mxu0 0.0
    %1479 = vmatpush1.msra.mxu0 0.0
    %1480 = vmatprep.subr.mxu0 0.0
    %1481 = vmatpush1.msra.mxu0 0.0
    %1482 = vmatprep.subr.mxu0 0.0
    %1483 = vmatpush1.msra.mxu0 0.0
    %1484 = vmatprep.subr.mxu0 0.0
    %1485 = vmatpush1.msra.mxu0 0.0
    %1486 = vmatprep.mubr.f32.mxu0 0.0
    %1487 = vmatmul.mubr.f32.gmra.mrb[0].mxu0 %v1414
    %v1488 = vpop.f32.mrb[0].mxu0
    %v1489 = vadd.f32 0.0, %v1488
    %v1490 = vpop.f32.mrb[0].mxu0
    %v1491 = vadd.f32 0.0, %v1490
    %1492 = vdwg.mxu0
    %1493 = vmatprep.subr.mxu0 %v471
    %1494 = vmatpush1.msra.mxu0 %v470
    %1495 = vmatprep.subr.mxu0 %v475
    %1496 = vmatpush1.msra.mxu0 %v474
    %1497 = vmatprep.subr.mxu0 %v479
    %1498 = vmatpush1.msra.mxu0 %v478
    %1499 = vmatprep.subr.mxu0 %v483
    %1500 = vmatpush1.msra.mxu0 %v482
    %1501 = vmatprep.subr.mxu0 %v487
    %1502 = vmatpush1.msra.mxu0 %v486
    %1503 = vmatprep.subr.mxu0 %v491
    %1504 = vmatpush1.msra.mxu0 %v490
    %1505 = vmatprep.subr.mxu0 %v495
    %1506 = vmatpush1.msra.mxu0 %v494
    %1507 = vmatprep.subr.mxu0 %v499
    %1508 = vmatpush1.msra.mxu0 %v498
    %1509 = vmatprep.subr.mxu0 %v503
    %1510 = vmatpush1.msra.mxu0 %v502
    %1511 = vmatprep.subr.mxu0 %v507
    %1512 = vmatpush1.msra.mxu0 %v506
    %1513 = vmatprep.subr.mxu0 %v511
    %1514 = vmatpush1.msra.mxu0 %v510
    %1515 = vmatprep.subr.mxu0 %v515
    %1516 = vmatpush1.msra.mxu0 %v514
    %1517 = vmatprep.subr.mxu0 %v519
    %1518 = vmatpush1.msra.mxu0 %v518
    %1519 = vmatprep.subr.mxu0 %v523
    %1520 = vmatpush1.msra.mxu0 %v522
    %1521 = vmatprep.subr.mxu0 %v527
    %1522 = vmatpush1.msra.mxu0 %v526
    %1523 = vmatprep.subr.mxu0 %v531
    %1524 = vmatpush1.msra.mxu0 %v530
    %1525 = vmatprep.subr.mxu0 0.0
    %1526 = vmatpush1.msra.mxu0 0.0
    %1527 = vmatprep.subr.mxu0 0.0
    %1528 = vmatpush1.msra.mxu0 0.0
    %1529 = vmatprep.subr.mxu0 0.0
    %1530 = vmatpush1.msra.mxu0 0.0
    %1531 = vmatprep.subr.mxu0 0.0
    %1532 = vmatpush1.msra.mxu0 0.0
    %1533 = vmatprep.subr.mxu0 0.0
    %1534 = vmatpush1.msra.mxu0 0.0
    %1535 = vmatprep.subr.mxu0 0.0
    %1536 = vmatpush1.msra.mxu0 0.0
    %1537 = vmatprep.subr.mxu0 0.0
    %1538 = vmatpush1.msra.mxu0 0.0
    %1539 = vmatprep.subr.mxu0 0.0
    %1540 = vmatpush1.msra.mxu0 0.0
    %1541 = vmatprep.subr.mxu0 0.0
    %1542 = vmatpush1.msra.mxu0 0.0
    %1543 = vmatprep.subr.mxu0 0.0
    %1544 = vmatpush1.msra.mxu0 0.0
    %1545 = vmatprep.subr.mxu0 0.0
    %1546 = vmatpush1.msra.mxu0 0.0
    %1547 = vmatprep.subr.mxu0 0.0
    %1548 = vmatpush1.msra.mxu0 0.0
    %1549 = vmatprep.subr.mxu0 0.0
    %1550 = vmatpush1.msra.mxu0 0.0
    %1551 = vmatprep.subr.mxu0 0.0
    %1552 = vmatpush1.msra.mxu0 0.0
    %1553 = vmatprep.subr.mxu0 0.0
    %1554 = vmatpush1.msra.mxu0 0.0
    %1555 = vmatprep.subr.mxu0 0.0
    %1556 = vmatpush1.msra.mxu0 0.0
    %1557 = vmatprep.mubr.f32.mxu0 0.0
    %1558 = vmatmul.mubr.f32.gmra.mrb[0].mxu0 %v1414
    %v1559 = vpop.f32.mrb[0].mxu0
    %v1560 = vadd.f32 0.0, %v1559
    %v1561 = vpop.f32.mrb[0].mxu0
    %v1562 = vadd.f32 0.0, %v1561
    %1563 = vdwg.mxu0
    %v1564 = vadd.f32 %v1418, %v1489
    %v1565 = vadd.f32 %v1419, %v1491
    %v1566 = vadd.f32 %v1420, %v1560
    %v1567 = vadd.f32 %v1421, %v1562
    %v1568 = vxor.u32 %v1564, 2147483648
    %v1569 = vmul.f32 %v1568, 1.442695
    %v1570 = vpow.pop %v1569
    %v1571 = vadd.f32 %v1570, 1.0
    %v1572 = vrcp.pop %v1571
    %v1573 = vmul.f32 1.0, %v1572
    %v1574 = vxor.u32 %v1565, 2147483648
    %v1575 = vmul.f32 %v1574, 1.442695
    %v1576 = vpow.pop %v1575
    %v1577 = vadd.f32 %v1576, 1.0
    %v1578 = vrcp.pop %v1577
    %v1579 = vmul.f32 1.0, %v1578
    %v1580 = vtanh.pop %v1566
    %v1581 = vxor.u32 %v1567, 2147483648
    %v1582 = vmul.f32 %v1581, 1.442695
    %v1583 = vpow.pop %v1582
    %v1584 = vadd.f32 %v1583, 1.0
    %v1585 = vrcp.pop %v1584
    %v1586 = vmul.f32 1.0, %v1585
    %v1587 = vmul.f32 %v1579, %v1412
    %v1588 = vmul.f32 %v1573, %v1580
    %v1589 = vadd.f32 %v1587, %v1588
    %v1590 = vtanh.pop %v1589
    %v1591 = vmul.f32 %v1586, %v1590
    %s1592 = scalar_lea.vmem [#allocation3], 40
    %1593 = vst [vmem:[%s1592] sm:$0xff] %v1591
    %s1594 = scalar_lea.vmem [#allocation2], 192
    %v1595 = vld [vmem:[%s1594] sm:$0xff]
    %v1596 = vld [vmem:[%s1594 + $0x8] sm:$0xff]
    %v1597 = vld [vmem:[%s1594 + $0x10] sm:$0xff]
    %v1598 = vld [vmem:[%s1594 + $0x18] sm:$0xff]
    %1599 = vmatprep.subr.mxu0 %v469
    %1600 = vmatpush1.msra.mxu0 %v468
    %1601 = vmatprep.subr.mxu0 %v473
    %1602 = vmatpush1.msra.mxu0 %v472
    %1603 = vmatprep.subr.mxu0 %v477
    %1604 = vmatpush1.msra.mxu0 %v476
    %1605 = vmatprep.subr.mxu0 %v481
    %1606 = vmatpush1.msra.mxu0 %v480
    %1607 = vmatprep.subr.mxu0 %v485
    %1608 = vmatpush1.msra.mxu0 %v484
    %1609 = vmatprep.subr.mxu0 %v489
    %1610 = vmatpush1.msra.mxu0 %v488
    %1611 = vmatprep.subr.mxu0 %v493
    %1612 = vmatpush1.msra.mxu0 %v492
    %1613 = vmatprep.subr.mxu0 %v497
    %1614 = vmatpush1.msra.mxu0 %v496
    %1615 = vmatprep.subr.mxu0 %v501
    %1616 = vmatpush1.msra.mxu0 %v500
    %1617 = vmatprep.subr.mxu0 %v505
    %1618 = vmatpush1.msra.mxu0 %v504
    %1619 = vmatprep.subr.mxu0 %v509
    %1620 = vmatpush1.msra.mxu0 %v508
    %1621 = vmatprep.subr.mxu0 %v513
    %1622 = vmatpush1.msra.mxu0 %v512
    %1623 = vmatprep.subr.mxu0 %v517
    %1624 = vmatpush1.msra.mxu0 %v516
    %1625 = vmatprep.subr.mxu0 %v521
    %1626 = vmatpush1.msra.mxu0 %v520
    %1627 = vmatprep.subr.mxu0 %v525
    %1628 = vmatpush1.msra.mxu0 %v524
    %1629 = vmatprep.subr.mxu0 %v529
    %1630 = vmatpush1.msra.mxu0 %v528
    %1631 = vmatprep.subr.mxu0 0.0
    %1632 = vmatpush1.msra.mxu0 0.0
    %1633 = vmatprep.subr.mxu0 0.0
    %1634 = vmatpush1.msra.mxu0 0.0
    %1635 = vmatprep.subr.mxu0 0.0
    %1636 = vmatpush1.msra.mxu0 0.0
    %1637 = vmatprep.subr.mxu0 0.0
    %1638 = vmatpush1.msra.mxu0 0.0
    %1639 = vmatprep.subr.mxu0 0.0
    %1640 = vmatpush1.msra.mxu0 0.0
    %1641 = vmatprep.subr.mxu0 0.0
    %1642 = vmatpush1.msra.mxu0 0.0
    %1643 = vmatprep.subr.mxu0 0.0
    %1644 = vmatpush1.msra.mxu0 0.0
    %1645 = vmatprep.subr.mxu0 0.0
    %1646 = vmatpush1.msra.mxu0 0.0
    %1647 = vmatprep.subr.mxu0 0.0
    %1648 = vmatpush1.msra.mxu0 0.0
    %1649 = vmatprep.subr.mxu0 0.0
    %1650 = vmatpush1.msra.mxu0 0.0
    %1651 = vmatprep.subr.mxu0 0.0
    %1652 = vmatpush1.msra.mxu0 0.0
    %1653 = vmatprep.subr.mxu0 0.0
    %1654 = vmatpush1.msra.mxu0 0.0
    %1655 = vmatprep.subr.mxu0 0.0
    %1656 = vmatpush1.msra.mxu0 0.0
    %1657 = vmatprep.subr.mxu0 0.0
    %1658 = vmatpush1.msra.mxu0 0.0
    %1659 = vmatprep.subr.mxu0 0.0
    %1660 = vmatpush1.msra.mxu0 0.0
    %1661 = vmatprep.subr.mxu0 0.0
    %1662 = vmatpush1.msra.mxu0 0.0
    %1663 = vmatprep.mubr.f32.mxu0 0.0
    %1664 = vmatmul.mubr.f32.gmra.mrb[0].mxu0 %v1591
    %v1665 = vpop.f32.mrb[0].mxu0
    %v1666 = vadd.f32 0.0, %v1665
    %v1667 = vpop.f32.mrb[0].mxu0
    %v1668 = vadd.f32 0.0, %v1667
    %1669 = vdwg.mxu0
    %1670 = vmatprep.subr.mxu0 %v471
    %1671 = vmatpush1.msra.mxu0 %v470
    %1672 = vmatprep.subr.mxu0 %v475
    %1673 = vmatpush1.msra.mxu0 %v474
    %1674 = vmatprep.subr.mxu0 %v479
    %1675 = vmatpush1.msra.mxu0 %v478
    %1676 = vmatprep.subr.mxu0 %v483
    %1677 = vmatpush1.msra.mxu0 %v482
    %1678 = vmatprep.subr.mxu0 %v487
    %1679 = vmatpush1.msra.mxu0 %v486
    %1680 = vmatprep.subr.mxu0 %v491
    %1681 = vmatpush1.msra.mxu0 %v490
    %1682 = vmatprep.subr.mxu0 %v495
    %1683 = vmatpush1.msra.mxu0 %v494
    %1684 = vmatprep.subr.mxu0 %v499
    %1685 = vmatpush1.msra.mxu0 %v498
    %1686 = vmatprep.subr.mxu0 %v503
    %1687 = vmatpush1.msra.mxu0 %v502
    %1688 = vmatprep.subr.mxu0 %v507
    %1689 = vmatpush1.msra.mxu0 %v506
    %1690 = vmatprep.subr.mxu0 %v511
    %1691 = vmatpush1.msra.mxu0 %v510
    %1692 = vmatprep.subr.mxu0 %v515
    %1693 = vmatpush1.msra.mxu0 %v514
    %1694 = vmatprep.subr.mxu0 %v519
    %1695 = vmatpush1.msra.mxu0 %v518
    %1696 = vmatprep.subr.mxu0 %v523
    %1697 = vmatpush1.msra.mxu0 %v522
    %1698 = vmatprep.subr.mxu0 %v527
    %1699 = vmatpush1.msra.mxu0 %v526
    %1700 = vmatprep.subr.mxu0 %v531
    %1701 = vmatpush1.msra.mxu0 %v530
    %1702 = vmatprep.subr.mxu0 0.0
    %1703 = vmatpush1.msra.mxu0 0.0
    %1704 = vmatprep.subr.mxu0 0.0
    %1705 = vmatpush1.msra.mxu0 0.0
    %1706 = vmatprep.subr.mxu0 0.0
    %1707 = vmatpush1.msra.mxu0 0.0
    %1708 = vmatprep.subr.mxu0 0.0
    %1709 = vmatpush1.msra.mxu0 0.0
    %1710 = vmatprep.subr.mxu0 0.0
    %1711 = vmatpush1.msra.mxu0 0.0
    %1712 = vmatprep.subr.mxu0 0.0
    %1713 = vmatpush1.msra.mxu0 0.0
    %1714 = vmatprep.subr.mxu0 0.0
    %1715 = vmatpush1.msra.mxu0 0.0
    %1716 = vmatprep.subr.mxu0 0.0
    %1717 = vmatpush1.msra.mxu0 0.0
    %1718 = vmatprep.subr.mxu0 0.0
    %1719 = vmatpush1.msra.mxu0 0.0
    %1720 = vmatprep.subr.mxu0 0.0
    %1721 = vmatpush1.msra.mxu0 0.0
    %1722 = vmatprep.subr.mxu0 0.0
    %1723 = vmatpush1.msra.mxu0 0.0
    %1724 = vmatprep.subr.mxu0 0.0
    %1725 = vmatpush1.msra.mxu0 0.0
    %1726 = vmatprep.subr.mxu0 0.0
    %1727 = vmatpush1.msra.mxu0 0.0
    %1728 = vmatprep.subr.mxu0 0.0
    %1729 = vmatpush1.msra.mxu0 0.0
    %1730 = vmatprep.subr.mxu0 0.0
    %1731 = vmatpush1.msra.mxu0 0.0
    %1732 = vmatprep.subr.mxu0 0.0
    %1733 = vmatpush1.msra.mxu0 0.0
    %1734 = vmatprep.mubr.f32.mxu0 0.0
    %1735 = vmatmul.mubr.f32.gmra.mrb[0].mxu0 %v1591
    %v1736 = vpop.f32.mrb[0].mxu0
    %v1737 = vadd.f32 0.0, %v1736
    %v1738 = vpop.f32.mrb[0].mxu0
    %v1739 = vadd.f32 0.0, %v1738
    %1740 = vdwg.mxu0
    %v1741 = vadd.f32 %v1595, %v1666
    %v1742 = vadd.f32 %v1596, %v1668
    %v1743 = vadd.f32 %v1597, %v1737
    %v1744 = vadd.f32 %v1598, %v1739
    %v1745 = vxor.u32 %v1741, 2147483648
    %v1746 = vmul.f32 %v1745, 1.442695
    %v1747 = vpow.pop %v1746
    %v1748 = vadd.f32 %v1747, 1.0
    %v1749 = vrcp.pop %v1748
    %v1750 = vmul.f32 1.0, %v1749
    %v1751 = vxor.u32 %v1742, 2147483648
    %v1752 = vmul.f32 %v1751, 1.442695
    %v1753 = vpow.pop %v1752
    %v1754 = vadd.f32 %v1753, 1.0
    %v1755 = vrcp.pop %v1754
    %v1756 = vmul.f32 1.0, %v1755
    %v1757 = vtanh.pop %v1743
    %v1758 = vxor.u32 %v1744, 2147483648
    %v1759 = vmul.f32 %v1758, 1.442695
    %v1760 = vpow.pop %v1759
    %v1761 = vadd.f32 %v1760, 1.0
    %v1762 = vrcp.pop %v1761
    %v1763 = vmul.f32 1.0, %v1762
    %v1764 = vmul.f32 %v1756, %v1589
    %v1765 = vmul.f32 %v1750, %v1757
    %v1766 = vadd.f32 %v1764, %v1765
    %v1767 = vtanh.pop %v1766
    %v1768 = vmul.f32 %v1763, %v1767
    %s1769 = scalar_lea.vmem [#allocation3], 48
    %1770 = vst [vmem:[%s1769] sm:$0xff] %v1768
    %s1771 = scalar_lea.vmem [#allocation2], 224
    %v1772 = vld [vmem:[%s1771] sm:$0xff]
    %v1773 = vld [vmem:[%s1771 + $0x8] sm:$0xff]
    %v1774 = vld [vmem:[%s1771 + $0x10] sm:$0xff]
    %v1775 = vld [vmem:[%s1771 + $0x18] sm:$0xff]
    %1776 = vmatprep.subr.mxu0 %v469
    %1777 = vmatpush1.msra.mxu0 %v468
    %1778 = vmatprep.subr.mxu0 %v473
    %1779 = vmatpush1.msra.mxu0 %v472
    %1780 = vmatprep.subr.mxu0 %v477
    %1781 = vmatpush1.msra.mxu0 %v476
    %1782 = vmatprep.subr.mxu0 %v481
    %1783 = vmatpush1.msra.mxu0 %v480
    %1784 = vmatprep.subr.mxu0 %v485
    %1785 = vmatpush1.msra.mxu0 %v484
    %1786 = vmatprep.subr.mxu0 %v489
    %1787 = vmatpush1.msra.mxu0 %v488
    %1788 = vmatprep.subr.mxu0 %v493
    %1789 = vmatpush1.msra.mxu0 %v492
    %1790 = vmatprep.subr.mxu0 %v497
    %1791 = vmatpush1.msra.mxu0 %v496
    %1792 = vmatprep.subr.mxu0 %v501
    %1793 = vmatpush1.msra.mxu0 %v500
    %1794 = vmatprep.subr.mxu0 %v505
    %1795 = vmatpush1.msra.mxu0 %v504
    %1796 = vmatprep.subr.mxu0 %v509
    %1797 = vmatpush1.msra.mxu0 %v508
    %1798 = vmatprep.subr.mxu0 %v513
    %1799 = vmatpush1.msra.mxu0 %v512
    %1800 = vmatprep.subr.mxu0 %v517
    %1801 = vmatpush1.msra.mxu0 %v516
    %1802 = vmatprep.subr.mxu0 %v521
    %1803 = vmatpush1.msra.mxu0 %v520
    %1804 = vmatprep.subr.mxu0 %v525
    %1805 = vmatpush1.msra.mxu0 %v524
    %1806 = vmatprep.subr.mxu0 %v529
    %1807 = vmatpush1.msra.mxu0 %v528
    %1808 = vmatprep.subr.mxu0 0.0
    %1809 = vmatpush1.msra.mxu0 0.0
    %1810 = vmatprep.subr.mxu0 0.0
    %1811 = vmatpush1.msra.mxu0 0.0
    %1812 = vmatprep.subr.mxu0 0.0
    %1813 = vmatpush1.msra.mxu0 0.0
    %1814 = vmatprep.subr.mxu0 0.0
    %1815 = vmatpush1.msra.mxu0 0.0
    %1816 = vmatprep.subr.mxu0 0.0
    %1817 = vmatpush1.msra.mxu0 0.0
    %1818 = vmatprep.subr.mxu0 0.0
    %1819 = vmatpush1.msra.mxu0 0.0
    %1820 = vmatprep.subr.mxu0 0.0
    %1821 = vmatpush1.msra.mxu0 0.0
    %1822 = vmatprep.subr.mxu0 0.0
    %1823 = vmatpush1.msra.mxu0 0.0
    %1824 = vmatprep.subr.mxu0 0.0
    %1825 = vmatpush1.msra.mxu0 0.0
    %1826 = vmatprep.subr.mxu0 0.0
    %1827 = vmatpush1.msra.mxu0 0.0
    %1828 = vmatprep.subr.mxu0 0.0
    %1829 = vmatpush1.msra.mxu0 0.0
    %1830 = vmatprep.subr.mxu0 0.0
    %1831 = vmatpush1.msra.mxu0 0.0
    %1832 = vmatprep.subr.mxu0 0.0
    %1833 = vmatpush1.msra.mxu0 0.0
    %1834 = vmatprep.subr.mxu0 0.0
    %1835 = vmatpush1.msra.mxu0 0.0
    %1836 = vmatprep.subr.mxu0 0.0
    %1837 = vmatpush1.msra.mxu0 0.0
    %1838 = vmatprep.subr.mxu0 0.0
    %1839 = vmatpush1.msra.mxu0 0.0
    %1840 = vmatprep.mubr.f32.mxu0 0.0
    %1841 = vmatmul.mubr.f32.gmra.mrb[0].mxu0 %v1768
    %v1842 = vpop.f32.mrb[0].mxu0
    %v1843 = vadd.f32 0.0, %v1842
    %v1844 = vpop.f32.mrb[0].mxu0
    %v1845 = vadd.f32 0.0, %v1844
    %1846 = vdwg.mxu0
    %1847 = vmatprep.subr.mxu0 %v471
    %1848 = vmatpush1.msra.mxu0 %v470
    %1849 = vmatprep.subr.mxu0 %v475
    %1850 = vmatpush1.msra.mxu0 %v474
    %1851 = vmatprep.subr.mxu0 %v479
    %1852 = vmatpush1.msra.mxu0 %v478
    %1853 = vmatprep.subr.mxu0 %v483
    %1854 = vmatpush1.msra.mxu0 %v482
    %1855 = vmatprep.subr.mxu0 %v487
    %1856 = vmatpush1.msra.mxu0 %v486
    %1857 = vmatprep.subr.mxu0 %v491
    %1858 = vmatpush1.msra.mxu0 %v490
    %1859 = vmatprep.subr.mxu0 %v495
    %1860 = vmatpush1.msra.mxu0 %v494
    %1861 = vmatprep.subr.mxu0 %v499
    %1862 = vmatpush1.msra.mxu0 %v498
    %1863 = vmatprep.subr.mxu0 %v503
    %1864 = vmatpush1.msra.mxu0 %v502
    %1865 = vmatprep.subr.mxu0 %v507
    %1866 = vmatpush1.msra.mxu0 %v506
    %1867 = vmatprep.subr.mxu0 %v511
    %1868 = vmatpush1.msra.mxu0 %v510
    %1869 = vmatprep.subr.mxu0 %v515
    %1870 = vmatpush1.msra.mxu0 %v514
    %1871 = vmatprep.subr.mxu0 %v519
    %1872 = vmatpush1.msra.mxu0 %v518
    %1873 = vmatprep.subr.mxu0 %v523
    %1874 = vmatpush1.msra.mxu0 %v522
    %1875 = vmatprep.subr.mxu0 %v527
    %1876 = vmatpush1.msra.mxu0 %v526
    %1877 = vmatprep.subr.mxu0 %v531
    %1878 = vmatpush1.msra.mxu0 %v530
    %1879 = vmatprep.subr.mxu0 0.0
    %1880 = vmatpush1.msra.mxu0 0.0
    %1881 = vmatprep.subr.mxu0 0.0
    %1882 = vmatpush1.msra.mxu0 0.0
    %1883 = vmatprep.subr.mxu0 0.0
    %1884 = vmatpush1.msra.mxu0 0.0
    %1885 = vmatprep.subr.mxu0 0.0
    %1886 = vmatpush1.msra.mxu0 0.0
    %1887 = vmatprep.subr.mxu0 0.0
    %1888 = vmatpush1.msra.mxu0 0.0
    %1889 = vmatprep.subr.mxu0 0.0
    %1890 = vmatpush1.msra.mxu0 0.0
    %1891 = vmatprep.subr.mxu0 0.0
    %1892 = vmatpush1.msra.mxu0 0.0
    %1893 = vmatprep.subr.mxu0 0.0
    %1894 = vmatpush1.msra.mxu0 0.0
    %1895 = vmatprep.subr.mxu0 0.0
    %1896 = vmatpush1.msra.mxu0 0.0
    %1897 = vmatprep.subr.mxu0 0.0
    %1898 = vmatpush1.msra.mxu0 0.0
    %1899 = vmatprep.subr.mxu0 0.0
    %1900 = vmatpush1.msra.mxu0 0.0
    %1901 = vmatprep.subr.mxu0 0.0
    %1902 = vmatpush1.msra.mxu0 0.0
    %1903 = vmatprep.subr.mxu0 0.0
    %1904 = vmatpush1.msra.mxu0 0.0
    %1905 = vmatprep.subr.mxu0 0.0
    %1906 = vmatpush1.msra.mxu0 0.0
    %1907 = vmatprep.subr.mxu0 0.0
    %1908 = vmatpush1.msra.mxu0 0.0
    %1909 = vmatprep.subr.mxu0 0.0
    %1910 = vmatpush1.msra.mxu0 0.0
    %1911 = vmatprep.mubr.f32.mxu0 0.0
    %1912 = vmatmul.mubr.f32.gmra.mrb[0].mxu0 %v1768
    %v1913 = vpop.f32.mrb[0].mxu0
    %v1914 = vadd.f32 0.0, %v1913
    %v1915 = vpop.f32.mrb[0].mxu0
    %v1916 = vadd.f32 0.0, %v1915
    %1917 = vdwg.mxu0
    %v1918 = vadd.f32 %v1772, %v1843
    %v1919 = vadd.f32 %v1773, %v1845
    %v1920 = vadd.f32 %v1774, %v1914
    %v1921 = vadd.f32 %v1775, %v1916
    %v1922 = vxor.u32 %v1918, 2147483648
    %v1923 = vmul.f32 %v1922, 1.442695
    %v1924 = vpow.pop %v1923
    %v1925 = vadd.f32 %v1924, 1.0
    %v1926 = vrcp.pop %v1925
    %v1927 = vmul.f32 1.0, %v1926
    %v1928 = vxor.u32 %v1919, 2147483648
    %v1929 = vmul.f32 %v1928, 1.442695
    %v1930 = vpow.pop %v1929
    %v1931 = vadd.f32 %v1930, 1.0
    %v1932 = vrcp.pop %v1931
    %v1933 = vmul.f32 1.0, %v1932
    %v1934 = vtanh.pop %v1920
    %v1935 = vxor.u32 %v1921, 2147483648
    %v1936 = vmul.f32 %v1935, 1.442695
    %v1937 = vpow.pop %v1936
    %v1938 = vadd.f32 %v1937, 1.0
    %v1939 = vrcp.pop %v1938
    %v1940 = vmul.f32 1.0, %v1939
    %v1941 = vmul.f32 %v1933, %v1766
    %v1942 = vmul.f32 %v1927, %v1934
    %v1943 = vadd.f32 %v1941, %v1942
    %v1944 = vtanh.pop %v1943
    %v1945 = vmul.f32 %v1940, %v1944
    %s1946 = scalar_lea.vmem [#allocation3], 56
    %1947 = vst [vmem:[%s1946] sm:$0xff] %v1945
    %1948 = vst [vmem:[#allocation16] sm:$0xff] %v1945
    %1949 = vst [vmem:[#allocation18] sm:$0xff] %v1943
    %v1950 = vld [vmem:[#allocation3] sm:$0xff]
    %v1951 = vld [vmem:[#allocation3 + $0x8] sm:$0xff]
    %v1952 = vld [vmem:[#allocation3 + $0x10] sm:$0xff]
    %v1953 = vld [vmem:[#allocation3 + $0x18] sm:$0xff]
    %v1954 = vld [vmem:[#allocation3 + $0x20] sm:$0xff]
    %v1955 = vld [vmem:[#allocation3 + $0x28] sm:$0xff]
    %v1956 = vld [vmem:[#allocation3 + $0x30] sm:$0xff]
    %v1957 = vld [vmem:[#allocation3 + $0x38] sm:$0xff]
    %s1958 = scalar_lea.vmem [#allocation10], 512
    %v1959 = vld [vmem:[%s1958] sm:$0xff]
    %v1960 = vld [vmem:[%s1958 + $0x8] sm:$0xff]
    %v1961 = vld [vmem:[%s1958 + $0x10] sm:$0xff]
    %v1962 = vld [vmem:[%s1958 + $0x18] sm:$0xff]
    %v1963 = vld [vmem:[%s1958 + $0x20] sm:$0xff]
    %v1964 = vld [vmem:[%s1958 + $0x28] sm:$0xff]
    %v1965 = vld [vmem:[%s1958 + $0x30] sm:$0xff]
    %v1966 = vld [vmem:[%s1958 + $0x38] sm:$0xff]
    %v1967 = vld [vmem:[%s1958 + $0x40] sm:$0xff]
    %v1968 = vld [vmem:[%s1958 + $0x48] sm:$0xff]
    %v1969 = vld [vmem:[%s1958 + $0x50] sm:$0xff]
    %v1970 = vld [vmem:[%s1958 + $0x58] sm:$0xff]
    %v1971 = vld [vmem:[%s1958 + $0x60] sm:$0xff]
    %v1972 = vld [vmem:[%s1958 + $0x68] sm:$0xff]
    %v1973 = vld [vmem:[%s1958 + $0x70] sm:$0xff]
    %v1974 = vld [vmem:[%s1958 + $0x78] sm:$0xff]
    %v1975 = vld [vmem:[%s1958 + $0x80] sm:$0xff]
    %v1976 = vld [vmem:[%s1958 + $0x88] sm:$0xff]
    %v1977 = vld [vmem:[%s1958 + $0x90] sm:$0xff]
    %v1978 = vld [vmem:[%s1958 + $0x98] sm:$0xff]
    %v1979 = vld [vmem:[%s1958 + $0xa0] sm:$0xff]
    %v1980 = vld [vmem:[%s1958 + $0xa8] sm:$0xff]
    %v1981 = vld [vmem:[%s1958 + $0xb0] sm:$0xff]
    %v1982 = vld [vmem:[%s1958 + $0xb8] sm:$0xff]
    %v1983 = vld [vmem:[%s1958 + $0xc0] sm:$0xff]
    %v1984 = vld [vmem:[%s1958 + $0xc8] sm:$0xff]
    %v1985 = vld [vmem:[%s1958 + $0xd0] sm:$0xff]
    %v1986 = vld [vmem:[%s1958 + $0xd8] sm:$0xff]
    %v1987 = vld [vmem:[%s1958 + $0xe0] sm:$0xff]
    %v1988 = vld [vmem:[%s1958 + $0xe8] sm:$0xff]
    %v1989 = vld [vmem:[%s1958 + $0xf0] sm:$0xff]
    %v1990 = vld [vmem:[%s1958 + $0xf8] sm:$0xff]
    %v1991 = vld [vmem:[%s1958 + $0x100] sm:$0xff]
    %v1992 = vld [vmem:[%s1958 + $0x108] sm:$0xff]
    %v1993 = vld [vmem:[%s1958 + $0x110] sm:$0xff]
    %v1994 = vld [vmem:[%s1958 + $0x118] sm:$0xff]
    %v1995 = vld [vmem:[%s1958 + $0x120] sm:$0xff]
    %v1996 = vld [vmem:[%s1958 + $0x128] sm:$0xff]
    %v1997 = vld [vmem:[%s1958 + $0x130] sm:$0xff]
    %v1998 = vld [vmem:[%s1958 + $0x138] sm:$0xff]
    %v1999 = vld [vmem:[%s1958 + $0x140] sm:$0xff]
    %v2000 = vld [vmem:[%s1958 + $0x148] sm:$0xff]
    %v2001 = vld [vmem:[%s1958 + $0x150] sm:$0xff]
    %v2002 = vld [vmem:[%s1958 + $0x158] sm:$0xff]
    %v2003 = vld [vmem:[%s1958 + $0x160] sm:$0xff]
    %v2004 = vld [vmem:[%s1958 + $0x168] sm:$0xff]
    %v2005 = vld [vmem:[%s1958 + $0x170] sm:$0xff]
    %v2006 = vld [vmem:[%s1958 + $0x178] sm:$0xff]
    %v2007 = vld [vmem:[%s1958 + $0x180] sm:$0xff]
    %v2008 = vld [vmem:[%s1958 + $0x188] sm:$0xff]
    %v2009 = vld [vmem:[%s1958 + $0x190] sm:$0xff]
    %v2010 = vld [vmem:[%s1958 + $0x198] sm:$0xff]
    %v2011 = vld [vmem:[%s1958 + $0x1a0] sm:$0xff]
    %v2012 = vld [vmem:[%s1958 + $0x1a8] sm:$0xff]
    %v2013 = vld [vmem:[%s1958 + $0x1b0] sm:$0xff]
    %v2014 = vld [vmem:[%s1958 + $0x1b8] sm:$0xff]
    %v2015 = vld [vmem:[%s1958 + $0x1c0] sm:$0xff]
    %v2016 = vld [vmem:[%s1958 + $0x1c8] sm:$0xff]
    %v2017 = vld [vmem:[%s1958 + $0x1d0] sm:$0xff]
    %v2018 = vld [vmem:[%s1958 + $0x1d8] sm:$0xff]
    %v2019 = vld [vmem:[%s1958 + $0x1e0] sm:$0xff]
    %v2020 = vld [vmem:[%s1958 + $0x1e8] sm:$0xff]
    %v2021 = vld [vmem:[%s1958 + $0x1f0] sm:$0xff]
    %v2022 = vld [vmem:[%s1958 + $0x1f8] sm:$0xff]
    %s2023 = scalar_lea.vmem %s5, 4
    %v2024 = vld [vmem:[%s2023] sm:$0xf]
    %v2026 = vlaneseq
    %v2027 = vshrl.u32 %v2026, 7
    %v2028 = vsub.s32 0, %v2027
    %v2029 = vrot.slane %v2024, %v2028
    %v2030 = vlaneseq
    %v2031 = vshrl.u32 %v2030, 7
    %v2032 = vsub.s32 1, %v2031
    %v2033 = vrot.slane %v2024, %v2032
    %v2034 = vlaneseq
    %v2035 = vshrl.u32 %v2034, 7
    %v2036 = vsub.s32 2, %v2035
    %v2037 = vrot.slane %v2024, %v2036
    %v2038 = vlaneseq
    %v2039 = vshrl.u32 %v2038, 7
    %v2040 = vsub.s32 3, %v2039
    %v2041 = vrot.slane %v2024, %v2040
    %2046 = vmatprep.subr.mxu0 %v1960
    %2047 = vmatpush1.msra.mxu0 %v1959
    %2048 = vmatprep.subr.mxu0 %v1964
    %2049 = vmatpush1.msra.mxu0 %v1963
    %2050 = vmatprep.subr.mxu0 %v1968
    %2051 = vmatpush1.msra.mxu0 %v1967
    %2052 = vmatprep.subr.mxu0 %v1972
    %2053 = vmatpush1.msra.mxu0 %v1971
    %2054 = vmatprep.subr.mxu0 %v1976
    %2055 = vmatpush1.msra.mxu0 %v1975
    %2056 = vmatprep.subr.mxu0 %v1980
    %2057 = vmatpush1.msra.mxu0 %v1979
    %2058 = vmatprep.subr.mxu0 %v1984
    %2059 = vmatpush1.msra.mxu0 %v1983
    %2060 = vmatprep.subr.mxu0 %v1988
    %2061 = vmatpush1.msra.mxu0 %v1987
    %2062 = vmatprep.subr.mxu0 %v1992
    %2063 = vmatpush1.msra.mxu0 %v1991
    %2064 = vmatprep.subr.mxu0 %v1996
    %2065 = vmatpush1.msra.mxu0 %v1995
    %2066 = vmatprep.subr.mxu0 %v2000
    %2067 = vmatpush1.msra.mxu0 %v1999
    %2068 = vmatprep.subr.mxu0 %v2004
    %2069 = vmatpush1.msra.mxu0 %v2003
    %2070 = vmatprep.subr.mxu0 %v2008
    %2071 = vmatpush1.msra.mxu0 %v2007
    %2072 = vmatprep.subr.mxu0 %v2012
    %2073 = vmatpush1.msra.mxu0 %v2011
    %2074 = vmatprep.subr.mxu0 %v2016
    %2075 = vmatpush1.msra.mxu0 %v2015
    %2076 = vmatprep.subr.mxu0 %v2020
    %2077 = vmatpush1.msra.mxu0 %v2019
    %2078 = vmatprep.subr.mxu0 0.0
    %2079 = vmatpush1.msra.mxu0 0.0
    %2080 = vmatprep.subr.mxu0 0.0
    %2081 = vmatpush1.msra.mxu0 0.0
    %2082 = vmatprep.subr.mxu0 0.0
    %2083 = vmatpush1.msra.mxu0 0.0
    %2084 = vmatprep.subr.mxu0 0.0
    %2085 = vmatpush1.msra.mxu0 0.0
    %2086 = vmatprep.subr.mxu0 0.0
    %2087 = vmatpush1.msra.mxu0 0.0
    %2088 = vmatprep.subr.mxu0 0.0
    %2089 = vmatpush1.msra.mxu0 0.0
    %2090 = vmatprep.subr.mxu0 0.0
    %2091 = vmatpush1.msra.mxu0 0.0
    %2092 = vmatprep.subr.mxu0 0.0
    %2093 = vmatpush1.msra.mxu0 0.0
    %2094 = vmatprep.subr.mxu0 0.0
    %2095 = vmatpush1.msra.mxu0 0.0
    %2096 = vmatprep.subr.mxu0 0.0
    %2097 = vmatpush1.msra.mxu0 0.0
    %2098 = vmatprep.subr.mxu0 0.0
    %2099 = vmatpush1.msra.mxu0 0.0
    %2100 = vmatprep.subr.mxu0 0.0
    %2101 = vmatpush1.msra.mxu0 0.0
    %2102 = vmatprep.subr.mxu0 0.0
    %2103 = vmatpush1.msra.mxu0 0.0
    %2104 = vmatprep.subr.mxu0 0.0
    %2105 = vmatpush1.msra.mxu0 0.0
    %2106 = vmatprep.subr.mxu0 0.0
    %2107 = vmatpush1.msra.mxu0 0.0
    %2108 = vmatprep.subr.mxu0 0.0
    %2109 = vmatpush1.msra.mxu0 0.0
    %2110 = vmatprep.mubr.f32.mxu0 0.0
    %2111 = vmatmul.mubr.f32.gmra.mrb[0].mxu0 %v1950
    %v2112 = vpop.f32.mrb[0].mxu0
    %v2113 = vadd.f32 %v2029, %v2112
    %v2114 = vpop.f32.mrb[0].mxu0
    %v2115 = vadd.f32 %v2033, %v2114
    %2116 = vmatprep.mubr.f32.mxu0 0.0
    %2117 = vmatmul.mubr.f32.gmra.mrb[0].mxu0 %v1951
    %v2118 = vpop.f32.mrb[0].mxu0
    %v2119 = vadd.f32 %v2029, %v2118
    %v2120 = vpop.f32.mrb[0].mxu0
    %v2121 = vadd.f32 %v2033, %v2120
    %2122 = vmatprep.mubr.f32.mxu0 0.0
    %2123 = vmatmul.mubr.f32.gmra.mrb[0].mxu0 %v1952
    %v2124 = vpop.f32.mrb[0].mxu0
    %v2125 = vadd.f32 %v2029, %v2124
    %v2126 = vpop.f32.mrb[0].mxu0
    %v2127 = vadd.f32 %v2033, %v2126
    %2128 = vmatprep.mubr.f32.mxu0 0.0
    %2129 = vmatmul.mubr.f32.gmra.mrb[0].mxu0 %v1953
    %v2130 = vpop.f32.mrb[0].mxu0
    %v2131 = vadd.f32 %v2029, %v2130
    %v2132 = vpop.f32.mrb[0].mxu0
    %v2133 = vadd.f32 %v2033, %v2132
    %2134 = vmatprep.mubr.f32.mxu0 0.0
    %2135 = vmatmul.mubr.f32.gmra.mrb[0].mxu0 %v1954
    %v2136 = vpop.f32.mrb[0].mxu0
    %v2137 = vadd.f32 %v2029, %v2136
    %v2138 = vpop.f32.mrb[0].mxu0
    %v2139 = vadd.f32 %v2033, %v2138
    %2140 = vmatprep.mubr.f32.mxu0 0.0
    %2141 = vmatmul.mubr.f32.gmra.mrb[0].mxu0 %v1955
    %v2142 = vpop.f32.mrb[0].mxu0
    %v2143 = vadd.f32 %v2029, %v2142
    %v2144 = vpop.f32.mrb[0].mxu0
    %v2145 = vadd.f32 %v2033, %v2144
    %2146 = vmatprep.mubr.f32.mxu0 0.0
    %2147 = vmatmul.mubr.f32.gmra.mrb[0].mxu0 %v1956
    %v2148 = vpop.f32.mrb[0].mxu0
    %v2149 = vadd.f32 %v2029, %v2148
    %v2150 = vpop.f32.mrb[0].mxu0
    %v2151 = vadd.f32 %v2033, %v2150
    %2152 = vmatprep.mubr.f32.mxu0 0.0
    %2153 = vmatmul.mubr.f32.gmra.mrb[0].mxu0 %v1957
    %v2154 = vpop.f32.mrb[0].mxu0
    %v2155 = vadd.f32 %v2029, %v2154
    %v2156 = vpop.f32.mrb[0].mxu0
    %v2157 = vadd.f32 %v2033, %v2156
    %2158 = vdwg.mxu0
    %2159 = vmatprep.subr.mxu0 %v1962
    %2160 = vmatpush1.msra.mxu0 %v1961
    %2161 = vmatprep.subr.mxu0 %v1966
    %2162 = vmatpush1.msra.mxu0 %v1965
    %2163 = vmatprep.subr.mxu0 %v1970
    %2164 = vmatpush1.msra.mxu0 %v1969
    %2165 = vmatprep.subr.mxu0 %v1974
    %2166 = vmatpush1.msra.mxu0 %v1973
    %2167 = vmatprep.subr.mxu0 %v1978
    %2168 = vmatpush1.msra.mxu0 %v1977
    %2169 = vmatprep.subr.mxu0 %v1982
    %2170 = vmatpush1.msra.mxu0 %v1981
    %2171 = vmatprep.subr.mxu0 %v1986
    %2172 = vmatpush1.msra.mxu0 %v1985
    %2173 = vmatprep.subr.mxu0 %v1990
    %2174 = vmatpush1.msra.mxu0 %v1989
    %2175 = vmatprep.subr.mxu0 %v1994
    %2176 = vmatpush1.msra.mxu0 %v1993
    %2177 = vmatprep.subr.mxu0 %v1998
    %2178 = vmatpush1.msra.mxu0 %v1997
    %2179 = vmatprep.subr.mxu0 %v2002
    %2180 = vmatpush1.msra.mxu0 %v2001
    %2181 = vmatprep.subr.mxu0 %v2006
    %2182 = vmatpush1.msra.mxu0 %v2005
    %2183 = vmatprep.subr.mxu0 %v2010
    %2184 = vmatpush1.msra.mxu0 %v2009
    %2185 = vmatprep.subr.mxu0 %v2014
    %2186 = vmatpush1.msra.mxu0 %v2013
    %2187 = vmatprep.subr.mxu0 %v2018
    %2188 = vmatpush1.msra.mxu0 %v2017
    %2189 = vmatprep.subr.mxu0 %v2022
    %2190 = vmatpush1.msra.mxu0 %v2021
    %2191 = vmatprep.subr.mxu0 0.0
    %2192 = vmatpush1.msra.mxu0 0.0
    %2193 = vmatprep.subr.mxu0 0.0
    %2194 = vmatpush1.msra.mxu0 0.0
    %2195 = vmatprep.subr.mxu0 0.0
    %2196 = vmatpush1.msra.mxu0 0.0
    %2197 = vmatprep.subr.mxu0 0.0
    %2198 = vmatpush1.msra.mxu0 0.0
    %2199 = vmatprep.subr.mxu0 0.0
    %2200 = vmatpush1.msra.mxu0 0.0
    %2201 = vmatprep.subr.mxu0 0.0
    %2202 = vmatpush1.msra.mxu0 0.0
    %2203 = vmatprep.subr.mxu0 0.0
    %2204 = vmatpush1.msra.mxu0 0.0
    %2205 = vmatprep.subr.mxu0 0.0
    %2206 = vmatpush1.msra.mxu0 0.0
    %2207 = vmatprep.subr.mxu0 0.0
    %2208 = vmatpush1.msra.mxu0 0.0
    %2209 = vmatprep.subr.mxu0 0.0
    %2210 = vmatpush1.msra.mxu0 0.0
    %2211 = vmatprep.subr.mxu0 0.0
    %2212 = vmatpush1.msra.mxu0 0.0
    %2213 = vmatprep.subr.mxu0 0.0
    %2214 = vmatpush1.msra.mxu0 0.0
    %2215 = vmatprep.subr.mxu0 0.0
    %2216 = vmatpush1.msra.mxu0 0.0
    %2217 = vmatprep.subr.mxu0 0.0
    %2218 = vmatpush1.msra.mxu0 0.0
    %2219 = vmatprep.subr.mxu0 0.0
    %2220 = vmatpush1.msra.mxu0 0.0
    %2221 = vmatprep.subr.mxu0 0.0
    %2222 = vmatpush1.msra.mxu0 0.0
    %2223 = vmatprep.mubr.f32.mxu0 0.0
    %2224 = vmatmul.mubr.f32.gmra.mrb[0].mxu0 %v1950
    %v2225 = vpop.f32.mrb[0].mxu0
    %v2226 = vadd.f32 %v2037, %v2225
    %v2227 = vpop.f32.mrb[0].mxu0
    %v2228 = vadd.f32 %v2041, %v2227
    %2229 = vmatprep.mubr.f32.mxu0 0.0
    %2230 = vmatmul.mubr.f32.gmra.mrb[0].mxu0 %v1951
    %v2231 = vpop.f32.mrb[0].mxu0
    %v2232 = vadd.f32 %v2037, %v2231
    %v2233 = vpop.f32.mrb[0].mxu0
    %v2234 = vadd.f32 %v2041, %v2233
    %2235 = vmatprep.mubr.f32.mxu0 0.0
    %2236 = vmatmul.mubr.f32.gmra.mrb[0].mxu0 %v1952
    %v2237 = vpop.f32.mrb[0].mxu0
    %v2238 = vadd.f32 %v2037, %v2237
    %v2239 = vpop.f32.mrb[0].mxu0
    %v2240 = vadd.f32 %v2041, %v2239
    %2241 = vmatprep.mubr.f32.mxu0 0.0
    %2242 = vmatmul.mubr.f32.gmra.mrb[0].mxu0 %v1953
    %v2243 = vpop.f32.mrb[0].mxu0
    %v2244 = vadd.f32 %v2037, %v2243
    %v2245 = vpop.f32.mrb[0].mxu0
    %v2246 = vadd.f32 %v2041, %v2245
    %2247 = vmatprep.mubr.f32.mxu0 0.0
    %2248 = vmatmul.mubr.f32.gmra.mrb[0].mxu0 %v1954
    %v2249 = vpop.f32.mrb[0].mxu0
    %v2250 = vadd.f32 %v2037, %v2249
    %v2251 = vpop.f32.mrb[0].mxu0
    %v2252 = vadd.f32 %v2041, %v2251
    %2253 = vmatprep.mubr.f32.mxu0 0.0
    %2254 = vmatmul.mubr.f32.gmra.mrb[0].mxu0 %v1955
    %v2255 = vpop.f32.mrb[0].mxu0
    %v2256 = vadd.f32 %v2037, %v2255
    %v2257 = vpop.f32.mrb[0].mxu0
    %v2258 = vadd.f32 %v2041, %v2257
    %2259 = vmatprep.mubr.f32.mxu0 0.0
    %2260 = vmatmul.mubr.f32.gmra.mrb[0].mxu0 %v1956
    %v2261 = vpop.f32.mrb[0].mxu0
    %v2262 = vadd.f32 %v2037, %v2261
    %v2263 = vpop.f32.mrb[0].mxu0
    %v2264 = vadd.f32 %v2041, %v2263
    %2265 = vmatprep.mubr.f32.mxu0 0.0
    %2266 = vmatmul.mubr.f32.gmra.mrb[0].mxu0 %v1957
    %v2267 = vpop.f32.mrb[0].mxu0
    %v2268 = vadd.f32 %v2037, %v2267
    %v2269 = vpop.f32.mrb[0].mxu0
    %v2270 = vadd.f32 %v2041, %v2269
    %2271 = vdwg.mxu0
    %2272 = vst [vmem:[#allocation2] sm:$0xff] %v2113
    %2273 = vst [vmem:[#allocation2 + $0x8] sm:$0xff] %v2115
    %2274 = vst [vmem:[#allocation2 + $0x10] sm:$0xff] %v2226
    %2275 = vst [vmem:[#allocation2 + $0x18] sm:$0xff] %v2228
    %2276 = vst [vmem:[#allocation2 + $0x20] sm:$0xff] %v2119
    %2277 = vst [vmem:[#allocation2 + $0x28] sm:$0xff] %v2121
    %2278 = vst [vmem:[#allocation2 + $0x30] sm:$0xff] %v2232
    %2279 = vst [vmem:[#allocation2 + $0x38] sm:$0xff] %v2234
    %2280 = vst [vmem:[#allocation2 + $0x40] sm:$0xff] %v2125
    %2281 = vst [vmem:[#allocation2 + $0x48] sm:$0xff] %v2127
    %2282 = vst [vmem:[#allocation2 + $0x50] sm:$0xff] %v2238
    %2283 = vst [vmem:[#allocation2 + $0x58] sm:$0xff] %v2240
    %2284 = vst [vmem:[#allocation2 + $0x60] sm:$0xff] %v2131
    %2285 = vst [vmem:[#allocation2 + $0x68] sm:$0xff] %v2133
    %2286 = vst [vmem:[#allocation2 + $0x70] sm:$0xff] %v2244
    %2287 = vst [vmem:[#allocation2 + $0x78] sm:$0xff] %v2246
    %2288 = vst [vmem:[#allocation2 + $0x80] sm:$0xff] %v2137
    %2289 = vst [vmem:[#allocation2 + $0x88] sm:$0xff] %v2139
    %2290 = vst [vmem:[#allocation2 + $0x90] sm:$0xff] %v2250
    %2291 = vst [vmem:[#allocation2 + $0x98] sm:$0xff] %v2252
    %2292 = vst [vmem:[#allocation2 + $0xa0] sm:$0xff] %v2143
    %2293 = vst [vmem:[#allocation2 + $0xa8] sm:$0xff] %v2145
    %2294 = vst [vmem:[#allocation2 + $0xb0] sm:$0xff] %v2256
    %2295 = vst [vmem:[#allocation2 + $0xb8] sm:$0xff] %v2258
    %2296 = vst [vmem:[#allocation2 + $0xc0] sm:$0xff] %v2149
    %2297 = vst [vmem:[#allocation2 + $0xc8] sm:$0xff] %v2151
    %2298 = vst [vmem:[#allocation2 + $0xd0] sm:$0xff] %v2262
    %2299 = vst [vmem:[#allocation2 + $0xd8] sm:$0xff] %v2264
    %2300 = vst [vmem:[#allocation2 + $0xe0] sm:$0xff] %v2155
    %2301 = vst [vmem:[#allocation2 + $0xe8] sm:$0xff] %v2157
    %2302 = vst [vmem:[#allocation2 + $0xf0] sm:$0xff] %v2268
    %2303 = vst [vmem:[#allocation2 + $0xf8] sm:$0xff] %v2270
    %s2304 = scalar_lea.vmem [#allocation12], 512
    %v2305 = vld [vmem:[%s2304] sm:$0xff]
    %v2306 = vld [vmem:[%s2304 + $0x8] sm:$0xff]
    %v2307 = vld [vmem:[%s2304 + $0x10] sm:$0xff]
    %v2308 = vld [vmem:[%s2304 + $0x18] sm:$0xff]
    %v2309 = vld [vmem:[%s2304 + $0x20] sm:$0xff]
    %v2310 = vld [vmem:[%s2304 + $0x28] sm:$0xff]
    %v2311 = vld [vmem:[%s2304 + $0x30] sm:$0xff]
    %v2312 = vld [vmem:[%s2304 + $0x38] sm:$0xff]
    %v2313 = vld [vmem:[%s2304 + $0x40] sm:$0xff]
    %v2314 = vld [vmem:[%s2304 + $0x48] sm:$0xff]
    %v2315 = vld [vmem:[%s2304 + $0x50] sm:$0xff]
    %v2316 = vld [vmem:[%s2304 + $0x58] sm:$0xff]
    %v2317 = vld [vmem:[%s2304 + $0x60] sm:$0xff]
    %v2318 = vld [vmem:[%s2304 + $0x68] sm:$0xff]
    %v2319 = vld [vmem:[%s2304 + $0x70] sm:$0xff]
    %v2320 = vld [vmem:[%s2304 + $0x78] sm:$0xff]
    %v2321 = vld [vmem:[%s2304 + $0x80] sm:$0xff]
    %v2322 = vld [vmem:[%s2304 + $0x88] sm:$0xff]
    %v2323 = vld [vmem:[%s2304 + $0x90] sm:$0xff]
    %v2324 = vld [vmem:[%s2304 + $0x98] sm:$0xff]
    %v2325 = vld [vmem:[%s2304 + $0xa0] sm:$0xff]
    %v2326 = vld [vmem:[%s2304 + $0xa8] sm:$0xff]
    %v2327 = vld [vmem:[%s2304 + $0xb0] sm:$0xff]
    %v2328 = vld [vmem:[%s2304 + $0xb8] sm:$0xff]
    %v2329 = vld [vmem:[%s2304 + $0xc0] sm:$0xff]
    %v2330 = vld [vmem:[%s2304 + $0xc8] sm:$0xff]
    %v2331 = vld [vmem:[%s2304 + $0xd0] sm:$0xff]
    %v2332 = vld [vmem:[%s2304 + $0xd8] sm:$0xff]
    %v2333 = vld [vmem:[%s2304 + $0xe0] sm:$0xff]
    %v2334 = vld [vmem:[%s2304 + $0xe8] sm:$0xff]
    %v2335 = vld [vmem:[%s2304 + $0xf0] sm:$0xff]
    %v2336 = vld [vmem:[%s2304 + $0xf8] sm:$0xff]
    %v2337 = vld [vmem:[%s2304 + $0x100] sm:$0xff]
    %v2338 = vld [vmem:[%s2304 + $0x108] sm:$0xff]
    %v2339 = vld [vmem:[%s2304 + $0x110] sm:$0xff]
    %v2340 = vld [vmem:[%s2304 + $0x118] sm:$0xff]
    %v2341 = vld [vmem:[%s2304 + $0x120] sm:$0xff]
    %v2342 = vld [vmem:[%s2304 + $0x128] sm:$0xff]
    %v2343 = vld [vmem:[%s2304 + $0x130] sm:$0xff]
    %v2344 = vld [vmem:[%s2304 + $0x138] sm:$0xff]
    %v2345 = vld [vmem:[%s2304 + $0x140] sm:$0xff]
    %v2346 = vld [vmem:[%s2304 + $0x148] sm:$0xff]
    %v2347 = vld [vmem:[%s2304 + $0x150] sm:$0xff]
    %v2348 = vld [vmem:[%s2304 + $0x158] sm:$0xff]
    %v2349 = vld [vmem:[%s2304 + $0x160] sm:$0xff]
    %v2350 = vld [vmem:[%s2304 + $0x168] sm:$0xff]
    %v2351 = vld [vmem:[%s2304 + $0x170] sm:$0xff]
    %v2352 = vld [vmem:[%s2304 + $0x178] sm:$0xff]
    %v2353 = vld [vmem:[%s2304 + $0x180] sm:$0xff]
    %v2354 = vld [vmem:[%s2304 + $0x188] sm:$0xff]
    %v2355 = vld [vmem:[%s2304 + $0x190] sm:$0xff]
    %v2356 = vld [vmem:[%s2304 + $0x198] sm:$0xff]
    %v2357 = vld [vmem:[%s2304 + $0x1a0] sm:$0xff]
    %v2358 = vld [vmem:[%s2304 + $0x1a8] sm:$0xff]
    %v2359 = vld [vmem:[%s2304 + $0x1b0] sm:$0xff]
    %v2360 = vld [vmem:[%s2304 + $0x1b8] sm:$0xff]
    %v2361 = vld [vmem:[%s2304 + $0x1c0] sm:$0xff]
    %v2362 = vld [vmem:[%s2304 + $0x1c8] sm:$0xff]
    %v2363 = vld [vmem:[%s2304 + $0x1d0] sm:$0xff]
    %v2364 = vld [vmem:[%s2304 + $0x1d8] sm:$0xff]
    %v2365 = vld [vmem:[%s2304 + $0x1e0] sm:$0xff]
    %v2366 = vld [vmem:[%s2304 + $0x1e8] sm:$0xff]
    %v2367 = vld [vmem:[%s2304 + $0x1f0] sm:$0xff]
    %v2368 = vld [vmem:[%s2304 + $0x1f8] sm:$0xff]
    %s2369 = scalar_lea.vmem [#allocation7], 8
    %v2370 = vld [vmem:[%s2369] sm:$0xff]
    %s2371 = scalar_lea.vmem [#allocation9], 8
    %v2372 = vld [vmem:[%s2371] sm:$0xff]
    %v2373 = vld [vmem:[#allocation2] sm:$0xff]
    %v2374 = vld [vmem:[#allocation2 + $0x8] sm:$0xff]
    %v2375 = vld [vmem:[#allocation2 + $0x10] sm:$0xff]
    %v2376 = vld [vmem:[#allocation2 + $0x18] sm:$0xff]
    %2377 = vmatprep.subr.mxu0 %v2306
    %2378 = vmatpush1.msra.mxu0 %v2305
    %2379 = vmatprep.subr.mxu0 %v2310
    %2380 = vmatpush1.msra.mxu0 %v2309
    %2381 = vmatprep.subr.mxu0 %v2314
    %2382 = vmatpush1.msra.mxu0 %v2313
    %2383 = vmatprep.subr.mxu0 %v2318
    %2384 = vmatpush1.msra.mxu0 %v2317
    %2385 = vmatprep.subr.mxu0 %v2322
    %2386 = vmatpush1.msra.mxu0 %v2321
    %2387 = vmatprep.subr.mxu0 %v2326
    %2388 = vmatpush1.msra.mxu0 %v2325
    %2389 = vmatprep.subr.mxu0 %v2330
    %2390 = vmatpush1.msra.mxu0 %v2329
    %2391 = vmatprep.subr.mxu0 %v2334
    %2392 = vmatpush1.msra.mxu0 %v2333
    %2393 = vmatprep.subr.mxu0 %v2338
    %2394 = vmatpush1.msra.mxu0 %v2337
    %2395 = vmatprep.subr.mxu0 %v2342
    %2396 = vmatpush1.msra.mxu0 %v2341
    %2397 = vmatprep.subr.mxu0 %v2346
    %2398 = vmatpush1.msra.mxu0 %v2345
    %2399 = vmatprep.subr.mxu0 %v2350
    %2400 = vmatpush1.msra.mxu0 %v2349
    %2401 = vmatprep.subr.mxu0 %v2354
    %2402 = vmatpush1.msra.mxu0 %v2353
    %2403 = vmatprep.subr.mxu0 %v2358
    %2404 = vmatpush1.msra.mxu0 %v2357
    %2405 = vmatprep.subr.mxu0 %v2362
    %2406 = vmatpush1.msra.mxu0 %v2361
    %2407 = vmatprep.subr.mxu0 %v2366
    %2408 = vmatpush1.msra.mxu0 %v2365
    %2409 = vmatprep.subr.mxu0 0.0
    %2410 = vmatpush1.msra.mxu0 0.0
    %2411 = vmatprep.subr.mxu0 0.0
    %2412 = vmatpush1.msra.mxu0 0.0
    %2413 = vmatprep.subr.mxu0 0.0
    %2414 = vmatpush1.msra.mxu0 0.0
    %2415 = vmatprep.subr.mxu0 0.0
    %2416 = vmatpush1.msra.mxu0 0.0
    %2417 = vmatprep.subr.mxu0 0.0
    %2418 = vmatpush1.msra.mxu0 0.0
    %2419 = vmatprep.subr.mxu0 0.0
    %2420 = vmatpush1.msra.mxu0 0.0
    %2421 = vmatprep.subr.mxu0 0.0
    %2422 = vmatpush1.msra.mxu0 0.0
    %2423 = vmatprep.subr.mxu0 0.0
    %2424 = vmatpush1.msra.mxu0 0.0
    %2425 = vmatprep.subr.mxu0 0.0
    %2426 = vmatpush1.msra.mxu0 0.0
    %2427 = vmatprep.subr.mxu0 0.0
    %2428 = vmatpush1.msra.mxu0 0.0
    %2429 = vmatprep.subr.mxu0 0.0
    %2430 = vmatpush1.msra.mxu0 0.0
    %2431 = vmatprep.subr.mxu0 0.0
    %2432 = vmatpush1.msra.mxu0 0.0
    %2433 = vmatprep.subr.mxu0 0.0
    %2434 = vmatpush1.msra.mxu0 0.0
    %2435 = vmatprep.subr.mxu0 0.0
    %2436 = vmatpush1.msra.mxu0 0.0
    %2437 = vmatprep.subr.mxu0 0.0
    %2438 = vmatpush1.msra.mxu0 0.0
    %2439 = vmatprep.subr.mxu0 0.0
    %2440 = vmatpush1.msra.mxu0 0.0
    %2441 = vmatprep.mubr.f32.mxu0 0.0
    %2442 = vmatmul.mubr.f32.gmra.mrb[0].mxu0 %v2370
    %v2443 = vpop.f32.mrb[0].mxu0
    %v2444 = vadd.f32 0.0, %v2443
    %v2445 = vpop.f32.mrb[0].mxu0
    %v2446 = vadd.f32 0.0, %v2445
    %2447 = vdwg.mxu0
    %2448 = vmatprep.subr.mxu0 %v2308
    %2449 = vmatpush1.msra.mxu0 %v2307
    %2450 = vmatprep.subr.mxu0 %v2312
    %2451 = vmatpush1.msra.mxu0 %v2311
    %2452 = vmatprep.subr.mxu0 %v2316
    %2453 = vmatpush1.msra.mxu0 %v2315
    %2454 = vmatprep.subr.mxu0 %v2320
    %2455 = vmatpush1.msra.mxu0 %v2319
    %2456 = vmatprep.subr.mxu0 %v2324
    %2457 = vmatpush1.msra.mxu0 %v2323
    %2458 = vmatprep.subr.mxu0 %v2328
    %2459 = vmatpush1.msra.mxu0 %v2327
    %2460 = vmatprep.subr.mxu0 %v2332
    %2461 = vmatpush1.msra.mxu0 %v2331
    %2462 = vmatprep.subr.mxu0 %v2336
    %2463 = vmatpush1.msra.mxu0 %v2335
    %2464 = vmatprep.subr.mxu0 %v2340
    %2465 = vmatpush1.msra.mxu0 %v2339
    %2466 = vmatprep.subr.mxu0 %v2344
    %2467 = vmatpush1.msra.mxu0 %v2343
    %2468 = vmatprep.subr.mxu0 %v2348
    %2469 = vmatpush1.msra.mxu0 %v2347
    %2470 = vmatprep.subr.mxu0 %v2352
    %2471 = vmatpush1.msra.mxu0 %v2351
    %2472 = vmatprep.subr.mxu0 %v2356
    %2473 = vmatpush1.msra.mxu0 %v2355
    %2474 = vmatprep.subr.mxu0 %v2360
    %2475 = vmatpush1.msra.mxu0 %v2359
    %2476 = vmatprep.subr.mxu0 %v2364
    %2477 = vmatpush1.msra.mxu0 %v2363
    %2478 = vmatprep.subr.mxu0 %v2368
    %2479 = vmatpush1.msra.mxu0 %v2367
    %2480 = vmatprep.subr.mxu0 0.0
    %2481 = vmatpush1.msra.mxu0 0.0
    %2482 = vmatprep.subr.mxu0 0.0
    %2483 = vmatpush1.msra.mxu0 0.0
    %2484 = vmatprep.subr.mxu0 0.0
    %2485 = vmatpush1.msra.mxu0 0.0
    %2486 = vmatprep.subr.mxu0 0.0
    %2487 = vmatpush1.msra.mxu0 0.0
    %2488 = vmatprep.subr.mxu0 0.0
    %2489 = vmatpush1.msra.mxu0 0.0
    %2490 = vmatprep.subr.mxu0 0.0
    %2491 = vmatpush1.msra.mxu0 0.0
    %2492 = vmatprep.subr.mxu0 0.0
    %2493 = vmatpush1.msra.mxu0 0.0
    %2494 = vmatprep.subr.mxu0 0.0
    %2495 = vmatpush1.msra.mxu0 0.0
    %2496 = vmatprep.subr.mxu0 0.0
    %2497 = vmatpush1.msra.mxu0 0.0
    %2498 = vmatprep.subr.mxu0 0.0
    %2499 = vmatpush1.msra.mxu0 0.0
    %2500 = vmatprep.subr.mxu0 0.0
    %2501 = vmatpush1.msra.mxu0 0.0
    %2502 = vmatprep.subr.mxu0 0.0
    %2503 = vmatpush1.msra.mxu0 0.0
    %2504 = vmatprep.subr.mxu0 0.0
    %2505 = vmatpush1.msra.mxu0 0.0
    %2506 = vmatprep.subr.mxu0 0.0
    %2507 = vmatpush1.msra.mxu0 0.0
    %2508 = vmatprep.subr.mxu0 0.0
    %2509 = vmatpush1.msra.mxu0 0.0
    %2510 = vmatprep.subr.mxu0 0.0
    %2511 = vmatpush1.msra.mxu0 0.0
    %2512 = vmatprep.mubr.f32.mxu0 0.0
    %2513 = vmatmul.mubr.f32.gmra.mrb[0].mxu0 %v2370
    %v2514 = vpop.f32.mrb[0].mxu0
    %v2515 = vadd.f32 0.0, %v2514
    %v2516 = vpop.f32.mrb[0].mxu0
    %v2517 = vadd.f32 0.0, %v2516
    %2518 = vdwg.mxu0
    %v2519 = vadd.f32 %v2373, %v2444
    %v2520 = vadd.f32 %v2374, %v2446
    %v2521 = vadd.f32 %v2375, %v2515
    %v2522 = vadd.f32 %v2376, %v2517
    %v2523 = vxor.u32 %v2519, 2147483648
    %v2524 = vmul.f32 %v2523, 1.442695
    %v2525 = vpow.pop %v2524
    %v2526 = vadd.f32 %v2525, 1.0
    %v2527 = vrcp.pop %v2526
    %v2528 = vmul.f32 1.0, %v2527
    %v2529 = vxor.u32 %v2520, 2147483648
    %v2530 = vmul.f32 %v2529, 1.442695
    %v2531 = vpow.pop %v2530
    %v2532 = vadd.f32 %v2531, 1.0
    %v2533 = vrcp.pop %v2532
    %v2534 = vmul.f32 1.0, %v2533
    %v2535 = vtanh.pop %v2521
    %v2536 = vxor.u32 %v2522, 2147483648
    %v2537 = vmul.f32 %v2536, 1.442695
    %v2538 = vpow.pop %v2537
    %v2539 = vadd.f32 %v2538, 1.0
    %v2540 = vrcp.pop %v2539
    %v2541 = vmul.f32 1.0, %v2540
    %v2542 = vmul.f32 %v2534, %v2372
    %v2543 = vmul.f32 %v2528, %v2535
    %v2544 = vadd.f32 %v2542, %v2543
    %v2545 = vtanh.pop %v2544
    %v2546 = vmul.f32 %v2541, %v2545
    %2547 = vst [vmem:[#allocation3] sm:$0xff] %v2546
    %v2548 = vld [vmem:[%s709] sm:$0xff]
    %v2549 = vld [vmem:[%s709 + $0x8] sm:$0xff]
    %v2550 = vld [vmem:[%s709 + $0x10] sm:$0xff]
    %v2551 = vld [vmem:[%s709 + $0x18] sm:$0xff]
    %2552 = vmatprep.subr.mxu0 %v2306
    %2553 = vmatpush1.msra.mxu0 %v2305
    %2554 = vmatprep.subr.mxu0 %v2310
    %2555 = vmatpush1.msra.mxu0 %v2309
    %2556 = vmatprep.subr.mxu0 %v2314
    %2557 = vmatpush1.msra.mxu0 %v2313
    %2558 = vmatprep.subr.mxu0 %v2318
    %2559 = vmatpush1.msra.mxu0 %v2317
    %2560 = vmatprep.subr.mxu0 %v2322
    %2561 = vmatpush1.msra.mxu0 %v2321
    %2562 = vmatprep.subr.mxu0 %v2326
    %2563 = vmatpush1.msra.mxu0 %v2325
    %2564 = vmatprep.subr.mxu0 %v2330
    %2565 = vmatpush1.msra.mxu0 %v2329
    %2566 = vmatprep.subr.mxu0 %v2334
    %2567 = vmatpush1.msra.mxu0 %v2333
    %2568 = vmatprep.subr.mxu0 %v2338
    %2569 = vmatpush1.msra.mxu0 %v2337
    %2570 = vmatprep.subr.mxu0 %v2342
    %2571 = vmatpush1.msra.mxu0 %v2341
    %2572 = vmatprep.subr.mxu0 %v2346
    %2573 = vmatpush1.msra.mxu0 %v2345
    %2574 = vmatprep.subr.mxu0 %v2350
    %2575 = vmatpush1.msra.mxu0 %v2349
    %2576 = vmatprep.subr.mxu0 %v2354
    %2577 = vmatpush1.msra.mxu0 %v2353
    %2578 = vmatprep.subr.mxu0 %v2358
    %2579 = vmatpush1.msra.mxu0 %v2357
    %2580 = vmatprep.subr.mxu0 %v2362
    %2581 = vmatpush1.msra.mxu0 %v2361
    %2582 = vmatprep.subr.mxu0 %v2366
    %2583 = vmatpush1.msra.mxu0 %v2365
    %2584 = vmatprep.subr.mxu0 0.0
    %2585 = vmatpush1.msra.mxu0 0.0
    %2586 = vmatprep.subr.mxu0 0.0
    %2587 = vmatpush1.msra.mxu0 0.0
    %2588 = vmatprep.subr.mxu0 0.0
    %2589 = vmatpush1.msra.mxu0 0.0
    %2590 = vmatprep.subr.mxu0 0.0
    %2591 = vmatpush1.msra.mxu0 0.0
    %2592 = vmatprep.subr.mxu0 0.0
    %2593 = vmatpush1.msra.mxu0 0.0
    %2594 = vmatprep.subr.mxu0 0.0
    %2595 = vmatpush1.msra.mxu0 0.0
    %2596 = vmatprep.subr.mxu0 0.0
    %2597 = vmatpush1.msra.mxu0 0.0
    %2598 = vmatprep.subr.mxu0 0.0
    %2599 = vmatpush1.msra.mxu0 0.0
    %2600 = vmatprep.subr.mxu0 0.0
    %2601 = vmatpush1.msra.mxu0 0.0
    %2602 = vmatprep.subr.mxu0 0.0
    %2603 = vmatpush1.msra.mxu0 0.0
    %2604 = vmatprep.subr.mxu0 0.0
    %2605 = vmatpush1.msra.mxu0 0.0
    %2606 = vmatprep.subr.mxu0 0.0
    %2607 = vmatpush1.msra.mxu0 0.0
    %2608 = vmatprep.subr.mxu0 0.0
    %2609 = vmatpush1.msra.mxu0 0.0
    %2610 = vmatprep.subr.mxu0 0.0
    %2611 = vmatpush1.msra.mxu0 0.0
    %2612 = vmatprep.subr.mxu0 0.0
    %2613 = vmatpush1.msra.mxu0 0.0
    %2614 = vmatprep.subr.mxu0 0.0
    %2615 = vmatpush1.msra.mxu0 0.0
    %2616 = vmatprep.mubr.f32.mxu0 0.0
    %2617 = vmatmul.mubr.f32.gmra.mrb[0].mxu0 %v2546
    %v2618 = vpop.f32.mrb[0].mxu0
    %v2619 = vadd.f32 0.0, %v2618
    %v2620 = vpop.f32.mrb[0].mxu0
    %v2621 = vadd.f32 0.0, %v2620
    %2622 = vdwg.mxu0
    %2623 = vmatprep.subr.mxu0 %v2308
    %2624 = vmatpush1.msra.mxu0 %v2307
    %2625 = vmatprep.subr.mxu0 %v2312
    %2626 = vmatpush1.msra.mxu0 %v2311
    %2627 = vmatprep.subr.mxu0 %v2316
    %2628 = vmatpush1.msra.mxu0 %v2315
    %2629 = vmatprep.subr.mxu0 %v2320
    %2630 = vmatpush1.msra.mxu0 %v2319
    %2631 = vmatprep.subr.mxu0 %v2324
    %2632 = vmatpush1.msra.mxu0 %v2323
    %2633 = vmatprep.subr.mxu0 %v2328
    %2634 = vmatpush1.msra.mxu0 %v2327
    %2635 = vmatprep.subr.mxu0 %v2332
    %2636 = vmatpush1.msra.mxu0 %v2331
    %2637 = vmatprep.subr.mxu0 %v2336
    %2638 = vmatpush1.msra.mxu0 %v2335
    %2639 = vmatprep.subr.mxu0 %v2340
    %2640 = vmatpush1.msra.mxu0 %v2339
    %2641 = vmatprep.subr.mxu0 %v2344
    %2642 = vmatpush1.msra.mxu0 %v2343
    %2643 = vmatprep.subr.mxu0 %v2348
    %2644 = vmatpush1.msra.mxu0 %v2347
    %2645 = vmatprep.subr.mxu0 %v2352
    %2646 = vmatpush1.msra.mxu0 %v2351
    %2647 = vmatprep.subr.mxu0 %v2356
    %2648 = vmatpush1.msra.mxu0 %v2355
    %2649 = vmatprep.subr.mxu0 %v2360
    %2650 = vmatpush1.msra.mxu0 %v2359
    %2651 = vmatprep.subr.mxu0 %v2364
    %2652 = vmatpush1.msra.mxu0 %v2363
    %2653 = vmatprep.subr.mxu0 %v2368
    %2654 = vmatpush1.msra.mxu0 %v2367
    %2655 = vmatprep.subr.mxu0 0.0
    %2656 = vmatpush1.msra.mxu0 0.0
    %2657 = vmatprep.subr.mxu0 0.0
    %2658 = vmatpush1.msra.mxu0 0.0
    %2659 = vmatprep.subr.mxu0 0.0
    %2660 = vmatpush1.msra.mxu0 0.0
    %2661 = vmatprep.subr.mxu0 0.0
    %2662 = vmatpush1.msra.mxu0 0.0
    %2663 = vmatprep.subr.mxu0 0.0
    %2664 = vmatpush1.msra.mxu0 0.0
    %2665 = vmatprep.subr.mxu0 0.0
    %2666 = vmatpush1.msra.mxu0 0.0
    %2667 = vmatprep.subr.mxu0 0.0
    %2668 = vmatpush1.msra.mxu0 0.0
    %2669 = vmatprep.subr.mxu0 0.0
    %2670 = vmatpush1.msra.mxu0 0.0
    %2671 = vmatprep.subr.mxu0 0.0
    %2672 = vmatpush1.msra.mxu0 0.0
    %2673 = vmatprep.subr.mxu0 0.0
    %2674 = vmatpush1.msra.mxu0 0.0
    %2675 = vmatprep.subr.mxu0 0.0
    %2676 = vmatpush1.msra.mxu0 0.0
    %2677 = vmatprep.subr.mxu0 0.0
    %2678 = vmatpush1.msra.mxu0 0.0
    %2679 = vmatprep.subr.mxu0 0.0
    %2680 = vmatpush1.msra.mxu0 0.0
    %2681 = vmatprep.subr.mxu0 0.0
    %2682 = vmatpush1.msra.mxu0 0.0
    %2683 = vmatprep.subr.mxu0 0.0
    %2684 = vmatpush1.msra.mxu0 0.0
    %2685 = vmatprep.subr.mxu0 0.0
    %2686 = vmatpush1.msra.mxu0 0.0
    %2687 = vmatprep.mubr.f32.mxu0 0.0
    %2688 = vmatmul.mubr.f32.gmra.mrb[0].mxu0 %v2546
    %v2689 = vpop.f32.mrb[0].mxu0
    %v2690 = vadd.f32 0.0, %v2689
    %v2691 = vpop.f32.mrb[0].mxu0
    %v2692 = vadd.f32 0.0, %v2691
    %2693 = vdwg.mxu0
    %v2694 = vadd.f32 %v2548, %v2619
    %v2695 = vadd.f32 %v2549, %v2621
    %v2696 = vadd.f32 %v2550, %v2690
    %v2697 = vadd.f32 %v2551, %v2692
    %v2698 = vxor.u32 %v2694, 2147483648
    %v2699 = vmul.f32 %v2698, 1.442695
    %v2700 = vpow.pop %v2699
    %v2701 = vadd.f32 %v2700, 1.0
    %v2702 = vrcp.pop %v2701
    %v2703 = vmul.f32 1.0, %v2702
    %v2704 = vxor.u32 %v2695, 2147483648
    %v2705 = vmul.f32 %v2704, 1.442695
    %v2706 = vpow.pop %v2705
    %v2707 = vadd.f32 %v2706, 1.0
    %v2708 = vrcp.pop %v2707
    %v2709 = vmul.f32 1.0, %v2708
    %v2710 = vtanh.pop %v2696
    %v2711 = vxor.u32 %v2697, 2147483648
    %v2712 = vmul.f32 %v2711, 1.442695
    %v2713 = vpow.pop %v2712
    %v2714 = vadd.f32 %v2713, 1.0
    %v2715 = vrcp.pop %v2714
    %v2716 = vmul.f32 1.0, %v2715
    %v2717 = vmul.f32 %v2709, %v2544
    %v2718 = vmul.f32 %v2703, %v2710
    %v2719 = vadd.f32 %v2717, %v2718
    %v2720 = vtanh.pop %v2719
    %v2721 = vmul.f32 %v2716, %v2720
    %2722 = vst [vmem:[%s884] sm:$0xff] %v2721
    %v2723 = vld [vmem:[%s886] sm:$0xff]
    %v2724 = vld [vmem:[%s886 + $0x8] sm:$0xff]
    %v2725 = vld [vmem:[%s886 + $0x10] sm:$0xff]
    %v2726 = vld [vmem:[%s886 + $0x18] sm:$0xff]
    %2727 = vmatprep.subr.mxu0 %v2306
    %2728 = vmatpush1.msra.mxu0 %v2305
    %2729 = vmatprep.subr.mxu0 %v2310
    %2730 = vmatpush1.msra.mxu0 %v2309
    %2731 = vmatprep.subr.mxu0 %v2314
    %2732 = vmatpush1.msra.mxu0 %v2313
    %2733 = vmatprep.subr.mxu0 %v2318
    %2734 = vmatpush1.msra.mxu0 %v2317
    %2735 = vmatprep.subr.mxu0 %v2322
    %2736 = vmatpush1.msra.mxu0 %v2321
    %2737 = vmatprep.subr.mxu0 %v2326
    %2738 = vmatpush1.msra.mxu0 %v2325
    %2739 = vmatprep.subr.mxu0 %v2330
    %2740 = vmatpush1.msra.mxu0 %v2329
    %2741 = vmatprep.subr.mxu0 %v2334
    %2742 = vmatpush1.msra.mxu0 %v2333
    %2743 = vmatprep.subr.mxu0 %v2338
    %2744 = vmatpush1.msra.mxu0 %v2337
    %2745 = vmatprep.subr.mxu0 %v2342
    %2746 = vmatpush1.msra.mxu0 %v2341
    %2747 = vmatprep.subr.mxu0 %v2346
    %2748 = vmatpush1.msra.mxu0 %v2345
    %2749 = vmatprep.subr.mxu0 %v2350
    %2750 = vmatpush1.msra.mxu0 %v2349
    %2751 = vmatprep.subr.mxu0 %v2354
    %2752 = vmatpush1.msra.mxu0 %v2353
    %2753 = vmatprep.subr.mxu0 %v2358
    %2754 = vmatpush1.msra.mxu0 %v2357
    %2755 = vmatprep.subr.mxu0 %v2362
    %2756 = vmatpush1.msra.mxu0 %v2361
    %2757 = vmatprep.subr.mxu0 %v2366
    %2758 = vmatpush1.msra.mxu0 %v2365
    %2759 = vmatprep.subr.mxu0 0.0
    %2760 = vmatpush1.msra.mxu0 0.0
    %2761 = vmatprep.subr.mxu0 0.0
    %2762 = vmatpush1.msra.mxu0 0.0
    %2763 = vmatprep.subr.mxu0 0.0
    %2764 = vmatpush1.msra.mxu0 0.0
    %2765 = vmatprep.subr.mxu0 0.0
    %2766 = vmatpush1.msra.mxu0 0.0
    %2767 = vmatprep.subr.mxu0 0.0
    %2768 = vmatpush1.msra.mxu0 0.0
    %2769 = vmatprep.subr.mxu0 0.0
    %2770 = vmatpush1.msra.mxu0 0.0
    %2771 = vmatprep.subr.mxu0 0.0
    %2772 = vmatpush1.msra.mxu0 0.0
    %2773 = vmatprep.subr.mxu0 0.0
    %2774 = vmatpush1.msra.mxu0 0.0
    %2775 = vmatprep.subr.mxu0 0.0
    %2776 = vmatpush1.msra.mxu0 0.0
    %2777 = vmatprep.subr.mxu0 0.0
    %2778 = vmatpush1.msra.mxu0 0.0
    %2779 = vmatprep.subr.mxu0 0.0
    %2780 = vmatpush1.msra.mxu0 0.0
    %2781 = vmatprep.subr.mxu0 0.0
    %2782 = vmatpush1.msra.mxu0 0.0
    %2783 = vmatprep.subr.mxu0 0.0
    %2784 = vmatpush1.msra.mxu0 0.0
    %2785 = vmatprep.subr.mxu0 0.0
    %2786 = vmatpush1.msra.mxu0 0.0
    %2787 = vmatprep.subr.mxu0 0.0
    %2788 = vmatpush1.msra.mxu0 0.0
    %2789 = vmatprep.subr.mxu0 0.0
    %2790 = vmatpush1.msra.mxu0 0.0
    %2791 = vmatprep.mubr.f32.mxu0 0.0
    %2792 = vmatmul.mubr.f32.gmra.mrb[0].mxu0 %v2721
    %v2793 = vpop.f32.mrb[0].mxu0
    %v2794 = vadd.f32 0.0, %v2793
    %v2795 = vpop.f32.mrb[0].mxu0
    %v2796 = vadd.f32 0.0, %v2795
    %2797 = vdwg.mxu0
    %2798 = vmatprep.subr.mxu0 %v2308
    %2799 = vmatpush1.msra.mxu0 %v2307
    %2800 = vmatprep.subr.mxu0 %v2312
    %2801 = vmatpush1.msra.mxu0 %v2311
    %2802 = vmatprep.subr.mxu0 %v2316
    %2803 = vmatpush1.msra.mxu0 %v2315
    %2804 = vmatprep.subr.mxu0 %v2320
    %2805 = vmatpush1.msra.mxu0 %v2319
    %2806 = vmatprep.subr.mxu0 %v2324
    %2807 = vmatpush1.msra.mxu0 %v2323
    %2808 = vmatprep.subr.mxu0 %v2328
    %2809 = vmatpush1.msra.mxu0 %v2327
    %2810 = vmatprep.subr.mxu0 %v2332
    %2811 = vmatpush1.msra.mxu0 %v2331
    %2812 = vmatprep.subr.mxu0 %v2336
    %2813 = vmatpush1.msra.mxu0 %v2335
    %2814 = vmatprep.subr.mxu0 %v2340
    %2815 = vmatpush1.msra.mxu0 %v2339
    %2816 = vmatprep.subr.mxu0 %v2344
    %2817 = vmatpush1.msra.mxu0 %v2343
    %2818 = vmatprep.subr.mxu0 %v2348
    %2819 = vmatpush1.msra.mxu0 %v2347
    %2820 = vmatprep.subr.mxu0 %v2352
    %2821 = vmatpush1.msra.mxu0 %v2351
    %2822 = vmatprep.subr.mxu0 %v2356
    %2823 = vmatpush1.msra.mxu0 %v2355
    %2824 = vmatprep.subr.mxu0 %v2360
    %2825 = vmatpush1.msra.mxu0 %v2359
    %2826 = vmatprep.subr.mxu0 %v2364
    %2827 = vmatpush1.msra.mxu0 %v2363
    %2828 = vmatprep.subr.mxu0 %v2368
    %2829 = vmatpush1.msra.mxu0 %v2367
    %2830 = vmatprep.subr.mxu0 0.0
    %2831 = vmatpush1.msra.mxu0 0.0
    %2832 = vmatprep.subr.mxu0 0.0
    %2833 = vmatpush1.msra.mxu0 0.0
    %2834 = vmatprep.subr.mxu0 0.0
    %2835 = vmatpush1.msra.mxu0 0.0
    %2836 = vmatprep.subr.mxu0 0.0
    %2837 = vmatpush1.msra.mxu0 0.0
    %2838 = vmatprep.subr.mxu0 0.0
    %2839 = vmatpush1.msra.mxu0 0.0
    %2840 = vmatprep.subr.mxu0 0.0
    %2841 = vmatpush1.msra.mxu0 0.0
    %2842 = vmatprep.subr.mxu0 0.0
    %2843 = vmatpush1.msra.mxu0 0.0
    %2844 = vmatprep.subr.mxu0 0.0
    %2845 = vmatpush1.msra.mxu0 0.0
    %2846 = vmatprep.subr.mxu0 0.0
    %2847 = vmatpush1.msra.mxu0 0.0
    %2848 = vmatprep.subr.mxu0 0.0
    %2849 = vmatpush1.msra.mxu0 0.0
    %2850 = vmatprep.subr.mxu0 0.0
    %2851 = vmatpush1.msra.mxu0 0.0
    %2852 = vmatprep.subr.mxu0 0.0
    %2853 = vmatpush1.msra.mxu0 0.0
    %2854 = vmatprep.subr.mxu0 0.0
    %2855 = vmatpush1.msra.mxu0 0.0
    %2856 = vmatprep.subr.mxu0 0.0
    %2857 = vmatpush1.msra.mxu0 0.0
    %2858 = vmatprep.subr.mxu0 0.0
    %2859 = vmatpush1.msra.mxu0 0.0
    %2860 = vmatprep.subr.mxu0 0.0
    %2861 = vmatpush1.msra.mxu0 0.0
    %2862 = vmatprep.mubr.f32.mxu0 0.0
    %2863 = vmatmul.mubr.f32.gmra.mrb[0].mxu0 %v2721
    %v2864 = vpop.f32.mrb[0].mxu0
    %v2865 = vadd.f32 0.0, %v2864
    %v2866 = vpop.f32.mrb[0].mxu0
    %v2867 = vadd.f32 0.0, %v2866
    %2868 = vdwg.mxu0
    %v2869 = vadd.f32 %v2723, %v2794
    %v2870 = vadd.f32 %v2724, %v2796
    %v2871 = vadd.f32 %v2725, %v2865
    %v2872 = vadd.f32 %v2726, %v2867
    %v2873 = vxor.u32 %v2869, 2147483648
    %v2874 = vmul.f32 %v2873, 1.442695
    %v2875 = vpow.pop %v2874
    %v2876 = vadd.f32 %v2875, 1.0
    %v2877 = vrcp.pop %v2876
    %v2878 = vmul.f32 1.0, %v2877
    %v2879 = vxor.u32 %v2870, 2147483648
    %v2880 = vmul.f32 %v2879, 1.442695
    %v2881 = vpow.pop %v2880
    %v2882 = vadd.f32 %v2881, 1.0
    %v2883 = vrcp.pop %v2882
    %v2884 = vmul.f32 1.0, %v2883
    %v2885 = vtanh.pop %v2871
    %v2886 = vxor.u32 %v2872, 2147483648
    %v2887 = vmul.f32 %v2886, 1.442695
    %v2888 = vpow.pop %v2887
    %v2889 = vadd.f32 %v2888, 1.0
    %v2890 = vrcp.pop %v2889
    %v2891 = vmul.f32 1.0, %v2890
    %v2892 = vmul.f32 %v2884, %v2719
    %v2893 = vmul.f32 %v2878, %v2885
    %v2894 = vadd.f32 %v2892, %v2893
    %v2895 = vtanh.pop %v2894
    %v2896 = vmul.f32 %v2891, %v2895
    %2897 = vst [vmem:[%s1061] sm:$0xff] %v2896
    %v2898 = vld [vmem:[%s1063] sm:$0xff]
    %v2899 = vld [vmem:[%s1063 + $0x8] sm:$0xff]
    %v2900 = vld [vmem:[%s1063 + $0x10] sm:$0xff]
    %v2901 = vld [vmem:[%s1063 + $0x18] sm:$0xff]
    %2902 = vmatprep.subr.mxu0 %v2306
    %2903 = vmatpush1.msra.mxu0 %v2305
    %2904 = vmatprep.subr.mxu0 %v2310
    %2905 = vmatpush1.msra.mxu0 %v2309
    %2906 = vmatprep.subr.mxu0 %v2314
    %2907 = vmatpush1.msra.mxu0 %v2313
    %2908 = vmatprep.subr.mxu0 %v2318
    %2909 = vmatpush1.msra.mxu0 %v2317
    %2910 = vmatprep.subr.mxu0 %v2322
    %2911 = vmatpush1.msra.mxu0 %v2321
    %2912 = vmatprep.subr.mxu0 %v2326
    %2913 = vmatpush1.msra.mxu0 %v2325
    %2914 = vmatprep.subr.mxu0 %v2330
    %2915 = vmatpush1.msra.mxu0 %v2329
    %2916 = vmatprep.subr.mxu0 %v2334
    %2917 = vmatpush1.msra.mxu0 %v2333
    %2918 = vmatprep.subr.mxu0 %v2338
    %2919 = vmatpush1.msra.mxu0 %v2337
    %2920 = vmatprep.subr.mxu0 %v2342
    %2921 = vmatpush1.msra.mxu0 %v2341
    %2922 = vmatprep.subr.mxu0 %v2346
    %2923 = vmatpush1.msra.mxu0 %v2345
    %2924 = vmatprep.subr.mxu0 %v2350
    %2925 = vmatpush1.msra.mxu0 %v2349
    %2926 = vmatprep.subr.mxu0 %v2354
    %2927 = vmatpush1.msra.mxu0 %v2353
    %2928 = vmatprep.subr.mxu0 %v2358
    %2929 = vmatpush1.msra.mxu0 %v2357
    %2930 = vmatprep.subr.mxu0 %v2362
    %2931 = vmatpush1.msra.mxu0 %v2361
    %2932 = vmatprep.subr.mxu0 %v2366
    %2933 = vmatpush1.msra.mxu0 %v2365
    %2934 = vmatprep.subr.mxu0 0.0
    %2935 = vmatpush1.msra.mxu0 0.0
    %2936 = vmatprep.subr.mxu0 0.0
    %2937 = vmatpush1.msra.mxu0 0.0
    %2938 = vmatprep.subr.mxu0 0.0
    %2939 = vmatpush1.msra.mxu0 0.0
    %2940 = vmatprep.subr.mxu0 0.0
    %2941 = vmatpush1.msra.mxu0 0.0
    %2942 = vmatprep.subr.mxu0 0.0
    %2943 = vmatpush1.msra.mxu0 0.0
    %2944 = vmatprep.subr.mxu0 0.0
    %2945 = vmatpush1.msra.mxu0 0.0
    %2946 = vmatprep.subr.mxu0 0.0
    %2947 = vmatpush1.msra.mxu0 0.0
    %2948 = vmatprep.subr.mxu0 0.0
    %2949 = vmatpush1.msra.mxu0 0.0
    %2950 = vmatprep.subr.mxu0 0.0
    %2951 = vmatpush1.msra.mxu0 0.0
    %2952 = vmatprep.subr.mxu0 0.0
    %2953 = vmatpush1.msra.mxu0 0.0
    %2954 = vmatprep.subr.mxu0 0.0
    %2955 = vmatpush1.msra.mxu0 0.0
    %2956 = vmatprep.subr.mxu0 0.0
    %2957 = vmatpush1.msra.mxu0 0.0
    %2958 = vmatprep.subr.mxu0 0.0
    %2959 = vmatpush1.msra.mxu0 0.0
    %2960 = vmatprep.subr.mxu0 0.0
    %2961 = vmatpush1.msra.mxu0 0.0
    %2962 = vmatprep.subr.mxu0 0.0
    %2963 = vmatpush1.msra.mxu0 0.0
    %2964 = vmatprep.subr.mxu0 0.0
    %2965 = vmatpush1.msra.mxu0 0.0
    %2966 = vmatprep.mubr.f32.mxu0 0.0
    %2967 = vmatmul.mubr.f32.gmra.mrb[0].mxu0 %v2896
    %v2968 = vpop.f32.mrb[0].mxu0
    %v2969 = vadd.f32 0.0, %v2968
    %v2970 = vpop.f32.mrb[0].mxu0
    %v2971 = vadd.f32 0.0, %v2970
    %2972 = vdwg.mxu0
    %2973 = vmatprep.subr.mxu0 %v2308
    %2974 = vmatpush1.msra.mxu0 %v2307
    %2975 = vmatprep.subr.mxu0 %v2312
    %2976 = vmatpush1.msra.mxu0 %v2311
    %2977 = vmatprep.subr.mxu0 %v2316
    %2978 = vmatpush1.msra.mxu0 %v2315
    %2979 = vmatprep.subr.mxu0 %v2320
    %2980 = vmatpush1.msra.mxu0 %v2319
    %2981 = vmatprep.subr.mxu0 %v2324
    %2982 = vmatpush1.msra.mxu0 %v2323
    %2983 = vmatprep.subr.mxu0 %v2328
    %2984 = vmatpush1.msra.mxu0 %v2327
    %2985 = vmatprep.subr.mxu0 %v2332
    %2986 = vmatpush1.msra.mxu0 %v2331
    %2987 = vmatprep.subr.mxu0 %v2336
    %2988 = vmatpush1.msra.mxu0 %v2335
    %2989 = vmatprep.subr.mxu0 %v2340
    %2990 = vmatpush1.msra.mxu0 %v2339
    %2991 = vmatprep.subr.mxu0 %v2344
    %2992 = vmatpush1.msra.mxu0 %v2343
    %2993 = vmatprep.subr.mxu0 %v2348
    %2994 = vmatpush1.msra.mxu0 %v2347
    %2995 = vmatprep.subr.mxu0 %v2352
    %2996 = vmatpush1.msra.mxu0 %v2351
    %2997 = vmatprep.subr.mxu0 %v2356
    %2998 = vmatpush1.msra.mxu0 %v2355
    %2999 = vmatprep.subr.mxu0 %v2360
    %3000 = vmatpush1.msra.mxu0 %v2359
    %3001 = vmatprep.subr.mxu0 %v2364
    %3002 = vmatpush1.msra.mxu0 %v2363
    %3003 = vmatprep.subr.mxu0 %v2368
    %3004 = vmatpush1.msra.mxu0 %v2367
    %3005 = vmatprep.subr.mxu0 0.0
    %3006 = vmatpush1.msra.mxu0 0.0
    %3007 = vmatprep.subr.mxu0 0.0
    %3008 = vmatpush1.msra.mxu0 0.0
    %3009 = vmatprep.subr.mxu0 0.0
    %3010 = vmatpush1.msra.mxu0 0.0
    %3011 = vmatprep.subr.mxu0 0.0
    %3012 = vmatpush1.msra.mxu0 0.0
    %3013 = vmatprep.subr.mxu0 0.0
    %3014 = vmatpush1.msra.mxu0 0.0
    %3015 = vmatprep.subr.mxu0 0.0
    %3016 = vmatpush1.msra.mxu0 0.0
    %3017 = vmatprep.subr.mxu0 0.0
    %3018 = vmatpush1.msra.mxu0 0.0
    %3019 = vmatprep.subr.mxu0 0.0
    %3020 = vmatpush1.msra.mxu0 0.0
    %3021 = vmatprep.subr.mxu0 0.0
    %3022 = vmatpush1.msra.mxu0 0.0
    %3023 = vmatprep.subr.mxu0 0.0
    %3024 = vmatpush1.msra.mxu0 0.0
    %3025 = vmatprep.subr.mxu0 0.0
    %3026 = vmatpush1.msra.mxu0 0.0
    %3027 = vmatprep.subr.mxu0 0.0
    %3028 = vmatpush1.msra.mxu0 0.0
    %3029 = vmatprep.subr.mxu0 0.0
    %3030 = vmatpush1.msra.mxu0 0.0
    %3031 = vmatprep.subr.mxu0 0.0
    %3032 = vmatpush1.msra.mxu0 0.0
    %3033 = vmatprep.subr.mxu0 0.0
    %3034 = vmatpush1.msra.mxu0 0.0
    %3035 = vmatprep.subr.mxu0 0.0
    %3036 = vmatpush1.msra.mxu0 0.0
    %3037 = vmatprep.mubr.f32.mxu0 0.0
    %3038 = vmatmul.mubr.f32.gmra.mrb[0].mxu0 %v2896
    %v3039 = vpop.f32.mrb[0].mxu0
    %v3040 = vadd.f32 0.0, %v3039
    %v3041 = vpop.f32.mrb[0].mxu0
    %v3042 = vadd.f32 0.0, %v3041
    %3043 = vdwg.mxu0
    %v3044 = vadd.f32 %v2898, %v2969
    %v3045 = vadd.f32 %v2899, %v2971
    %v3046 = vadd.f32 %v2900, %v3040
    %v3047 = vadd.f32 %v2901, %v3042
    %v3048 = vxor.u32 %v3044, 2147483648
    %v3049 = vmul.f32 %v3048, 1.442695
    %v3050 = vpow.pop %v3049
    %v3051 = vadd.f32 %v3050, 1.0
    %v3052 = vrcp.pop %v3051
    %v3053 = vmul.f32 1.0, %v3052
    %v3054 = vxor.u32 %v3045, 2147483648
    %v3055 = vmul.f32 %v3054, 1.442695
    %v3056 = vpow.pop %v3055
    %v3057 = vadd.f32 %v3056, 1.0
    %v3058 = vrcp.pop %v3057
    %v3059 = vmul.f32 1.0, %v3058
    %v3060 = vtanh.pop %v3046
    %v3061 = vxor.u32 %v3047, 2147483648
    %v3062 = vmul.f32 %v3061, 1.442695
    %v3063 = vpow.pop %v3062
    %v3064 = vadd.f32 %v3063, 1.0
    %v3065 = vrcp.pop %v3064
    %v3066 = vmul.f32 1.0, %v3065
    %v3067 = vmul.f32 %v3059, %v2894
    %v3068 = vmul.f32 %v3053, %v3060
    %v3069 = vadd.f32 %v3067, %v3068
    %v3070 = vtanh.pop %v3069
    %v3071 = vmul.f32 %v3066, %v3070
    %3072 = vst [vmem:[%s1238] sm:$0xff] %v3071
    %v3073 = vld [vmem:[%s1240] sm:$0xff]
    %v3074 = vld [vmem:[%s1240 + $0x8] sm:$0xff]
    %v3075 = vld [vmem:[%s1240 + $0x10] sm:$0xff]
    %v3076 = vld [vmem:[%s1240 + $0x18] sm:$0xff]
    %3077 = vmatprep.subr.mxu0 %v2306
    %3078 = vmatpush1.msra.mxu0 %v2305
    %3079 = vmatprep.subr.mxu0 %v2310
    %3080 = vmatpush1.msra.mxu0 %v2309
    %3081 = vmatprep.subr.mxu0 %v2314
    %3082 = vmatpush1.msra.mxu0 %v2313
    %3083 = vmatprep.subr.mxu0 %v2318
    %3084 = vmatpush1.msra.mxu0 %v2317
    %3085 = vmatprep.subr.mxu0 %v2322
    %3086 = vmatpush1.msra.mxu0 %v2321
    %3087 = vmatprep.subr.mxu0 %v2326
    %3088 = vmatpush1.msra.mxu0 %v2325
    %3089 = vmatprep.subr.mxu0 %v2330
    %3090 = vmatpush1.msra.mxu0 %v2329
    %3091 = vmatprep.subr.mxu0 %v2334
    %3092 = vmatpush1.msra.mxu0 %v2333
    %3093 = vmatprep.subr.mxu0 %v2338
    %3094 = vmatpush1.msra.mxu0 %v2337
    %3095 = vmatprep.subr.mxu0 %v2342
    %3096 = vmatpush1.msra.mxu0 %v2341
    %3097 = vmatprep.subr.mxu0 %v2346
    %3098 = vmatpush1.msra.mxu0 %v2345
    %3099 = vmatprep.subr.mxu0 %v2350
    %3100 = vmatpush1.msra.mxu0 %v2349
    %3101 = vmatprep.subr.mxu0 %v2354
    %3102 = vmatpush1.msra.mxu0 %v2353
    %3103 = vmatprep.subr.mxu0 %v2358
    %3104 = vmatpush1.msra.mxu0 %v2357
    %3105 = vmatprep.subr.mxu0 %v2362
    %3106 = vmatpush1.msra.mxu0 %v2361
    %3107 = vmatprep.subr.mxu0 %v2366
    %3108 = vmatpush1.msra.mxu0 %v2365
    %3109 = vmatprep.subr.mxu0 0.0
    %3110 = vmatpush1.msra.mxu0 0.0
    %3111 = vmatprep.subr.mxu0 0.0
    %3112 = vmatpush1.msra.mxu0 0.0
    %3113 = vmatprep.subr.mxu0 0.0
    %3114 = vmatpush1.msra.mxu0 0.0
    %3115 = vmatprep.subr.mxu0 0.0
    %3116 = vmatpush1.msra.mxu0 0.0
    %3117 = vmatprep.subr.mxu0 0.0
    %3118 = vmatpush1.msra.mxu0 0.0
    %3119 = vmatprep.subr.mxu0 0.0
    %3120 = vmatpush1.msra.mxu0 0.0
    %3121 = vmatprep.subr.mxu0 0.0
    %3122 = vmatpush1.msra.mxu0 0.0
    %3123 = vmatprep.subr.mxu0 0.0
    %3124 = vmatpush1.msra.mxu0 0.0
    %3125 = vmatprep.subr.mxu0 0.0
    %3126 = vmatpush1.msra.mxu0 0.0
    %3127 = vmatprep.subr.mxu0 0.0
    %3128 = vmatpush1.msra.mxu0 0.0
    %3129 = vmatprep.subr.mxu0 0.0
    %3130 = vmatpush1.msra.mxu0 0.0
    %3131 = vmatprep.subr.mxu0 0.0
    %3132 = vmatpush1.msra.mxu0 0.0
    %3133 = vmatprep.subr.mxu0 0.0
    %3134 = vmatpush1.msra.mxu0 0.0
    %3135 = vmatprep.subr.mxu0 0.0
    %3136 = vmatpush1.msra.mxu0 0.0
    %3137 = vmatprep.subr.mxu0 0.0
    %3138 = vmatpush1.msra.mxu0 0.0
    %3139 = vmatprep.subr.mxu0 0.0
    %3140 = vmatpush1.msra.mxu0 0.0
    %3141 = vmatprep.mubr.f32.mxu0 0.0
    %3142 = vmatmul.mubr.f32.gmra.mrb[0].mxu0 %v3071
    %v3143 = vpop.f32.mrb[0].mxu0
    %v3144 = vadd.f32 0.0, %v3143
    %v3145 = vpop.f32.mrb[0].mxu0
    %v3146 = vadd.f32 0.0, %v3145
    %3147 = vdwg.mxu0
    %3148 = vmatprep.subr.mxu0 %v2308
    %3149 = vmatpush1.msra.mxu0 %v2307
    %3150 = vmatprep.subr.mxu0 %v2312
    %3151 = vmatpush1.msra.mxu0 %v2311
    %3152 = vmatprep.subr.mxu0 %v2316
    %3153 = vmatpush1.msra.mxu0 %v2315
    %3154 = vmatprep.subr.mxu0 %v2320
    %3155 = vmatpush1.msra.mxu0 %v2319
    %3156 = vmatprep.subr.mxu0 %v2324
    %3157 = vmatpush1.msra.mxu0 %v2323
    %3158 = vmatprep.subr.mxu0 %v2328
    %3159 = vmatpush1.msra.mxu0 %v2327
    %3160 = vmatprep.subr.mxu0 %v2332
    %3161 = vmatpush1.msra.mxu0 %v2331
    %3162 = vmatprep.subr.mxu0 %v2336
    %3163 = vmatpush1.msra.mxu0 %v2335
    %3164 = vmatprep.subr.mxu0 %v2340
    %3165 = vmatpush1.msra.mxu0 %v2339
    %3166 = vmatprep.subr.mxu0 %v2344
    %3167 = vmatpush1.msra.mxu0 %v2343
    %3168 = vmatprep.subr.mxu0 %v2348
    %3169 = vmatpush1.msra.mxu0 %v2347
    %3170 = vmatprep.subr.mxu0 %v2352
    %3171 = vmatpush1.msra.mxu0 %v2351
    %3172 = vmatprep.subr.mxu0 %v2356
    %3173 = vmatpush1.msra.mxu0 %v2355
    %3174 = vmatprep.subr.mxu0 %v2360
    %3175 = vmatpush1.msra.mxu0 %v2359
    %3176 = vmatprep.subr.mxu0 %v2364
    %3177 = vmatpush1.msra.mxu0 %v2363
    %3178 = vmatprep.subr.mxu0 %v2368
    %3179 = vmatpush1.msra.mxu0 %v2367
    %3180 = vmatprep.subr.mxu0 0.0
    %3181 = vmatpush1.msra.mxu0 0.0
    %3182 = vmatprep.subr.mxu0 0.0
    %3183 = vmatpush1.msra.mxu0 0.0
    %3184 = vmatprep.subr.mxu0 0.0
    %3185 = vmatpush1.msra.mxu0 0.0
    %3186 = vmatprep.subr.mxu0 0.0
    %3187 = vmatpush1.msra.mxu0 0.0
    %3188 = vmatprep.subr.mxu0 0.0
    %3189 = vmatpush1.msra.mxu0 0.0
    %3190 = vmatprep.subr.mxu0 0.0
    %3191 = vmatpush1.msra.mxu0 0.0
    %3192 = vmatprep.subr.mxu0 0.0
    %3193 = vmatpush1.msra.mxu0 0.0
    %3194 = vmatprep.subr.mxu0 0.0
    %3195 = vmatpush1.msra.mxu0 0.0
    %3196 = vmatprep.subr.mxu0 0.0
    %3197 = vmatpush1.msra.mxu0 0.0
    %3198 = vmatprep.subr.mxu0 0.0
    %3199 = vmatpush1.msra.mxu0 0.0
    %3200 = vmatprep.subr.mxu0 0.0
    %3201 = vmatpush1.msra.mxu0 0.0
    %3202 = vmatprep.subr.mxu0 0.0
    %3203 = vmatpush1.msra.mxu0 0.0
    %3204 = vmatprep.subr.mxu0 0.0
    %3205 = vmatpush1.msra.mxu0 0.0
    %3206 = vmatprep.subr.mxu0 0.0
    %3207 = vmatpush1.msra.mxu0 0.0
    %3208 = vmatprep.subr.mxu0 0.0
    %3209 = vmatpush1.msra.mxu0 0.0
    %3210 = vmatprep.subr.mxu0 0.0
    %3211 = vmatpush1.msra.mxu0 0.0
    %3212 = vmatprep.mubr.f32.mxu0 0.0
    %3213 = vmatmul.mubr.f32.gmra.mrb[0].mxu0 %v3071
    %v3214 = vpop.f32.mrb[0].mxu0
    %v3215 = vadd.f32 0.0, %v3214
    %v3216 = vpop.f32.mrb[0].mxu0
    %v3217 = vadd.f32 0.0, %v3216
    %3218 = vdwg.mxu0
    %v3219 = vadd.f32 %v3073, %v3144
    %v3220 = vadd.f32 %v3074, %v3146
    %v3221 = vadd.f32 %v3075, %v3215
    %v3222 = vadd.f32 %v3076, %v3217
    %v3223 = vxor.u32 %v3219, 2147483648
    %v3224 = vmul.f32 %v3223, 1.442695
    %v3225 = vpow.pop %v3224
    %v3226 = vadd.f32 %v3225, 1.0
    %v3227 = vrcp.pop %v3226
    %v3228 = vmul.f32 1.0, %v3227
    %v3229 = vxor.u32 %v3220, 2147483648
    %v3230 = vmul.f32 %v3229, 1.442695
    %v3231 = vpow.pop %v3230
    %v3232 = vadd.f32 %v3231, 1.0
    %v3233 = vrcp.pop %v3232
    %v3234 = vmul.f32 1.0, %v3233
    %v3235 = vtanh.pop %v3221
    %v3236 = vxor.u32 %v3222, 2147483648
    %v3237 = vmul.f32 %v3236, 1.442695
    %v3238 = vpow.pop %v3237
    %v3239 = vadd.f32 %v3238, 1.0
    %v3240 = vrcp.pop %v3239
    %v3241 = vmul.f32 1.0, %v3240
    %v3242 = vmul.f32 %v3234, %v3069
    %v3243 = vmul.f32 %v3228, %v3235
    %v3244 = vadd.f32 %v3242, %v3243
    %v3245 = vtanh.pop %v3244
    %v3246 = vmul.f32 %v3241, %v3245
    %3247 = vst [vmem:[%s1415] sm:$0xff] %v3246
    %v3248 = vld [vmem:[%s1417] sm:$0xff]
    %v3249 = vld [vmem:[%s1417 + $0x8] sm:$0xff]
    %v3250 = vld [vmem:[%s1417 + $0x10] sm:$0xff]
    %v3251 = vld [vmem:[%s1417 + $0x18] sm:$0xff]
    %3252 = vmatprep.subr.mxu0 %v2306
    %3253 = vmatpush1.msra.mxu0 %v2305
    %3254 = vmatprep.subr.mxu0 %v2310
    %3255 = vmatpush1.msra.mxu0 %v2309
    %3256 = vmatprep.subr.mxu0 %v2314
    %3257 = vmatpush1.msra.mxu0 %v2313
    %3258 = vmatprep.subr.mxu0 %v2318
    %3259 = vmatpush1.msra.mxu0 %v2317
    %3260 = vmatprep.subr.mxu0 %v2322
    %3261 = vmatpush1.msra.mxu0 %v2321
    %3262 = vmatprep.subr.mxu0 %v2326
    %3263 = vmatpush1.msra.mxu0 %v2325
    %3264 = vmatprep.subr.mxu0 %v2330
    %3265 = vmatpush1.msra.mxu0 %v2329
    %3266 = vmatprep.subr.mxu0 %v2334
    %3267 = vmatpush1.msra.mxu0 %v2333
    %3268 = vmatprep.subr.mxu0 %v2338
    %3269 = vmatpush1.msra.mxu0 %v2337
    %3270 = vmatprep.subr.mxu0 %v2342
    %3271 = vmatpush1.msra.mxu0 %v2341
    %3272 = vmatprep.subr.mxu0 %v2346
    %3273 = vmatpush1.msra.mxu0 %v2345
    %3274 = vmatprep.subr.mxu0 %v2350
    %3275 = vmatpush1.msra.mxu0 %v2349
    %3276 = vmatprep.subr.mxu0 %v2354
    %3277 = vmatpush1.msra.mxu0 %v2353
    %3278 = vmatprep.subr.mxu0 %v2358
    %3279 = vmatpush1.msra.mxu0 %v2357
    %3280 = vmatprep.subr.mxu0 %v2362
    %3281 = vmatpush1.msra.mxu0 %v2361
    %3282 = vmatprep.subr.mxu0 %v2366
    %3283 = vmatpush1.msra.mxu0 %v2365
    %3284 = vmatprep.subr.mxu0 0.0
    %3285 = vmatpush1.msra.mxu0 0.0
    %3286 = vmatprep.subr.mxu0 0.0
    %3287 = vmatpush1.msra.mxu0 0.0
    %3288 = vmatprep.subr.mxu0 0.0
    %3289 = vmatpush1.msra.mxu0 0.0
    %3290 = vmatprep.subr.mxu0 0.0
    %3291 = vmatpush1.msra.mxu0 0.0
    %3292 = vmatprep.subr.mxu0 0.0
    %3293 = vmatpush1.msra.mxu0 0.0
    %3294 = vmatprep.subr.mxu0 0.0
    %3295 = vmatpush1.msra.mxu0 0.0
    %3296 = vmatprep.subr.mxu0 0.0
    %3297 = vmatpush1.msra.mxu0 0.0
    %3298 = vmatprep.subr.mxu0 0.0
    %3299 = vmatpush1.msra.mxu0 0.0
    %3300 = vmatprep.subr.mxu0 0.0
    %3301 = vmatpush1.msra.mxu0 0.0
    %3302 = vmatprep.subr.mxu0 0.0
    %3303 = vmatpush1.msra.mxu0 0.0
    %3304 = vmatprep.subr.mxu0 0.0
    %3305 = vmatpush1.msra.mxu0 0.0
    %3306 = vmatprep.subr.mxu0 0.0
    %3307 = vmatpush1.msra.mxu0 0.0
    %3308 = vmatprep.subr.mxu0 0.0
    %3309 = vmatpush1.msra.mxu0 0.0
    %3310 = vmatprep.subr.mxu0 0.0
    %3311 = vmatpush1.msra.mxu0 0.0
    %3312 = vmatprep.subr.mxu0 0.0
    %3313 = vmatpush1.msra.mxu0 0.0
    %3314 = vmatprep.subr.mxu0 0.0
    %3315 = vmatpush1.msra.mxu0 0.0
    %3316 = vmatprep.mubr.f32.mxu0 0.0
    %3317 = vmatmul.mubr.f32.gmra.mrb[0].mxu0 %v3246
    %v3318 = vpop.f32.mrb[0].mxu0
    %v3319 = vadd.f32 0.0, %v3318
    %v3320 = vpop.f32.mrb[0].mxu0
    %v3321 = vadd.f32 0.0, %v3320
    %3322 = vdwg.mxu0
    %3323 = vmatprep.subr.mxu0 %v2308
    %3324 = vmatpush1.msra.mxu0 %v2307
    %3325 = vmatprep.subr.mxu0 %v2312
    %3326 = vmatpush1.msra.mxu0 %v2311
    %3327 = vmatprep.subr.mxu0 %v2316
    %3328 = vmatpush1.msra.mxu0 %v2315
    %3329 = vmatprep.subr.mxu0 %v2320
    %3330 = vmatpush1.msra.mxu0 %v2319
    %3331 = vmatprep.subr.mxu0 %v2324
    %3332 = vmatpush1.msra.mxu0 %v2323
    %3333 = vmatprep.subr.mxu0 %v2328
    %3334 = vmatpush1.msra.mxu0 %v2327
    %3335 = vmatprep.subr.mxu0 %v2332
    %3336 = vmatpush1.msra.mxu0 %v2331
    %3337 = vmatprep.subr.mxu0 %v2336
    %3338 = vmatpush1.msra.mxu0 %v2335
    %3339 = vmatprep.subr.mxu0 %v2340
    %3340 = vmatpush1.msra.mxu0 %v2339
    %3341 = vmatprep.subr.mxu0 %v2344
    %3342 = vmatpush1.msra.mxu0 %v2343
    %3343 = vmatprep.subr.mxu0 %v2348
    %3344 = vmatpush1.msra.mxu0 %v2347
    %3345 = vmatprep.subr.mxu0 %v2352
    %3346 = vmatpush1.msra.mxu0 %v2351
    %3347 = vmatprep.subr.mxu0 %v2356
    %3348 = vmatpush1.msra.mxu0 %v2355
    %3349 = vmatprep.subr.mxu0 %v2360
    %3350 = vmatpush1.msra.mxu0 %v2359
    %3351 = vmatprep.subr.mxu0 %v2364
    %3352 = vmatpush1.msra.mxu0 %v2363
    %3353 = vmatprep.subr.mxu0 %v2368
    %3354 = vmatpush1.msra.mxu0 %v2367
    %3355 = vmatprep.subr.mxu0 0.0
    %3356 = vmatpush1.msra.mxu0 0.0
    %3357 = vmatprep.subr.mxu0 0.0
    %3358 = vmatpush1.msra.mxu0 0.0
    %3359 = vmatprep.subr.mxu0 0.0
    %3360 = vmatpush1.msra.mxu0 0.0
    %3361 = vmatprep.subr.mxu0 0.0
    %3362 = vmatpush1.msra.mxu0 0.0
    %3363 = vmatprep.subr.mxu0 0.0
    %3364 = vmatpush1.msra.mxu0 0.0
    %3365 = vmatprep.subr.mxu0 0.0
    %3366 = vmatpush1.msra.mxu0 0.0
    %3367 = vmatprep.subr.mxu0 0.0
    %3368 = vmatpush1.msra.mxu0 0.0
    %3369 = vmatprep.subr.mxu0 0.0
    %3370 = vmatpush1.msra.mxu0 0.0
    %3371 = vmatprep.subr.mxu0 0.0
    %3372 = vmatpush1.msra.mxu0 0.0
    %3373 = vmatprep.subr.mxu0 0.0
    %3374 = vmatpush1.msra.mxu0 0.0
    %3375 = vmatprep.subr.mxu0 0.0
    %3376 = vmatpush1.msra.mxu0 0.0
    %3377 = vmatprep.subr.mxu0 0.0
    %3378 = vmatpush1.msra.mxu0 0.0
    %3379 = vmatprep.subr.mxu0 0.0
    %3380 = vmatpush1.msra.mxu0 0.0
    %3381 = vmatprep.subr.mxu0 0.0
    %3382 = vmatpush1.msra.mxu0 0.0
    %3383 = vmatprep.subr.mxu0 0.0
    %3384 = vmatpush1.msra.mxu0 0.0
    %3385 = vmatprep.subr.mxu0 0.0
    %3386 = vmatpush1.msra.mxu0 0.0
    %3387 = vmatprep.mubr.f32.mxu0 0.0
    %3388 = vmatmul.mubr.f32.gmra.mrb[0].mxu0 %v3246
    %v3389 = vpop.f32.mrb[0].mxu0
    %v3390 = vadd.f32 0.0, %v3389
    %v3391 = vpop.f32.mrb[0].mxu0
    %v3392 = vadd.f32 0.0, %v3391
    %3393 = vdwg.mxu0
    %v3394 = vadd.f32 %v3248, %v3319
    %v3395 = vadd.f32 %v3249, %v3321
    %v3396 = vadd.f32 %v3250, %v3390
    %v3397 = vadd.f32 %v3251, %v3392
    %v3398 = vxor.u32 %v3394, 2147483648
    %v3399 = vmul.f32 %v3398, 1.442695
    %v3400 = vpow.pop %v3399
    %v3401 = vadd.f32 %v3400, 1.0
    %v3402 = vrcp.pop %v3401
    %v3403 = vmul.f32 1.0, %v3402
    %v3404 = vxor.u32 %v3395, 2147483648
    %v3405 = vmul.f32 %v3404, 1.442695
    %v3406 = vpow.pop %v3405
    %v3407 = vadd.f32 %v3406, 1.0
    %v3408 = vrcp.pop %v3407
    %v3409 = vmul.f32 1.0, %v3408
    %v3410 = vtanh.pop %v3396
    %v3411 = vxor.u32 %v3397, 2147483648
    %v3412 = vmul.f32 %v3411, 1.442695
    %v3413 = vpow.pop %v3412
    %v3414 = vadd.f32 %v3413, 1.0
    %v3415 = vrcp.pop %v3414
    %v3416 = vmul.f32 1.0, %v3415
    %v3417 = vmul.f32 %v3409, %v3244
    %v3418 = vmul.f32 %v3403, %v3410
    %v3419 = vadd.f32 %v3417, %v3418
    %v3420 = vtanh.pop %v3419
    %v3421 = vmul.f32 %v3416, %v3420
    %3422 = vst [vmem:[%s1592] sm:$0xff] %v3421
    %v3423 = vld [vmem:[%s1594] sm:$0xff]
    %v3424 = vld [vmem:[%s1594 + $0x8] sm:$0xff]
    %v3425 = vld [vmem:[%s1594 + $0x10] sm:$0xff]
    %v3426 = vld [vmem:[%s1594 + $0x18] sm:$0xff]
    %3427 = vmatprep.subr.mxu0 %v2306
    %3428 = vmatpush1.msra.mxu0 %v2305
    %3429 = vmatprep.subr.mxu0 %v2310
    %3430 = vmatpush1.msra.mxu0 %v2309
    %3431 = vmatprep.subr.mxu0 %v2314
    %3432 = vmatpush1.msra.mxu0 %v2313
    %3433 = vmatprep.subr.mxu0 %v2318
    %3434 = vmatpush1.msra.mxu0 %v2317
    %3435 = vmatprep.subr.mxu0 %v2322
    %3436 = vmatpush1.msra.mxu0 %v2321
    %3437 = vmatprep.subr.mxu0 %v2326
    %3438 = vmatpush1.msra.mxu0 %v2325
    %3439 = vmatprep.subr.mxu0 %v2330
    %3440 = vmatpush1.msra.mxu0 %v2329
    %3441 = vmatprep.subr.mxu0 %v2334
    %3442 = vmatpush1.msra.mxu0 %v2333
    %3443 = vmatprep.subr.mxu0 %v2338
    %3444 = vmatpush1.msra.mxu0 %v2337
    %3445 = vmatprep.subr.mxu0 %v2342
    %3446 = vmatpush1.msra.mxu0 %v2341
    %3447 = vmatprep.subr.mxu0 %v2346
    %3448 = vmatpush1.msra.mxu0 %v2345
    %3449 = vmatprep.subr.mxu0 %v2350
    %3450 = vmatpush1.msra.mxu0 %v2349
    %3451 = vmatprep.subr.mxu0 %v2354
    %3452 = vmatpush1.msra.mxu0 %v2353
    %3453 = vmatprep.subr.mxu0 %v2358
    %3454 = vmatpush1.msra.mxu0 %v2357
    %3455 = vmatprep.subr.mxu0 %v2362
    %3456 = vmatpush1.msra.mxu0 %v2361
    %3457 = vmatprep.subr.mxu0 %v2366
    %3458 = vmatpush1.msra.mxu0 %v2365
    %3459 = vmatprep.subr.mxu0 0.0
    %3460 = vmatpush1.msra.mxu0 0.0
    %3461 = vmatprep.subr.mxu0 0.0
    %3462 = vmatpush1.msra.mxu0 0.0
    %3463 = vmatprep.subr.mxu0 0.0
    %3464 = vmatpush1.msra.mxu0 0.0
    %3465 = vmatprep.subr.mxu0 0.0
    %3466 = vmatpush1.msra.mxu0 0.0
    %3467 = vmatprep.subr.mxu0 0.0
    %3468 = vmatpush1.msra.mxu0 0.0
    %3469 = vmatprep.subr.mxu0 0.0
    %3470 = vmatpush1.msra.mxu0 0.0
    %3471 = vmatprep.subr.mxu0 0.0
    %3472 = vmatpush1.msra.mxu0 0.0
    %3473 = vmatprep.subr.mxu0 0.0
    %3474 = vmatpush1.msra.mxu0 0.0
    %3475 = vmatprep.subr.mxu0 0.0
    %3476 = vmatpush1.msra.mxu0 0.0
    %3477 = vmatprep.subr.mxu0 0.0
    %3478 = vmatpush1.msra.mxu0 0.0
    %3479 = vmatprep.subr.mxu0 0.0
    %3480 = vmatpush1.msra.mxu0 0.0
    %3481 = vmatprep.subr.mxu0 0.0
    %3482 = vmatpush1.msra.mxu0 0.0
    %3483 = vmatprep.subr.mxu0 0.0
    %3484 = vmatpush1.msra.mxu0 0.0
    %3485 = vmatprep.subr.mxu0 0.0
    %3486 = vmatpush1.msra.mxu0 0.0
    %3487 = vmatprep.subr.mxu0 0.0
    %3488 = vmatpush1.msra.mxu0 0.0
    %3489 = vmatprep.subr.mxu0 0.0
    %3490 = vmatpush1.msra.mxu0 0.0
    %3491 = vmatprep.mubr.f32.mxu0 0.0
    %3492 = vmatmul.mubr.f32.gmra.mrb[0].mxu0 %v3421
    %v3493 = vpop.f32.mrb[0].mxu0
    %v3494 = vadd.f32 0.0, %v3493
    %v3495 = vpop.f32.mrb[0].mxu0
    %v3496 = vadd.f32 0.0, %v3495
    %3497 = vdwg.mxu0
    %3498 = vmatprep.subr.mxu0 %v2308
    %3499 = vmatpush1.msra.mxu0 %v2307
    %3500 = vmatprep.subr.mxu0 %v2312
    %3501 = vmatpush1.msra.mxu0 %v2311
    %3502 = vmatprep.subr.mxu0 %v2316
    %3503 = vmatpush1.msra.mxu0 %v2315
    %3504 = vmatprep.subr.mxu0 %v2320
    %3505 = vmatpush1.msra.mxu0 %v2319
    %3506 = vmatprep.subr.mxu0 %v2324
    %3507 = vmatpush1.msra.mxu0 %v2323
    %3508 = vmatprep.subr.mxu0 %v2328
    %3509 = vmatpush1.msra.mxu0 %v2327
    %3510 = vmatprep.subr.mxu0 %v2332
    %3511 = vmatpush1.msra.mxu0 %v2331
    %3512 = vmatprep.subr.mxu0 %v2336
    %3513 = vmatpush1.msra.mxu0 %v2335
    %3514 = vmatprep.subr.mxu0 %v2340
    %3515 = vmatpush1.msra.mxu0 %v2339
    %3516 = vmatprep.subr.mxu0 %v2344
    %3517 = vmatpush1.msra.mxu0 %v2343
    %3518 = vmatprep.subr.mxu0 %v2348
    %3519 = vmatpush1.msra.mxu0 %v2347
    %3520 = vmatprep.subr.mxu0 %v2352
    %3521 = vmatpush1.msra.mxu0 %v2351
    %3522 = vmatprep.subr.mxu0 %v2356
    %3523 = vmatpush1.msra.mxu0 %v2355
    %3524 = vmatprep.subr.mxu0 %v2360
    %3525 = vmatpush1.msra.mxu0 %v2359
    %3526 = vmatprep.subr.mxu0 %v2364
    %3527 = vmatpush1.msra.mxu0 %v2363
    %3528 = vmatprep.subr.mxu0 %v2368
    %3529 = vmatpush1.msra.mxu0 %v2367
    %3530 = vmatprep.subr.mxu0 0.0
    %3531 = vmatpush1.msra.mxu0 0.0
    %3532 = vmatprep.subr.mxu0 0.0
    %3533 = vmatpush1.msra.mxu0 0.0
    %3534 = vmatprep.subr.mxu0 0.0
    %3535 = vmatpush1.msra.mxu0 0.0
    %3536 = vmatprep.subr.mxu0 0.0
    %3537 = vmatpush1.msra.mxu0 0.0
    %3538 = vmatprep.subr.mxu0 0.0
    %3539 = vmatpush1.msra.mxu0 0.0
    %3540 = vmatprep.subr.mxu0 0.0
    %3541 = vmatpush1.msra.mxu0 0.0
    %3542 = vmatprep.subr.mxu0 0.0
    %3543 = vmatpush1.msra.mxu0 0.0
    %3544 = vmatprep.subr.mxu0 0.0
    %3545 = vmatpush1.msra.mxu0 0.0
    %3546 = vmatprep.subr.mxu0 0.0
    %3547 = vmatpush1.msra.mxu0 0.0
    %3548 = vmatprep.subr.mxu0 0.0
    %3549 = vmatpush1.msra.mxu0 0.0
    %3550 = vmatprep.subr.mxu0 0.0
    %3551 = vmatpush1.msra.mxu0 0.0
    %3552 = vmatprep.subr.mxu0 0.0
    %3553 = vmatpush1.msra.mxu0 0.0
    %3554 = vmatprep.subr.mxu0 0.0
    %3555 = vmatpush1.msra.mxu0 0.0
    %3556 = vmatprep.subr.mxu0 0.0
    %3557 = vmatpush1.msra.mxu0 0.0
    %3558 = vmatprep.subr.mxu0 0.0
    %3559 = vmatpush1.msra.mxu0 0.0
    %3560 = vmatprep.subr.mxu0 0.0
    %3561 = vmatpush1.msra.mxu0 0.0
    %3562 = vmatprep.mubr.f32.mxu0 0.0
    %3563 = vmatmul.mubr.f32.gmra.mrb[0].mxu0 %v3421
    %v3564 = vpop.f32.mrb[0].mxu0
    %v3565 = vadd.f32 0.0, %v3564
    %v3566 = vpop.f32.mrb[0].mxu0
    %v3567 = vadd.f32 0.0, %v3566
    %3568 = vdwg.mxu0
    %v3569 = vadd.f32 %v3423, %v3494
    %v3570 = vadd.f32 %v3424, %v3496
    %v3571 = vadd.f32 %v3425, %v3565
    %v3572 = vadd.f32 %v3426, %v3567
    %v3573 = vxor.u32 %v3569, 2147483648
    %v3574 = vmul.f32 %v3573, 1.442695
    %v3575 = vpow.pop %v3574
    %v3576 = vadd.f32 %v3575, 1.0
    %v3577 = vrcp.pop %v3576
    %v3578 = vmul.f32 1.0, %v3577
    %v3579 = vxor.u32 %v3570, 2147483648
    %v3580 = vmul.f32 %v3579, 1.442695
    %v3581 = vpow.pop %v3580
    %v3582 = vadd.f32 %v3581, 1.0
    %v3583 = vrcp.pop %v3582
    %v3584 = vmul.f32 1.0, %v3583
    %v3585 = vtanh.pop %v3571
    %v3586 = vxor.u32 %v3572, 2147483648
    %v3587 = vmul.f32 %v3586, 1.442695
    %v3588 = vpow.pop %v3587
    %v3589 = vadd.f32 %v3588, 1.0
    %v3590 = vrcp.pop %v3589
    %v3591 = vmul.f32 1.0, %v3590
    %v3592 = vmul.f32 %v3584, %v3419
    %v3593 = vmul.f32 %v3578, %v3585
    %v3594 = vadd.f32 %v3592, %v3593
    %v3595 = vtanh.pop %v3594
    %v3596 = vmul.f32 %v3591, %v3595
    %3597 = vst [vmem:[%s1769] sm:$0xff] %v3596
    %v3598 = vld [vmem:[%s1771] sm:$0xff]
    %v3599 = vld [vmem:[%s1771 + $0x8] sm:$0xff]
    %v3600 = vld [vmem:[%s1771 + $0x10] sm:$0xff]
    %v3601 = vld [vmem:[%s1771 + $0x18] sm:$0xff]
    %3602 = vmatprep.subr.mxu0 %v2306
    %3603 = vmatpush1.msra.mxu0 %v2305
    %3604 = vmatprep.subr.mxu0 %v2310
    %3605 = vmatpush1.msra.mxu0 %v2309
    %3606 = vmatprep.subr.mxu0 %v2314
    %3607 = vmatpush1.msra.mxu0 %v2313
    %3608 = vmatprep.subr.mxu0 %v2318
    %3609 = vmatpush1.msra.mxu0 %v2317
    %3610 = vmatprep.subr.mxu0 %v2322
    %3611 = vmatpush1.msra.mxu0 %v2321
    %3612 = vmatprep.subr.mxu0 %v2326
    %3613 = vmatpush1.msra.mxu0 %v2325
    %3614 = vmatprep.subr.mxu0 %v2330
    %3615 = vmatpush1.msra.mxu0 %v2329
    %3616 = vmatprep.subr.mxu0 %v2334
    %3617 = vmatpush1.msra.mxu0 %v2333
    %3618 = vmatprep.subr.mxu0 %v2338
    %3619 = vmatpush1.msra.mxu0 %v2337
    %3620 = vmatprep.subr.mxu0 %v2342
    %3621 = vmatpush1.msra.mxu0 %v2341
    %3622 = vmatprep.subr.mxu0 %v2346
    %3623 = vmatpush1.msra.mxu0 %v2345
    %3624 = vmatprep.subr.mxu0 %v2350
    %3625 = vmatpush1.msra.mxu0 %v2349
    %3626 = vmatprep.subr.mxu0 %v2354
    %3627 = vmatpush1.msra.mxu0 %v2353
    %3628 = vmatprep.subr.mxu0 %v2358
    %3629 = vmatpush1.msra.mxu0 %v2357
    %3630 = vmatprep.subr.mxu0 %v2362
    %3631 = vmatpush1.msra.mxu0 %v2361
    %3632 = vmatprep.subr.mxu0 %v2366
    %3633 = vmatpush1.msra.mxu0 %v2365
    %3634 = vmatprep.subr.mxu0 0.0
    %3635 = vmatpush1.msra.mxu0 0.0
    %3636 = vmatprep.subr.mxu0 0.0
    %3637 = vmatpush1.msra.mxu0 0.0
    %3638 = vmatprep.subr.mxu0 0.0
    %3639 = vmatpush1.msra.mxu0 0.0
    %3640 = vmatprep.subr.mxu0 0.0
    %3641 = vmatpush1.msra.mxu0 0.0
    %3642 = vmatprep.subr.mxu0 0.0
    %3643 = vmatpush1.msra.mxu0 0.0
    %3644 = vmatprep.subr.mxu0 0.0
    %3645 = vmatpush1.msra.mxu0 0.0
    %3646 = vmatprep.subr.mxu0 0.0
    %3647 = vmatpush1.msra.mxu0 0.0
    %3648 = vmatprep.subr.mxu0 0.0
    %3649 = vmatpush1.msra.mxu0 0.0
    %3650 = vmatprep.subr.mxu0 0.0
    %3651 = vmatpush1.msra.mxu0 0.0
    %3652 = vmatprep.subr.mxu0 0.0
    %3653 = vmatpush1.msra.mxu0 0.0
    %3654 = vmatprep.subr.mxu0 0.0
    %3655 = vmatpush1.msra.mxu0 0.0
    %3656 = vmatprep.subr.mxu0 0.0
    %3657 = vmatpush1.msra.mxu0 0.0
    %3658 = vmatprep.subr.mxu0 0.0
    %3659 = vmatpush1.msra.mxu0 0.0
    %3660 = vmatprep.subr.mxu0 0.0
    %3661 = vmatpush1.msra.mxu0 0.0
    %3662 = vmatprep.subr.mxu0 0.0
    %3663 = vmatpush1.msra.mxu0 0.0
    %3664 = vmatprep.subr.mxu0 0.0
    %3665 = vmatpush1.msra.mxu0 0.0
    %3666 = vmatprep.mubr.f32.mxu0 0.0
    %3667 = vmatmul.mubr.f32.gmra.mrb[0].mxu0 %v3596
    %v3668 = vpop.f32.mrb[0].mxu0
    %v3669 = vadd.f32 0.0, %v3668
    %v3670 = vpop.f32.mrb[0].mxu0
    %v3671 = vadd.f32 0.0, %v3670
    %3672 = vdwg.mxu0
    %3673 = vmatprep.subr.mxu0 %v2308
    %3674 = vmatpush1.msra.mxu0 %v2307
    %3675 = vmatprep.subr.mxu0 %v2312
    %3676 = vmatpush1.msra.mxu0 %v2311
    %3677 = vmatprep.subr.mxu0 %v2316
    %3678 = vmatpush1.msra.mxu0 %v2315
    %3679 = vmatprep.subr.mxu0 %v2320
    %3680 = vmatpush1.msra.mxu0 %v2319
    %3681 = vmatprep.subr.mxu0 %v2324
    %3682 = vmatpush1.msra.mxu0 %v2323
    %3683 = vmatprep.subr.mxu0 %v2328
    %3684 = vmatpush1.msra.mxu0 %v2327
    %3685 = vmatprep.subr.mxu0 %v2332
    %3686 = vmatpush1.msra.mxu0 %v2331
    %3687 = vmatprep.subr.mxu0 %v2336
    %3688 = vmatpush1.msra.mxu0 %v2335
    %3689 = vmatprep.subr.mxu0 %v2340
    %3690 = vmatpush1.msra.mxu0 %v2339
    %3691 = vmatprep.subr.mxu0 %v2344
    %3692 = vmatpush1.msra.mxu0 %v2343
    %3693 = vmatprep.subr.mxu0 %v2348
    %3694 = vmatpush1.msra.mxu0 %v2347
    %3695 = vmatprep.subr.mxu0 %v2352
    %3696 = vmatpush1.msra.mxu0 %v2351
    %3697 = vmatprep.subr.mxu0 %v2356
    %3698 = vmatpush1.msra.mxu0 %v2355
    %3699 = vmatprep.subr.mxu0 %v2360
    %3700 = vmatpush1.msra.mxu0 %v2359
    %3701 = vmatprep.subr.mxu0 %v2364
    %3702 = vmatpush1.msra.mxu0 %v2363
    %3703 = vmatprep.subr.mxu0 %v2368
    %3704 = vmatpush1.msra.mxu0 %v2367
    %3705 = vmatprep.subr.mxu0 0.0
    %3706 = vmatpush1.msra.mxu0 0.0
    %3707 = vmatprep.subr.mxu0 0.0
    %3708 = vmatpush1.msra.mxu0 0.0
    %3709 = vmatprep.subr.mxu0 0.0
    %3710 = vmatpush1.msra.mxu0 0.0
    %3711 = vmatprep.subr.mxu0 0.0
    %3712 = vmatpush1.msra.mxu0 0.0
    %3713 = vmatprep.subr.mxu0 0.0
    %3714 = vmatpush1.msra.mxu0 0.0
    %3715 = vmatprep.subr.mxu0 0.0
    %3716 = vmatpush1.msra.mxu0 0.0
    %3717 = vmatprep.subr.mxu0 0.0
    %3718 = vmatpush1.msra.mxu0 0.0
    %3719 = vmatprep.subr.mxu0 0.0
    %3720 = vmatpush1.msra.mxu0 0.0
    %3721 = vmatprep.subr.mxu0 0.0
    %3722 = vmatpush1.msra.mxu0 0.0
    %3723 = vmatprep.subr.mxu0 0.0
    %3724 = vmatpush1.msra.mxu0 0.0
    %3725 = vmatprep.subr.mxu0 0.0
    %3726 = vmatpush1.msra.mxu0 0.0
    %3727 = vmatprep.subr.mxu0 0.0
    %3728 = vmatpush1.msra.mxu0 0.0
    %3729 = vmatprep.subr.mxu0 0.0
    %3730 = vmatpush1.msra.mxu0 0.0
    %3731 = vmatprep.subr.mxu0 0.0
    %3732 = vmatpush1.msra.mxu0 0.0
    %3733 = vmatprep.subr.mxu0 0.0
    %3734 = vmatpush1.msra.mxu0 0.0
    %3735 = vmatprep.subr.mxu0 0.0
    %3736 = vmatpush1.msra.mxu0 0.0
    %3737 = vmatprep.mubr.f32.mxu0 0.0
    %3738 = vmatmul.mubr.f32.gmra.mrb[0].mxu0 %v3596
    %v3739 = vpop.f32.mrb[0].mxu0
    %v3740 = vadd.f32 0.0, %v3739
    %v3741 = vpop.f32.mrb[0].mxu0
    %v3742 = vadd.f32 0.0, %v3741
    %3743 = vdwg.mxu0
    %v3744 = vadd.f32 %v3598, %v3669
    %v3745 = vadd.f32 %v3599, %v3671
    %v3746 = vadd.f32 %v3600, %v3740
    %v3747 = vadd.f32 %v3601, %v3742
    %v3748 = vxor.u32 %v3744, 2147483648
    %v3749 = vmul.f32 %v3748, 1.442695
    %v3750 = vpow.pop %v3749
    %v3751 = vadd.f32 %v3750, 1.0
    %v3752 = vrcp.pop %v3751
    %v3753 = vmul.f32 1.0, %v3752
    %v3754 = vxor.u32 %v3745, 2147483648
    %v3755 = vmul.f32 %v3754, 1.442695
    %v3756 = vpow.pop %v3755
    %v3757 = vadd.f32 %v3756, 1.0
    %v3758 = vrcp.pop %v3757
    %v3759 = vmul.f32 1.0, %v3758
    %v3760 = vtanh.pop %v3746
    %v3761 = vxor.u32 %v3747, 2147483648
    %v3762 = vmul.f32 %v3761, 1.442695
    %v3763 = vpow.pop %v3762
    %v3764 = vadd.f32 %v3763, 1.0
    %v3765 = vrcp.pop %v3764
    %v3766 = vmul.f32 1.0, %v3765
    %v3767 = vmul.f32 %v3759, %v3594
    %v3768 = vmul.f32 %v3753, %v3760
    %v3769 = vadd.f32 %v3767, %v3768
    %v3770 = vtanh.pop %v3769
    %v3771 = vmul.f32 %v3766, %v3770
    %3772 = vst [vmem:[%s1946] sm:$0xff] %v3771
    %s3773 = scalar_lea.vmem [#allocation16], 8
    %3774 = vst [vmem:[%s3773] sm:$0xff] %v3771
    %s3775 = scalar_lea.vmem [#allocation18], 8
    %3776 = vst [vmem:[%s3775] sm:$0xff] %v3769
    %v3777 = vld [vmem:[#allocation3] sm:$0xff]
    %v3778 = vld [vmem:[#allocation3 + $0x8] sm:$0xff]
    %v3779 = vld [vmem:[#allocation3 + $0x10] sm:$0xff]
    %v3780 = vld [vmem:[#allocation3 + $0x18] sm:$0xff]
    %v3781 = vld [vmem:[#allocation3 + $0x20] sm:$0xff]
    %v3782 = vld [vmem:[#allocation3 + $0x28] sm:$0xff]
    %v3783 = vld [vmem:[#allocation3 + $0x30] sm:$0xff]
    %v3784 = vld [vmem:[#allocation3 + $0x38] sm:$0xff]
    %v3785 = vld [vmem:[#allocation13] sm:$0xff]
    %v3786 = vld [vmem:[#allocation13 + $0x8] sm:$0xff]
    %v3787 = vld [vmem:[#allocation13 + $0x10] sm:$0xff]
    %v3788 = vld [vmem:[#allocation13 + $0x18] sm:$0xff]
    %v3789 = vld [vmem:[#allocation13 + $0x20] sm:$0xff]
    %v3790 = vld [vmem:[#allocation13 + $0x28] sm:$0xff]
    %v3791 = vld [vmem:[#allocation13 + $0x30] sm:$0xff]
    %v3792 = vld [vmem:[#allocation13 + $0x38] sm:$0xff]
    %v3793 = vld [vmem:[#allocation13 + $0x40] sm:$0xff]
    %v3794 = vld [vmem:[#allocation13 + $0x48] sm:$0xff]
    %v3795 = vld [vmem:[#allocation13 + $0x50] sm:$0xff]
    %v3796 = vld [vmem:[#allocation13 + $0x58] sm:$0xff]
    %v3797 = vld [vmem:[#allocation13 + $0x60] sm:$0xff]
    %v3798 = vld [vmem:[#allocation13 + $0x68] sm:$0xff]
    %v3799 = vld [vmem:[#allocation13 + $0x70] sm:$0xff]
    %v3800 = vld [vmem:[#allocation13 + $0x78] sm:$0xff]
    %v3801 = vld [vmem:[%s7] sm:$0x1]
    %v3803 = vlaneseq
    %v3804 = vshrl.u32 %v3803, 7
    %v3805 = vsub.s32 0, %v3804
    %v3806 = vrot.slane %v3801, %v3805
    %3808 = vmatprep.subr.mxu0 0.0
    %3809 = vmatpush1.msra.mxu0 %v3785
    %3810 = vmatprep.subr.mxu0 0.0
    %3811 = vmatpush1.msra.mxu0 %v3786
    %3812 = vmatprep.subr.mxu0 0.0
    %3813 = vmatpush1.msra.mxu0 %v3787
    %3814 = vmatprep.subr.mxu0 0.0
    %3815 = vmatpush1.msra.mxu0 %v3788
    %3816 = vmatprep.subr.mxu0 0.0
    %3817 = vmatpush1.msra.mxu0 %v3789
    %3818 = vmatprep.subr.mxu0 0.0
    %3819 = vmatpush1.msra.mxu0 %v3790
    %3820 = vmatprep.subr.mxu0 0.0
    %3821 = vmatpush1.msra.mxu0 %v3791
    %3822 = vmatprep.subr.mxu0 0.0
    %3823 = vmatpush1.msra.mxu0 %v3792
    %3824 = vmatprep.subr.mxu0 0.0
    %3825 = vmatpush1.msra.mxu0 %v3793
    %3826 = vmatprep.subr.mxu0 0.0
    %3827 = vmatpush1.msra.mxu0 %v3794
    %3828 = vmatprep.subr.mxu0 0.0
    %3829 = vmatpush1.msra.mxu0 %v3795
    %3830 = vmatprep.subr.mxu0 0.0
    %3831 = vmatpush1.msra.mxu0 %v3796
    %3832 = vmatprep.subr.mxu0 0.0
    %3833 = vmatpush1.msra.mxu0 %v3797
    %3834 = vmatprep.subr.mxu0 0.0
    %3835 = vmatpush1.msra.mxu0 %v3798
    %3836 = vmatprep.subr.mxu0 0.0
    %3837 = vmatpush1.msra.mxu0 %v3799
    %3838 = vmatprep.subr.mxu0 0.0
    %3839 = vmatpush1.msra.mxu0 %v3800
    %3840 = vmatprep.subr.mxu0 0.0
    %3841 = vmatpush1.msra.mxu0 0.0
    %3842 = vmatprep.subr.mxu0 0.0
    %3843 = vmatpush1.msra.mxu0 0.0
    %3844 = vmatprep.subr.mxu0 0.0
    %3845 = vmatpush1.msra.mxu0 0.0
    %3846 = vmatprep.subr.mxu0 0.0
    %3847 = vmatpush1.msra.mxu0 0.0
    %3848 = vmatprep.subr.mxu0 0.0
    %3849 = vmatpush1.msra.mxu0 0.0
    %3850 = vmatprep.subr.mxu0 0.0
    %3851 = vmatpush1.msra.mxu0 0.0
    %3852 = vmatprep.subr.mxu0 0.0
    %3853 = vmatpush1.msra.mxu0 0.0
    %3854 = vmatprep.subr.mxu0 0.0
    %3855 = vmatpush1.msra.mxu0 0.0
    %3856 = vmatprep.subr.mxu0 0.0
    %3857 = vmatpush1.msra.mxu0 0.0
    %3858 = vmatprep.subr.mxu0 0.0
    %3859 = vmatpush1.msra.mxu0 0.0
    %3860 = vmatprep.subr.mxu0 0.0
    %3861 = vmatpush1.msra.mxu0 0.0
    %3862 = vmatprep.subr.mxu0 0.0
    %3863 = vmatpush1.msra.mxu0 0.0
    %3864 = vmatprep.subr.mxu0 0.0
    %3865 = vmatpush1.msra.mxu0 0.0
    %3866 = vmatprep.subr.mxu0 0.0
    %3867 = vmatpush1.msra.mxu0 0.0
    %3868 = vmatprep.subr.mxu0 0.0
    %3869 = vmatpush1.msra.mxu0 0.0
    %3870 = vmatprep.subr.mxu0 0.0
    %3871 = vmatpush1.msra.mxu0 0.0
    %3872 = vmatprep.mubr.f32.mxu0 0.0
    %3873 = vmatmul.mubr.f32.gmra.mrb[0].mxu0 %v3777
    %v3874 = vpop.f32.mrb[0].mxu0
    %v3875 = vadd.f32 %v3806, %v3874
    %v3876 = vpop.f32.mrb[0].mxu0
    %3877 = vmatprep.mubr.f32.mxu0 0.0
    %3878 = vmatmul.mubr.f32.gmra.mrb[0].mxu0 %v3778
    %v3879 = vpop.f32.mrb[0].mxu0
    %v3880 = vadd.f32 %v3806, %v3879
    %v3881 = vpop.f32.mrb[0].mxu0
    %3882 = vmatprep.mubr.f32.mxu0 0.0
    %3883 = vmatmul.mubr.f32.gmra.mrb[0].mxu0 %v3779
    %v3884 = vpop.f32.mrb[0].mxu0
    %v3885 = vadd.f32 %v3806, %v3884
    %v3886 = vpop.f32.mrb[0].mxu0
    %3887 = vmatprep.mubr.f32.mxu0 0.0
    %3888 = vmatmul.mubr.f32.gmra.mrb[0].mxu0 %v3780
    %v3889 = vpop.f32.mrb[0].mxu0
    %v3890 = vadd.f32 %v3806, %v3889
    %v3891 = vpop.f32.mrb[0].mxu0
    %3892 = vmatprep.mubr.f32.mxu0 0.0
    %3893 = vmatmul.mubr.f32.gmra.mrb[0].mxu0 %v3781
    %v3894 = vpop.f32.mrb[0].mxu0
    %v3895 = vadd.f32 %v3806, %v3894
    %v3896 = vpop.f32.mrb[0].mxu0
    %3897 = vmatprep.mubr.f32.mxu0 0.0
    %3898 = vmatmul.mubr.f32.gmra.mrb[0].mxu0 %v3782
    %v3899 = vpop.f32.mrb[0].mxu0
    %v3900 = vadd.f32 %v3806, %v3899
    %v3901 = vpop.f32.mrb[0].mxu0
    %3902 = vmatprep.mubr.f32.mxu0 0.0
    %3903 = vmatmul.mubr.f32.gmra.mrb[0].mxu0 %v3783
    %v3904 = vpop.f32.mrb[0].mxu0
    %v3905 = vadd.f32 %v3806, %v3904
    %v3906 = vpop.f32.mrb[0].mxu0
    %3907 = vmatprep.mubr.f32.mxu0 0.0
    %3908 = vmatmul.mubr.f32.gmra.mrb[0].mxu0 %v3784
    %v3909 = vpop.f32.mrb[0].mxu0
    %v3910 = vadd.f32 %v3806, %v3909
    %v3911 = vpop.f32.mrb[0].mxu0
    %3912 = vdwg.mxu0
    %3913 = vst [vmem:[#allocation15] sm:$0xff] %v3875
    %3914 = vst [vmem:[#allocation15 + $0x8] sm:$0xff] %v3880
    %3915 = vst [vmem:[#allocation15 + $0x10] sm:$0xff] %v3885
    %3916 = vst [vmem:[#allocation15 + $0x18] sm:$0xff] %v3890
    %3917 = vst [vmem:[#allocation15 + $0x20] sm:$0xff] %v3895
    %3918 = vst [vmem:[#allocation15 + $0x28] sm:$0xff] %v3900
    %3919 = vst [vmem:[#allocation15 + $0x30] sm:$0xff] %v3905
    %3920 = vst [vmem:[#allocation15 + $0x38] sm:$0xff] %v3910
    // Predicated region
    $region58: #{tpu_custom_call.1} parent=1 // pred_check
      _
    $region59: #{tpu_custom_call.1} parent=1 // pred_check_branch
      %3922 = sbr.rel (0) target = $region61
    $region60: #{tpu_custom_call.1} parent=1 // pred_region
      %s3924 = ssub.s32 1024, 1024
      %3925 = vsyncadd [#allocation6], %s3924
      %s3926 = sshll.u32 [#allocation15], 4
      %s3927 = int_to_ptr.vmem [resolvable:$true] %s3926
      %3932 = dma.vmem_to_hbm [thread:$0]  %s3927, 1024, %s8, [#allocation6], 128, 128, 8
    $region61: #{tpu_custom_call.1} parent=1 // pred_fallthru
      _
    // Predicated region
    $region62: #{tpu_custom_call.1} parent=1 // pred_check
      _
    $region63: #{tpu_custom_call.1} parent=1 // pred_check_branch
      %3934 = sbr.rel (0) target = $region65
    $region64: #{tpu_custom_call.1} parent=1 // pred_region
      %s3936 = ssub.s32 256, 256
      %3937 = vsyncadd [#allocation17], %s3936
      %s3938 = sshll.u32 [#allocation16], 4
      %s3939 = int_to_ptr.vmem [resolvable:$true] %s3938
      %3944 = dma.vmem_to_hbm [thread:$0]  %s3939, 256, %s9, [#allocation17], 128, 128, 8
    $region65: #{tpu_custom_call.1} parent=1 // pred_fallthru
      _
    // Predicated region
    $region66: #{tpu_custom_call.1} parent=1 // pred_check
      _
    $region67: #{tpu_custom_call.1} parent=1 // pred_check_branch
      %3946 = sbr.rel (0) target = $region69
    $region68: #{tpu_custom_call.1} parent=1 // pred_region
      %s3948 = ssub.s32 256, 256
      %3949 = vsyncadd [#allocation17], %s3948
      %s3950 = sshll.u32 [#allocation18], 4
      %s3951 = int_to_ptr.vmem [resolvable:$true] %s3950
      %3956 = dma.vmem_to_hbm [thread:$0]  %s3951, 256, %s10, [#allocation17], 128, 128, 8
    $region69: #{tpu_custom_call.1} parent=1 // pred_fallthru
      _
    // Predicated region
    $region70: #{tpu_custom_call.1} parent=1 // pred_check
      _
    $region71: #{tpu_custom_call.1} parent=1 // pred_check_branch
      %3958 = sbr.rel (0) target = $region73
    $region72: #{tpu_custom_call.1} parent=1 // pred_region
      %3959 = dma.done [#allocation6], 1024
    $region73: #{tpu_custom_call.1} parent=1 // pred_fallthru
      _
    // Predicated region
    $region74: #{tpu_custom_call.1} parent=1 // pred_check
      _
    $region75: #{tpu_custom_call.1} parent=1 // pred_check_branch
      %3961 = sbr.rel (0) target = $region77
    $region76: #{tpu_custom_call.1} parent=1 // pred_region
      %3962 = dma.done [#allocation17], 256
    $region77: #{tpu_custom_call.1} parent=1 // pred_fallthru
      _
    // Predicated region
    $region78: #{tpu_custom_call.1} parent=1 // pred_check
      _
    $region79: #{tpu_custom_call.1} parent=1 // pred_check_branch
      %3964 = sbr.rel (0) target = $region81
    $region80: #{tpu_custom_call.1} parent=1 // pred_region
      %3965 = dma.done [#allocation17], 256
    $region81: #{tpu_custom_call.1} parent=1 // pred_fallthru
      _
    %3966 = vsyncpa [#allocation5], 1
    %3967 = vsyncpa [#allocation8], 1
    %3968 = vsyncpa [#allocation11], 1
    %3969 = vsyncpa [#allocation14], 1
    %3970 = vsyncpa [#allocation6], 1
    %3971 = vsyncpa [#allocation17], 1

</llo_original>
